<compile_context>
chip_gen: v7x
topology: tpu7x:2x2x1
jax: 0.10.0
libtpu: 0.0.40
codegen_flags: <defaults>
</compile_context>

<pallas_src>
import functools

import numpy as np
import jax
import jax.numpy as jnp
from jax import lax
from jax.experimental import pallas as pl
from jax.experimental.pallas import tpu as pltpu

KSIZE = 3
NTAPS = KSIZE * KSIZE      # 9 real taps
NTAP_PAD = 16              # tap rows padded to 16 (weights zero-padded to match)


# ---------------------------------------------------------------------------
# Fused whole-network kernel: one grid step = one image.
# ---------------------------------------------------------------------------
def _net_kernel(x_ref, w1_ref, b1_ref, w2_ref, b2_ref, w3_ref, b3_ref,
                w4_ref, b4_ref, sel1_ref, sel2_ref, wf_ref, bfc_ref,
                o_ref,
                pad1_ref, pad2_ref, tap1_ref, tap2_ref, *, height, width):
    H1, W1 = height, width
    H2, W2 = H1 // 2, W1 // 2

    def conv3x3(xs, w_ref, b_ref, nchan, H, W, pad_ref, tap_ref):
        """Shared Conv2d(1,F,3,pad=1) summed over `nchan` channels + ReLU.

        xs: (1, N) channel-sum of the layer input (flat spatial, N = H*W).
        Returns (F, N) f32.
        """
        N = H * W
        M = W + 1                                   # padded-plane margin
        # Scratch is stale across grid steps / cores: re-zero only the margins
        # of the padded plane and the unused tap rows (interior / rows 0..8
        # are fully overwritten below before being read).
        pad_ref[:, :M] = jnp.zeros((1, M), jnp.float32)
        pad_ref[:, M + N:] = jnp.zeros((1, M), jnp.float32)
        tap_ref[NTAPS:, :] = jnp.zeros((NTAP_PAD - NTAPS, N), jnp.float32)
        # Interior of the zero-padded flat plane.
        pad_ref[:, M:M + N] = xs

        # Column-edge masks built in-kernel (float math only -> exact).
        pos = lax.broadcasted_iota(jnp.int32, (1, N), 1).astype(jnp.float32)
        row = jnp.floor((pos + 0.5) * (1.0 / W))
        col = pos - row * W                          # exact integer-valued f32
        m_l = (col > 0.5).astype(jnp.float32)        # col != 0
        m_r = (col < W - 1.5).astype(jnp.float32)    # col != W-1

        # 9 shifted tap windows -> rows of the tap scratch.
        # Tap (i, j) at output p = r*W + c reads pad[M + p + (i-1)*W + (j-1)];
        # row under/overflow lands in the zero margins, column wrap is killed
        # by the masks.
        for i in range(KSIZE):
            for j in range(KSIZE):
                t = KSIZE * i + j
                off = M + (i - 1) * W + (j - 1)
                win = pad_ref[:, off:off + N]
                if j == 0:
                    win = win * m_l
                elif j == KSIZE - 1:
                    win = win * m_r
                tap_ref[t:t + 1, :] = win

        # All F features with one bf16 MXU contraction, + nchan*bias, ReLU.
        out = jnp.dot(w_ref[...], tap_ref[...].astype(jnp.bfloat16),
                      preferred_element_type=jnp.float32)          # (F, N)
        out = out + float(nchan) * b_ref[...]
        return jnp.maximum(out, 0.0)

    def pool2x2(a, sel_ref, H, W):
        """2x2 / stride-2 max-pool of (F, H*W) -> (F, (H//2)*(W//2))."""
        N = H * W
        rm = jnp.maximum(a[:, :N - W], a[:, W:])          # row-pair max
        cm = jnp.maximum(rm[:, :N - W - 1], rm[:, 1:])    # col-pair max
        # 0/1 selector gathers the valid (even-row, even-col) positions.
        return jnp.dot(cm.astype(jnp.bfloat16), sel_ref[...],
                       preferred_element_type=jnp.float32)

    # ---- conv1 -> conv2 -> pool -> conv3 -> conv4 -> pool -> fc ----------
    c_in = x_ref.shape[1]
    xs1 = jnp.sum(x_ref[0], axis=0, keepdims=True)                    # (1, N1)
    a1 = conv3x3(xs1, w1_ref, b1_ref, c_in, H1, W1, pad1_ref, tap1_ref)
    xs2 = jnp.sum(a1, axis=0, keepdims=True)
    a2 = conv3x3(xs2, w2_ref, b2_ref, a1.shape[0], H1, W1, pad1_ref, tap1_ref)
    p2 = pool2x2(a2, sel1_ref, H1, W1)                                # (F2, N2)
    xs3 = jnp.sum(p2, axis=0, keepdims=True)
    a3 = conv3x3(xs3, w3_ref, b3_ref, p2.shape[0], H2, W2, pad2_ref, tap2_ref)
    xs4 = jnp.sum(a3, axis=0, keepdims=True)
    a4 = conv3x3(xs4, w4_ref, b4_ref, a3.shape[0], H2, W2, pad2_ref, tap2_ref)
    p4 = pool2x2(a4, sel2_ref, H2, W2)                                # (16, 49)

    # Fully-connected layer on the in-VMEM (channel, spatial) activations.
    # PyTorch's ch-major flatten order is matched by wf reshaped (16, 49, 10),
    # so no in-kernel relayout is needed.
    logits = bfc_ref[...]                                             # (1, 10)
    for ch in range(p4.shape[0]):
        logits = logits + jnp.dot(p4[ch:ch + 1, :].astype(jnp.bfloat16),
                                  wf_ref[ch],
                                  preferred_element_type=jnp.float32)
    o_ref[0] = logits


# ---------------------------------------------------------------------------
# Wrapper: weight/selector layout plumbing (tiny, host/XLA side) + pallas_call
# ---------------------------------------------------------------------------
def _pool_selector(H, W):
    """0/1 gather matrix mapping col-pair-max positions -> dense pooled flat."""
    N = H * W
    Ho, Wo = H // 2, W // 2
    sel = np.zeros((N - W - 1, Ho * Wo), np.float32)
    for r in range(Ho):
        for c in range(Wo):
            sel[(2 * r) * W + 2 * c, r * Wo + c] = 1.0
    return jnp.asarray(sel, dtype=jnp.bfloat16)


def _prep_conv_weight(w):
    """(F,1,3,3) -> (F,16) bf16, taps in (i,j) row-major order, zero-padded."""
    F = w.shape[0]
    w9 = jnp.asarray(w, jnp.float32).reshape(F, NTAPS)
    return jnp.pad(w9, ((0, 0), (0, NTAP_PAD - NTAPS))).astype(jnp.bfloat16)


@jax.jit
def net_forward(x, params):
    B, C, H, W = x.shape
    N1 = H * W
    N2 = (H // 2) * (W // 2)
    x3 = x.reshape(B, C, N1).astype(jnp.float32)

    w1 = _prep_conv_weight(params["w1"])
    w2 = _prep_conv_weight(params["w2"])
    w3 = _prep_conv_weight(params["w3"])
    w4 = _prep_conv_weight(params["w4"])
    b1 = params["b1"].reshape(-1, 1).astype(jnp.float32)
    b2 = params["b2"].reshape(-1, 1).astype(jnp.float32)
    b3 = params["b3"].reshape(-1, 1).astype(jnp.float32)
    b4 = params["b4"].reshape(-1, 1).astype(jnp.float32)
    f1, f2, f3, f4 = w1.shape[0], w2.shape[0], w3.shape[0], w4.shape[0]

    sel1 = _pool_selector(H, W)
    sel2 = _pool_selector(H // 2, W // 2)

    n_out = params["wf"].shape[1]
    wf3 = params["wf"].reshape(f4, N2 // 4, n_out).astype(jnp.bfloat16)
    bfc = params["bf"].reshape(1, n_out).astype(jnp.float32)

    kernel = functools.partial(_net_kernel, height=H, width=W)
    cst = lambda b: (0, 0)
    out = pl.pallas_call(
        kernel,
        out_shape=jax.ShapeDtypeStruct((B, 1, n_out), jnp.float32),
        grid_spec=pltpu.PrefetchScalarGridSpec(
            num_scalar_prefetch=0,
            grid=(B,),
            in_specs=[
                pl.BlockSpec((1, C, N1), lambda b: (b, 0, 0)),
                pl.BlockSpec((f1, NTAP_PAD), cst), pl.BlockSpec((f1, 1), cst),
                pl.BlockSpec((f2, NTAP_PAD), cst), pl.BlockSpec((f2, 1), cst),
                pl.BlockSpec((f3, NTAP_PAD), cst), pl.BlockSpec((f3, 1), cst),
                pl.BlockSpec((f4, NTAP_PAD), cst), pl.BlockSpec((f4, 1), cst),
                pl.BlockSpec(sel1.shape, cst),
                pl.BlockSpec(sel2.shape, cst),
                pl.BlockSpec(wf3.shape, lambda b: (0, 0, 0)),
                pl.BlockSpec(bfc.shape, cst),
            ],
            out_specs=pl.BlockSpec((1, 1, n_out), lambda b: (b, 0, 0)),
            scratch_shapes=[
                pltpu.VMEM((1, N1 + 2 * (W + 1)), jnp.float32),        # pad1
                pltpu.VMEM((1, N2 + 2 * (W // 2 + 1)), jnp.float32),   # pad2
                pltpu.VMEM((NTAP_PAD, N1), jnp.float32),               # taps1
                pltpu.VMEM((NTAP_PAD, N2), jnp.float32),               # taps2
            ],
        ),
        compiler_params=pltpu.CompilerParams(
            dimension_semantics=("parallel",)),
    )(x3, w1, b1, w2, b2, w3, b3, w4, b4, sel1, sel2, wf3, bfc)
    return out.reshape(B, n_out)


# ---------------------------------------------------------------------------
# Plain-JAX references mirroring the PyTorch module exactly.
# ---------------------------------------------------------------------------
def _convolution_ref(x, weight, bias):
    C = x.shape[1]
    acc = None
    for i in range(C):
        y = lax.conv_general_dilated(
            x[:, i:i + 1], weight, window_strides=(1, 1),
            padding=[(1, 1), (1, 1)],
            dimension_numbers=("NCHW", "OIHW", "NCHW"),
            precision=lax.Precision.HIGHEST)
        y = y + bias[None, :, None, None]
        acc = y if acc is None else acc + y
    return jnp.maximum(acc, 0.0)


def _maxpool_ref(x):
    return lax.reduce_window(x, -jnp.inf, lax.max,
                             (1, 1, 2, 2), (1, 1, 2, 2), "VALID")


def _net_ref(x, p):
    x = _convolution_ref(x, p["w1"], p["b1"])
    x = _convolution_ref(x, p["w2"], p["b2"])
    x = _maxpool_ref(x)
    x = _convolution_ref(x, p["w3"], p["b3"])
    x = _convolution_ref(x, p["w4"], p["b4"])
    x = _maxpool_ref(x)
    x = x.reshape(x.shape[0], -1)
    return jnp.dot(x, p["wf"], precision=lax.Precision.HIGHEST) + p["bf"]


if __name__ == "__main__":
    key = jax.random.PRNGKey(0)
    keys = jax.random.split(key, 11)
    kx, kw1, kb1, kw2, kb2, kw3, kb3, kw4, kb4, kwf, kbf = keys

    B = 2
    x = jax.random.normal(kx, (B, 1, 28, 28), dtype=jnp.float32)

    def conv_params(kw, kb, F, C):
        w = jax.random.normal(kw, (F, 1, 3, 3), jnp.float32) * (2.0 / (9.0 * C)) ** 0.5
        b = jax.random.uniform(kb, (F,), jnp.float32, minval=-0.05, maxval=0.05)
        return w, b

    w1, b1 = conv_params(kw1, kb1, 32, 1)
    w2, b2 = conv_params(kw2, kb2, 64, 32)
    w3, b3 = conv_params(kw3, kb3, 64, 64)
    w4, b4 = conv_params(kw4, kb4, 16, 64)
    wf = jax.random.normal(kwf, (16 * 7 * 7, 10), jnp.float32) * (1.0 / (16 * 7 * 7)) ** 0.5
    bf = jax.random.uniform(kbf, (10,), jnp.float32, minval=-0.05, maxval=0.05)
    params = dict(w1=w1, b1=b1, w2=w2, b2=b2, w3=w3, b3=b3, w4=w4, b4=b4,
                  wf=wf, bf=bf)

    logits = jax.block_until_ready(net_forward(x, params))
    ref = np.asarray(_net_ref(x, params))
    scale = max(1.0, float(np.max(np.abs(ref))))
    np.testing.assert_allclose(np.asarray(logits), ref,
                               rtol=5e-2, atol=5e-2 * scale)

    print("KERNEL_OK")
</pallas_src>

<mosaic_0001>
module attributes {stable_mosaic.version = 11 : i64} {
  func.func @_net_kernel(%arg0: i32, %arg1: memref<1x1x784xf32, #tpu.memory_space<vmem>>, %arg2: memref<32x16xbf16, #tpu.memory_space<vmem>>, %arg3: memref<32x1xf32, #tpu.memory_space<vmem>>, %arg4: memref<64x16xbf16, #tpu.memory_space<vmem>>, %arg5: memref<64x1xf32, #tpu.memory_space<vmem>>, %arg6: memref<64x16xbf16, #tpu.memory_space<vmem>>, %arg7: memref<64x1xf32, #tpu.memory_space<vmem>>, %arg8: memref<16x16xbf16, #tpu.memory_space<vmem>>, %arg9: memref<16x1xf32, #tpu.memory_space<vmem>>, %arg10: memref<755x196xbf16, #tpu.memory_space<vmem>>, %arg11: memref<181x49xbf16, #tpu.memory_space<vmem>>, %arg12: memref<16x49x10xbf16, #tpu.memory_space<vmem>>, %arg13: memref<1x10xf32, #tpu.memory_space<vmem>>, %arg14: memref<1x1x10xf32, #tpu.memory_space<vmem>>, %arg15: memref<1x842xf32, #tpu.memory_space<vmem>>, %arg16: memref<1x226xf32, #tpu.memory_space<vmem>>, %arg17: memref<16x784xf32, #tpu.memory_space<vmem>>, %arg18: memref<16x196xf32, #tpu.memory_space<vmem>>) attributes {dimension_semantics = [#tpu.dimension_semantics<parallel>], iteration_bounds = array<i64: 2>, scalar_prefetch = 0 : i64, scratch_operands = 4 : i64, tpu.core_type = #tpu.core_type<tc>, window_params = [{transform_indices = @transform_0, window_bounds = array<i64: 1, 1, 784>}, {pipeline_mode = #tpu.pipeline_mode<synchronous>, transform_indices = @transform_1, window_bounds = array<i64: 32, 16>}, {pipeline_mode = #tpu.pipeline_mode<synchronous>, transform_indices = @transform_2, window_bounds = array<i64: 32, 1>}, {pipeline_mode = #tpu.pipeline_mode<synchronous>, transform_indices = @transform_3, window_bounds = array<i64: 64, 16>}, {pipeline_mode = #tpu.pipeline_mode<synchronous>, transform_indices = @transform_4, window_bounds = array<i64: 64, 1>}, {pipeline_mode = #tpu.pipeline_mode<synchronous>, transform_indices = @transform_5, window_bounds = array<i64: 64, 16>}, {pipeline_mode = #tpu.pipeline_mode<synchronous>, transform_indices = @transform_6, window_bounds = array<i64: 64, 1>}, {pipeline_mode = #tpu.pipeline_mode<synchronous>, transform_indices = @transform_7, window_bounds = array<i64: 16, 16>}, {pipeline_mode = #tpu.pipeline_mode<synchronous>, transform_indices = @transform_8, window_bounds = array<i64: 16, 1>}, {pipeline_mode = #tpu.pipeline_mode<synchronous>, transform_indices = @transform_9, window_bounds = array<i64: 755, 196>}, {pipeline_mode = #tpu.pipeline_mode<synchronous>, transform_indices = @transform_10, window_bounds = array<i64: 181, 49>}, {pipeline_mode = #tpu.pipeline_mode<synchronous>, transform_indices = @transform_11, window_bounds = array<i64: 16, 49, 10>}, {pipeline_mode = #tpu.pipeline_mode<synchronous>, transform_indices = @transform_12, window_bounds = array<i64: 1, 10>}, {transform_indices = @transform_13, window_bounds = array<i64: 1, 1, 10>}]} {
    %c0 = arith.constant 0 : index
    %c0_0 = arith.constant 0 : index
    %c0_1 = arith.constant 0 : index
    %0 = vector.load %arg1[%c0, %c0_0, %c0_1] : memref<1x1x784xf32, #tpu.memory_space<vmem>>, vector<1x1x784xf32>
    %1 = vector.shape_cast %0 : vector<1x1x784xf32> to vector<1x784xf32>
    %cst = arith.constant dense<0.000000e+00> : vector<784xf32>
    %2 = vector.multi_reduction <add>, %1, %cst [0] : vector<1x784xf32> to vector<784xf32>
    %3 = vector.shape_cast %2 : vector<784xf32> to vector<1x784xf32>
    %cst_2 = arith.constant 0.000000e+00 : f32
    %4 = vector.broadcast %cst_2 : f32 to vector<1x29xf32>
    %c0_3 = arith.constant 0 : index
    %c0_4 = arith.constant 0 : index
    %5 = vector.load %arg15[%c0_3, %c0_4] : memref<1x842xf32, #tpu.memory_space<vmem>>, vector<1x29xf32>
    tpu.vector_store %arg15[%c0_3, %c0_4], %4 {strides = array<i32>} : memref<1x842xf32, #tpu.memory_space<vmem>>, vector<1x29xf32>,
    %cst_5 = arith.constant 0.000000e+00 : f32
    %6 = vector.broadcast %cst_5 : f32 to vector<1x29xf32>
    %c0_6 = arith.constant 0 : index
    %c813 = arith.constant 813 : index
    %7 = vector.load %arg15[%c0_6, %c813] : memref<1x842xf32, #tpu.memory_space<vmem>>, vector<1x29xf32>
    tpu.vector_store %arg15[%c0_6, %c813], %6 {strides = array<i32>} : memref<1x842xf32, #tpu.memory_space<vmem>>, vector<1x29xf32>,
    %cst_7 = arith.constant 0.000000e+00 : f32
    %8 = vector.broadcast %cst_7 : f32 to vector<7x784xf32>
    %c9 = arith.constant 9 : index
    %c0_8 = arith.constant 0 : index
    %9 = vector.load %arg17[%c9, %c0_8] : memref<16x784xf32, #tpu.memory_space<vmem>>, vector<7x784xf32>
    tpu.vector_store %arg17[%c9, %c0_8], %8 {strides = array<i32>} : memref<16x784xf32, #tpu.memory_space<vmem>>, vector<7x784xf32>,
    %c0_9 = arith.constant 0 : index
    %c29 = arith.constant 29 : index
    %10 = vector.load %arg15[%c0_9, %c29] : memref<1x842xf32, #tpu.memory_space<vmem>>, vector<1x784xf32>
    tpu.vector_store %arg15[%c0_9, %c29], %3 {strides = array<i32>} : memref<1x842xf32, #tpu.memory_space<vmem>>, vector<1x784xf32>,
    %11 = tpu.iota {dimensions = array<i32: 1>} : vector<1x784xi32>
    %12 = arith.sitofp %11 : vector<1x784xi32> to vector<1x784xf32>
    %cst_10 = arith.constant 5.000000e-01 : f32
    %13 = vector.broadcast %cst_10 : f32 to vector<1x784xf32>
    %14 = arith.addf %12, %13 : vector<1x784xf32>
    %cst_11 = arith.constant 0.0357142873 : f32
    %15 = vector.broadcast %cst_11 : f32 to vector<1x784xf32>
    %16 = arith.mulf %14, %15 : vector<1x784xf32>
    %17 = math.floor %16 : vector<1x784xf32>
    %cst_12 = arith.constant 2.800000e+01 : f32
    %18 = vector.broadcast %cst_12 : f32 to vector<1x784xf32>
    %19 = arith.mulf %17, %18 : vector<1x784xf32>
    %20 = arith.subf %12, %19 : vector<1x784xf32>
    %cst_13 = arith.constant 5.000000e-01 : f32
    %21 = vector.broadcast %cst_13 : f32 to vector<1x784xf32>
    %22 = arith.cmpf ogt, %20, %21 : vector<1x784xf32>
    %23 = arith.extui %22 : vector<1x784xi1> to vector<1x784xi32>
    %24 = arith.sitofp %23 : vector<1x784xi32> to vector<1x784xf32>
    %cst_14 = arith.constant 2.650000e+01 : f32
    %25 = vector.broadcast %cst_14 : f32 to vector<1x784xf32>
    %26 = arith.cmpf olt, %20, %25 : vector<1x784xf32>
    %27 = arith.extui %26 : vector<1x784xi1> to vector<1x784xi32>
    %28 = arith.sitofp %27 : vector<1x784xi32> to vector<1x784xf32>
    %c0_15 = arith.constant 0 : index
    %c0_16 = arith.constant 0 : index
    %29 = vector.load %arg15[%c0_15, %c0_16] : memref<1x842xf32, #tpu.memory_space<vmem>>, vector<1x784xf32>
    %30 = arith.mulf %29, %24 : vector<1x784xf32>
    %c0_17 = arith.constant 0 : index
    %c0_18 = arith.constant 0 : index
    %31 = vector.load %arg17[%c0_17, %c0_18] : memref<16x784xf32, #tpu.memory_space<vmem>>, vector<1x784xf32>
    tpu.vector_store %arg17[%c0_17, %c0_18], %30 {strides = array<i32>} : memref<16x784xf32, #tpu.memory_space<vmem>>, vector<1x784xf32>,
    %c0_19 = arith.constant 0 : index
    %c1 = arith.constant 1 : index
    %32 = vector.load %arg15[%c0_19, %c1] : memref<1x842xf32, #tpu.memory_space<vmem>>, vector<1x784xf32>
    %c1_20 = arith.constant 1 : index
    %c0_21 = arith.constant 0 : index
    %33 = vector.load %arg17[%c1_20, %c0_21] : memref<16x784xf32, #tpu.memory_space<vmem>>, vector<1x784xf32>
    tpu.vector_store %arg17[%c1_20, %c0_21], %32 {strides = array<i32>} : memref<16x784xf32, #tpu.memory_space<vmem>>, vector<1x784xf32>,
    %c0_22 = arith.constant 0 : index
    %c2 = arith.constant 2 : index
    %34 = vector.load %arg15[%c0_22, %c2] : memref<1x842xf32, #tpu.memory_space<vmem>>, vector<1x784xf32>
    %35 = arith.mulf %34, %28 : vector<1x784xf32>
    %c2_23 = arith.constant 2 : index
    %c0_24 = arith.constant 0 : index
    %36 = vector.load %arg17[%c2_23, %c0_24] : memref<16x784xf32, #tpu.memory_space<vmem>>, vector<1x784xf32>
    tpu.vector_store %arg17[%c2_23, %c0_24], %35 {strides = array<i32>} : memref<16x784xf32, #tpu.memory_space<vmem>>, vector<1x784xf32>,
    %c0_25 = arith.constant 0 : index
    %c28 = arith.constant 28 : index
    %37 = vector.load %arg15[%c0_25, %c28] : memref<1x842xf32, #tpu.memory_space<vmem>>, vector<1x784xf32>
    %38 = arith.mulf %37, %24 : vector<1x784xf32>
    %c3 = arith.constant 3 : index
    %c0_26 = arith.constant 0 : index
    %39 = vector.load %arg17[%c3, %c0_26] : memref<16x784xf32, #tpu.memory_space<vmem>>, vector<1x784xf32>
    tpu.vector_store %arg17[%c3, %c0_26], %38 {strides = array<i32>} : memref<16x784xf32, #tpu.memory_space<vmem>>, vector<1x784xf32>,
    %c0_27 = arith.constant 0 : index
    %c29_28 = arith.constant 29 : index
    %40 = vector.load %arg15[%c0_27, %c29_28] : memref<1x842xf32, #tpu.memory_space<vmem>>, vector<1x784xf32>
    %c4 = arith.constant 4 : index
    %c0_29 = arith.constant 0 : index
    %41 = vector.load %arg17[%c4, %c0_29] : memref<16x784xf32, #tpu.memory_space<vmem>>, vector<1x784xf32>
    tpu.vector_store %arg17[%c4, %c0_29], %40 {strides = array<i32>} : memref<16x784xf32, #tpu.memory_space<vmem>>, vector<1x784xf32>,
    %c0_30 = arith.constant 0 : index
    %c30 = arith.constant 30 : index
    %42 = vector.load %arg15[%c0_30, %c30] : memref<1x842xf32, #tpu.memory_space<vmem>>, vector<1x784xf32>
    %43 = arith.mulf %42, %28 : vector<1x784xf32>
    %c5 = arith.constant 5 : index
    %c0_31 = arith.constant 0 : index
    %44 = vector.load %arg17[%c5, %c0_31] : memref<16x784xf32, #tpu.memory_space<vmem>>, vector<1x784xf32>
    tpu.vector_store %arg17[%c5, %c0_31], %43 {strides = array<i32>} : memref<16x784xf32, #tpu.memory_space<vmem>>, vector<1x784xf32>,
    %c0_32 = arith.constant 0 : index
    %c56 = arith.constant 56 : index
    %45 = vector.load %arg15[%c0_32, %c56] : memref<1x842xf32, #tpu.memory_space<vmem>>, vector<1x784xf32>
    %46 = arith.mulf %45, %24 : vector<1x784xf32>
    %c6 = arith.constant 6 : index
    %c0_33 = arith.constant 0 : index
    %47 = vector.load %arg17[%c6, %c0_33] : memref<16x784xf32, #tpu.memory_space<vmem>>, vector<1x784xf32>
    tpu.vector_store %arg17[%c6, %c0_33], %46 {strides = array<i32>} : memref<16x784xf32, #tpu.memory_space<vmem>>, vector<1x784xf32>,
    %c0_34 = arith.constant 0 : index
    %c57 = arith.constant 57 : index
    %48 = vector.load %arg15[%c0_34, %c57] : memref<1x842xf32, #tpu.memory_space<vmem>>, vector<1x784xf32>
    %c7 = arith.constant 7 : index
    %c0_35 = arith.constant 0 : index
    %49 = vector.load %arg17[%c7, %c0_35] : memref<16x784xf32, #tpu.memory_space<vmem>>, vector<1x784xf32>
    tpu.vector_store %arg17[%c7, %c0_35], %48 {strides = array<i32>} : memref<16x784xf32, #tpu.memory_space<vmem>>, vector<1x784xf32>,
    %c0_36 = arith.constant 0 : index
    %c58 = arith.constant 58 : index
    %50 = vector.load %arg15[%c0_36, %c58] : memref<1x842xf32, #tpu.memory_space<vmem>>, vector<1x784xf32>
    %51 = arith.mulf %50, %28 : vector<1x784xf32>
    %c8 = arith.constant 8 : index
    %c0_37 = arith.constant 0 : index
    %52 = vector.load %arg17[%c8, %c0_37] : memref<16x784xf32, #tpu.memory_space<vmem>>, vector<1x784xf32>
    tpu.vector_store %arg17[%c8, %c0_37], %51 {strides = array<i32>} : memref<16x784xf32, #tpu.memory_space<vmem>>, vector<1x784xf32>,
    %c0_38 = arith.constant 0 : index
    %c0_39 = arith.constant 0 : index
    %53 = vector.load %arg2[%c0_38, %c0_39] : memref<32x16xbf16, #tpu.memory_space<vmem>>, vector<32x16xbf16>
    %c0_40 = arith.constant 0 : index
    %c0_41 = arith.constant 0 : index
    %54 = vector.load %arg17[%c0_40, %c0_41] : memref<16x784xf32, #tpu.memory_space<vmem>>, vector<16x784xf32>
    %55 = arith.truncf %54 : vector<16x784xf32> to vector<16x784xbf16>
    %cst_42 = arith.constant dense<0.000000e+00> : vector<32x784xf32>
    %56 = tpu.matmul %53, %55, %cst_42 {dimension_numbers = #tpu.dot_dimension_numbers<[1], [0], [0], [1], [0, 0, 1, 1], [], []>} : vector<32x16xbf16>, vector<16x784xbf16>, vector<32x784xf32> -> vector<32x784xf32>
    %c0_43 = arith.constant 0 : index
    %c0_44 = arith.constant 0 : index
    %57 = vector.load %arg3[%c0_43, %c0_44] : memref<32x1xf32, #tpu.memory_space<vmem>>, vector<32x1xf32>
    %cst_45 = arith.constant 1.000000e+00 : f32
    %58 = vector.broadcast %cst_45 : f32 to vector<32x1xf32>
    %59 = arith.mulf %58, %57 : vector<32x1xf32>
    %60 = vector.broadcast %59 : vector<32x1xf32> to vector<32x784xf32>
    %61 = arith.addf %56, %60 : vector<32x784xf32>
    %cst_46 = arith.constant 0.000000e+00 : f32
    %62 = vector.broadcast %cst_46 : f32 to vector<32x784xf32>
    %63 = arith.maximumf %61, %62 : vector<32x784xf32>
    %cst_47 = arith.constant dense<0.000000e+00> : vector<784xf32>
    %64 = vector.multi_reduction <add>, %63, %cst_47 [0] : vector<32x784xf32> to vector<784xf32>
    %65 = vector.shape_cast %64 : vector<784xf32> to vector<1x784xf32>
    %cst_48 = arith.constant 0.000000e+00 : f32
    %66 = vector.broadcast %cst_48 : f32 to vector<1x29xf32>
    %c0_49 = arith.constant 0 : index
    %c0_50 = arith.constant 0 : index
    %67 = vector.load %arg15[%c0_49, %c0_50] : memref<1x842xf32, #tpu.memory_space<vmem>>, vector<1x29xf32>
    tpu.vector_store %arg15[%c0_49, %c0_50], %66 {strides = array<i32>} : memref<1x842xf32, #tpu.memory_space<vmem>>, vector<1x29xf32>,
    %cst_51 = arith.constant 0.000000e+00 : f32
    %68 = vector.broadcast %cst_51 : f32 to vector<1x29xf32>
    %c0_52 = arith.constant 0 : index
    %c813_53 = arith.constant 813 : index
    %69 = vector.load %arg15[%c0_52, %c813_53] : memref<1x842xf32, #tpu.memory_space<vmem>>, vector<1x29xf32>
    tpu.vector_store %arg15[%c0_52, %c813_53], %68 {strides = array<i32>} : memref<1x842xf32, #tpu.memory_space<vmem>>, vector<1x29xf32>,
    %cst_54 = arith.constant 0.000000e+00 : f32
    %70 = vector.broadcast %cst_54 : f32 to vector<7x784xf32>
    %c9_55 = arith.constant 9 : index
    %c0_56 = arith.constant 0 : index
    %71 = vector.load %arg17[%c9_55, %c0_56] : memref<16x784xf32, #tpu.memory_space<vmem>>, vector<7x784xf32>
    tpu.vector_store %arg17[%c9_55, %c0_56], %70 {strides = array<i32>} : memref<16x784xf32, #tpu.memory_space<vmem>>, vector<7x784xf32>,
    %c0_57 = arith.constant 0 : index
    %c29_58 = arith.constant 29 : index
    %72 = vector.load %arg15[%c0_57, %c29_58] : memref<1x842xf32, #tpu.memory_space<vmem>>, vector<1x784xf32>
    tpu.vector_store %arg15[%c0_57, %c29_58], %65 {strides = array<i32>} : memref<1x842xf32, #tpu.memory_space<vmem>>, vector<1x784xf32>,
    %73 = tpu.iota {dimensions = array<i32: 1>} : vector<1x784xi32>
    %74 = arith.sitofp %73 : vector<1x784xi32> to vector<1x784xf32>
    %cst_59 = arith.constant 5.000000e-01 : f32
    %75 = vector.broadcast %cst_59 : f32 to vector<1x784xf32>
    %76 = arith.addf %74, %75 : vector<1x784xf32>
    %cst_60 = arith.constant 0.0357142873 : f32
    %77 = vector.broadcast %cst_60 : f32 to vector<1x784xf32>
    %78 = arith.mulf %76, %77 : vector<1x784xf32>
    %79 = math.floor %78 : vector<1x784xf32>
    %cst_61 = arith.constant 2.800000e+01 : f32
    %80 = vector.broadcast %cst_61 : f32 to vector<1x784xf32>
    %81 = arith.mulf %79, %80 : vector<1x784xf32>
    %82 = arith.subf %74, %81 : vector<1x784xf32>
    %cst_62 = arith.constant 5.000000e-01 : f32
    %83 = vector.broadcast %cst_62 : f32 to vector<1x784xf32>
    %84 = arith.cmpf ogt, %82, %83 : vector<1x784xf32>
    %85 = arith.extui %84 : vector<1x784xi1> to vector<1x784xi32>
    %86 = arith.sitofp %85 : vector<1x784xi32> to vector<1x784xf32>
    %cst_63 = arith.constant 2.650000e+01 : f32
    %87 = vector.broadcast %cst_63 : f32 to vector<1x784xf32>
    %88 = arith.cmpf olt, %82, %87 : vector<1x784xf32>
    %89 = arith.extui %88 : vector<1x784xi1> to vector<1x784xi32>
    %90 = arith.sitofp %89 : vector<1x784xi32> to vector<1x784xf32>
    %c0_64 = arith.constant 0 : index
    %c0_65 = arith.constant 0 : index
    %91 = vector.load %arg15[%c0_64, %c0_65] : memref<1x842xf32, #tpu.memory_space<vmem>>, vector<1x784xf32>
    %92 = arith.mulf %91, %86 : vector<1x784xf32>
    %c0_66 = arith.constant 0 : index
    %c0_67 = arith.constant 0 : index
    %93 = vector.load %arg17[%c0_66, %c0_67] : memref<16x784xf32, #tpu.memory_space<vmem>>, vector<1x784xf32>
    tpu.vector_store %arg17[%c0_66, %c0_67], %92 {strides = array<i32>} : memref<16x784xf32, #tpu.memory_space<vmem>>, vector<1x784xf32>,
    %c0_68 = arith.constant 0 : index
    %c1_69 = arith.constant 1 : index
    %94 = vector.load %arg15[%c0_68, %c1_69] : memref<1x842xf32, #tpu.memory_space<vmem>>, vector<1x784xf32>
    %c1_70 = arith.constant 1 : index
    %c0_71 = arith.constant 0 : index
    %95 = vector.load %arg17[%c1_70, %c0_71] : memref<16x784xf32, #tpu.memory_space<vmem>>, vector<1x784xf32>
    tpu.vector_store %arg17[%c1_70, %c0_71], %94 {strides = array<i32>} : memref<16x784xf32, #tpu.memory_space<vmem>>, vector<1x784xf32>,
    %c0_72 = arith.constant 0 : index
    %c2_73 = arith.constant 2 : index
    %96 = vector.load %arg15[%c0_72, %c2_73] : memref<1x842xf32, #tpu.memory_space<vmem>>, vector<1x784xf32>
    %97 = arith.mulf %96, %90 : vector<1x784xf32>
    %c2_74 = arith.constant 2 : index
    %c0_75 = arith.constant 0 : index
    %98 = vector.load %arg17[%c2_74, %c0_75] : memref<16x784xf32, #tpu.memory_space<vmem>>, vector<1x784xf32>
    tpu.vector_store %arg17[%c2_74, %c0_75], %97 {strides = array<i32>} : memref<16x784xf32, #tpu.memory_space<vmem>>, vector<1x784xf32>,
    %c0_76 = arith.constant 0 : index
    %c28_77 = arith.constant 28 : index
    %99 = vector.load %arg15[%c0_76, %c28_77] : memref<1x842xf32, #tpu.memory_space<vmem>>, vector<1x784xf32>
    %100 = arith.mulf %99, %86 : vector<1x784xf32>
    %c3_78 = arith.constant 3 : index
    %c0_79 = arith.constant 0 : index
    %101 = vector.load %arg17[%c3_78, %c0_79] : memref<16x784xf32, #tpu.memory_space<vmem>>, vector<1x784xf32>
    tpu.vector_store %arg17[%c3_78, %c0_79], %100 {strides = array<i32>} : memref<16x784xf32, #tpu.memory_space<vmem>>, vector<1x784xf32>,
    %c0_80 = arith.constant 0 : index
    %c29_81 = arith.constant 29 : index
    %102 = vector.load %arg15[%c0_80, %c29_81] : memref<1x842xf32, #tpu.memory_space<vmem>>, vector<1x784xf32>
    %c4_82 = arith.constant 4 : index
    %c0_83 = arith.constant 0 : index
    %103 = vector.load %arg17[%c4_82, %c0_83] : memref<16x784xf32, #tpu.memory_space<vmem>>, vector<1x784xf32>
    tpu.vector_store %arg17[%c4_82, %c0_83], %102 {strides = array<i32>} : memref<16x784xf32, #tpu.memory_space<vmem>>, vector<1x784xf32>,
    %c0_84 = arith.constant 0 : index
    %c30_85 = arith.constant 30 : index
    %104 = vector.load %arg15[%c0_84, %c30_85] : memref<1x842xf32, #tpu.memory_space<vmem>>, vector<1x784xf32>
    %105 = arith.mulf %104, %90 : vector<1x784xf32>
    %c5_86 = arith.constant 5 : index
    %c0_87 = arith.constant 0 : index
    %106 = vector.load %arg17[%c5_86, %c0_87] : memref<16x784xf32, #tpu.memory_space<vmem>>, vector<1x784xf32>
    tpu.vector_store %arg17[%c5_86, %c0_87], %105 {strides = array<i32>} : memref<16x784xf32, #tpu.memory_space<vmem>>, vector<1x784xf32>,
    %c0_88 = arith.constant 0 : index
    %c56_89 = arith.constant 56 : index
    %107 = vector.load %arg15[%c0_88, %c56_89] : memref<1x842xf32, #tpu.memory_space<vmem>>, vector<1x784xf32>
    %108 = arith.mulf %107, %86 : vector<1x784xf32>
    %c6_90 = arith.constant 6 : index
    %c0_91 = arith.constant 0 : index
    %109 = vector.load %arg17[%c6_90, %c0_91] : memref<16x784xf32, #tpu.memory_space<vmem>>, vector<1x784xf32>
    tpu.vector_store %arg17[%c6_90, %c0_91], %108 {strides = array<i32>} : memref<16x784xf32, #tpu.memory_space<vmem>>, vector<1x784xf32>,
    %c0_92 = arith.constant 0 : index
    %c57_93 = arith.constant 57 : index
    %110 = vector.load %arg15[%c0_92, %c57_93] : memref<1x842xf32, #tpu.memory_space<vmem>>, vector<1x784xf32>
    %c7_94 = arith.constant 7 : index
    %c0_95 = arith.constant 0 : index
    %111 = vector.load %arg17[%c7_94, %c0_95] : memref<16x784xf32, #tpu.memory_space<vmem>>, vector<1x784xf32>
    tpu.vector_store %arg17[%c7_94, %c0_95], %110 {strides = array<i32>} : memref<16x784xf32, #tpu.memory_space<vmem>>, vector<1x784xf32>,
    %c0_96 = arith.constant 0 : index
    %c58_97 = arith.constant 58 : index
    %112 = vector.load %arg15[%c0_96, %c58_97] : memref<1x842xf32, #tpu.memory_space<vmem>>, vector<1x784xf32>
    %113 = arith.mulf %112, %90 : vector<1x784xf32>
    %c8_98 = arith.constant 8 : index
    %c0_99 = arith.constant 0 : index
    %114 = vector.load %arg17[%c8_98, %c0_99] : memref<16x784xf32, #tpu.memory_space<vmem>>, vector<1x784xf32>
    tpu.vector_store %arg17[%c8_98, %c0_99], %113 {strides = array<i32>} : memref<16x784xf32, #tpu.memory_space<vmem>>, vector<1x784xf32>,
    %c0_100 = arith.constant 0 : index
    %c0_101 = arith.constant 0 : index
    %115 = vector.load %arg4[%c0_100, %c0_101] : memref<64x16xbf16, #tpu.memory_space<vmem>>, vector<64x16xbf16>
    %c0_102 = arith.constant 0 : index
    %c0_103 = arith.constant 0 : index
    %116 = vector.load %arg17[%c0_102, %c0_103] : memref<16x784xf32, #tpu.memory_space<vmem>>, vector<16x784xf32>
    %117 = arith.truncf %116 : vector<16x784xf32> to vector<16x784xbf16>
    %cst_104 = arith.constant dense<0.000000e+00> : vector<64x784xf32>
    %118 = tpu.matmul %115, %117, %cst_104 {dimension_numbers = #tpu.dot_dimension_numbers<[1], [0], [0], [1], [0, 0, 1, 1], [], []>} : vector<64x16xbf16>, vector<16x784xbf16>, vector<64x784xf32> -> vector<64x784xf32>
    %c0_105 = arith.constant 0 : index
    %c0_106 = arith.constant 0 : index
    %119 = vector.load %arg5[%c0_105, %c0_106] : memref<64x1xf32, #tpu.memory_space<vmem>>, vector<64x1xf32>
    %cst_107 = arith.constant 3.200000e+01 : f32
    %120 = vector.broadcast %cst_107 : f32 to vector<64x1xf32>
    %121 = arith.mulf %120, %119 : vector<64x1xf32>
    %122 = vector.broadcast %121 : vector<64x1xf32> to vector<64x784xf32>
    %123 = arith.addf %118, %122 : vector<64x784xf32>
    %cst_108 = arith.constant 0.000000e+00 : f32
    %124 = vector.broadcast %cst_108 : f32 to vector<64x784xf32>
    %125 = arith.maximumf %123, %124 : vector<64x784xf32>
    %126 = vector.extract_strided_slice %125 {offsets = [0, 0], sizes = [64, 756], strides = [1, 1]} : vector<64x784xf32> to vector<64x756xf32>
    %127 = vector.extract_strided_slice %125 {offsets = [0, 28], sizes = [64, 756], strides = [1, 1]} : vector<64x784xf32> to vector<64x756xf32>
    %128 = arith.maximumf %126, %127 : vector<64x756xf32>
    %129 = vector.extract_strided_slice %128 {offsets = [0, 0], sizes = [64, 755], strides = [1, 1]} : vector<64x756xf32> to vector<64x755xf32>
    %130 = vector.extract_strided_slice %128 {offsets = [0, 1], sizes = [64, 755], strides = [1, 1]} : vector<64x756xf32> to vector<64x755xf32>
    %131 = arith.maximumf %129, %130 : vector<64x755xf32>
    %132 = arith.truncf %131 : vector<64x755xf32> to vector<64x755xbf16>
    %c0_109 = arith.constant 0 : index
    %c0_110 = arith.constant 0 : index
    %133 = vector.load %arg10[%c0_109, %c0_110] : memref<755x196xbf16, #tpu.memory_space<vmem>>, vector<755x196xbf16>
    %cst_111 = arith.constant dense<0.000000e+00> : vector<64x196xf32>
    %134 = tpu.matmul %132, %133, %cst_111 {dimension_numbers = #tpu.dot_dimension_numbers<[1], [0], [0], [1], [0, 0, 1, 1], [], []>} : vector<64x755xbf16>, vector<755x196xbf16>, vector<64x196xf32> -> vector<64x196xf32>
    %cst_112 = arith.constant dense<0.000000e+00> : vector<196xf32>
    %135 = vector.multi_reduction <add>, %134, %cst_112 [0] : vector<64x196xf32> to vector<196xf32>
    %136 = vector.shape_cast %135 : vector<196xf32> to vector<1x196xf32>
    %cst_113 = arith.constant 0.000000e+00 : f32
    %137 = vector.broadcast %cst_113 : f32 to vector<1x15xf32>
    %c0_114 = arith.constant 0 : index
    %c0_115 = arith.constant 0 : index
    %138 = vector.load %arg16[%c0_114, %c0_115] : memref<1x226xf32, #tpu.memory_space<vmem>>, vector<1x15xf32>
    tpu.vector_store %arg16[%c0_114, %c0_115], %137 {strides = array<i32>} : memref<1x226xf32, #tpu.memory_space<vmem>>, vector<1x15xf32>,
    %cst_116 = arith.constant 0.000000e+00 : f32
    %139 = vector.broadcast %cst_116 : f32 to vector<1x15xf32>
    %c0_117 = arith.constant 0 : index
    %c211 = arith.constant 211 : index
    %140 = vector.load %arg16[%c0_117, %c211] : memref<1x226xf32, #tpu.memory_space<vmem>>, vector<1x15xf32>
    tpu.vector_store %arg16[%c0_117, %c211], %139 {strides = array<i32>} : memref<1x226xf32, #tpu.memory_space<vmem>>, vector<1x15xf32>,
    %cst_118 = arith.constant 0.000000e+00 : f32
    %141 = vector.broadcast %cst_118 : f32 to vector<7x196xf32>
    %c9_119 = arith.constant 9 : index
    %c0_120 = arith.constant 0 : index
    %142 = vector.load %arg18[%c9_119, %c0_120] : memref<16x196xf32, #tpu.memory_space<vmem>>, vector<7x196xf32>
    tpu.vector_store %arg18[%c9_119, %c0_120], %141 {strides = array<i32>} : memref<16x196xf32, #tpu.memory_space<vmem>>, vector<7x196xf32>,
    %c0_121 = arith.constant 0 : index
    %c15 = arith.constant 15 : index
    %143 = vector.load %arg16[%c0_121, %c15] : memref<1x226xf32, #tpu.memory_space<vmem>>, vector<1x196xf32>
    tpu.vector_store %arg16[%c0_121, %c15], %136 {strides = array<i32>} : memref<1x226xf32, #tpu.memory_space<vmem>>, vector<1x196xf32>,
    %144 = tpu.iota {dimensions = array<i32: 1>} : vector<1x196xi32>
    %145 = arith.sitofp %144 : vector<1x196xi32> to vector<1x196xf32>
    %cst_122 = arith.constant 5.000000e-01 : f32
    %146 = vector.broadcast %cst_122 : f32 to vector<1x196xf32>
    %147 = arith.addf %145, %146 : vector<1x196xf32>
    %cst_123 = arith.constant 0.0714285746 : f32
    %148 = vector.broadcast %cst_123 : f32 to vector<1x196xf32>
    %149 = arith.mulf %147, %148 : vector<1x196xf32>
    %150 = math.floor %149 : vector<1x196xf32>
    %cst_124 = arith.constant 1.400000e+01 : f32
    %151 = vector.broadcast %cst_124 : f32 to vector<1x196xf32>
    %152 = arith.mulf %150, %151 : vector<1x196xf32>
    %153 = arith.subf %145, %152 : vector<1x196xf32>
    %cst_125 = arith.constant 5.000000e-01 : f32
    %154 = vector.broadcast %cst_125 : f32 to vector<1x196xf32>
    %155 = arith.cmpf ogt, %153, %154 : vector<1x196xf32>
    %156 = arith.extui %155 : vector<1x196xi1> to vector<1x196xi32>
    %157 = arith.sitofp %156 : vector<1x196xi32> to vector<1x196xf32>
    %cst_126 = arith.constant 1.250000e+01 : f32
    %158 = vector.broadcast %cst_126 : f32 to vector<1x196xf32>
    %159 = arith.cmpf olt, %153, %158 : vector<1x196xf32>
    %160 = arith.extui %159 : vector<1x196xi1> to vector<1x196xi32>
    %161 = arith.sitofp %160 : vector<1x196xi32> to vector<1x196xf32>
    %c0_127 = arith.constant 0 : index
    %c0_128 = arith.constant 0 : index
    %162 = vector.load %arg16[%c0_127, %c0_128] : memref<1x226xf32, #tpu.memory_space<vmem>>, vector<1x196xf32>
    %163 = arith.mulf %162, %157 : vector<1x196xf32>
    %c0_129 = arith.constant 0 : index
    %c0_130 = arith.constant 0 : index
    %164 = vector.load %arg18[%c0_129, %c0_130] : memref<16x196xf32, #tpu.memory_space<vmem>>, vector<1x196xf32>
    tpu.vector_store %arg18[%c0_129, %c0_130], %163 {strides = array<i32>} : memref<16x196xf32, #tpu.memory_space<vmem>>, vector<1x196xf32>,
    %c0_131 = arith.constant 0 : index
    %c1_132 = arith.constant 1 : index
    %165 = vector.load %arg16[%c0_131, %c1_132] : memref<1x226xf32, #tpu.memory_space<vmem>>, vector<1x196xf32>
    %c1_133 = arith.constant 1 : index
    %c0_134 = arith.constant 0 : index
    %166 = vector.load %arg18[%c1_133, %c0_134] : memref<16x196xf32, #tpu.memory_space<vmem>>, vector<1x196xf32>
    tpu.vector_store %arg18[%c1_133, %c0_134], %165 {strides = array<i32>} : memref<16x196xf32, #tpu.memory_space<vmem>>, vector<1x196xf32>,
    %c0_135 = arith.constant 0 : index
    %c2_136 = arith.constant 2 : index
    %167 = vector.load %arg16[%c0_135, %c2_136] : memref<1x226xf32, #tpu.memory_space<vmem>>, vector<1x196xf32>
    %168 = arith.mulf %167, %161 : vector<1x196xf32>
    %c2_137 = arith.constant 2 : index
    %c0_138 = arith.constant 0 : index
    %169 = vector.load %arg18[%c2_137, %c0_138] : memref<16x196xf32, #tpu.memory_space<vmem>>, vector<1x196xf32>
    tpu.vector_store %arg18[%c2_137, %c0_138], %168 {strides = array<i32>} : memref<16x196xf32, #tpu.memory_space<vmem>>, vector<1x196xf32>,
    %c0_139 = arith.constant 0 : index
    %c14 = arith.constant 14 : index
    %170 = vector.load %arg16[%c0_139, %c14] : memref<1x226xf32, #tpu.memory_space<vmem>>, vector<1x196xf32>
    %171 = arith.mulf %170, %157 : vector<1x196xf32>
    %c3_140 = arith.constant 3 : index
    %c0_141 = arith.constant 0 : index
    %172 = vector.load %arg18[%c3_140, %c0_141] : memref<16x196xf32, #tpu.memory_space<vmem>>, vector<1x196xf32>
    tpu.vector_store %arg18[%c3_140, %c0_141], %171 {strides = array<i32>} : memref<16x196xf32, #tpu.memory_space<vmem>>, vector<1x196xf32>,
    %c0_142 = arith.constant 0 : index
    %c15_143 = arith.constant 15 : index
    %173 = vector.load %arg16[%c0_142, %c15_143] : memref<1x226xf32, #tpu.memory_space<vmem>>, vector<1x196xf32>
    %c4_144 = arith.constant 4 : index
    %c0_145 = arith.constant 0 : index
    %174 = vector.load %arg18[%c4_144, %c0_145] : memref<16x196xf32, #tpu.memory_space<vmem>>, vector<1x196xf32>
    tpu.vector_store %arg18[%c4_144, %c0_145], %173 {strides = array<i32>} : memref<16x196xf32, #tpu.memory_space<vmem>>, vector<1x196xf32>,
    %c0_146 = arith.constant 0 : index
    %c16 = arith.constant 16 : index
    %175 = vector.load %arg16[%c0_146, %c16] : memref<1x226xf32, #tpu.memory_space<vmem>>, vector<1x196xf32>
    %176 = arith.mulf %175, %161 : vector<1x196xf32>
    %c5_147 = arith.constant 5 : index
    %c0_148 = arith.constant 0 : index
    %177 = vector.load %arg18[%c5_147, %c0_148] : memref<16x196xf32, #tpu.memory_space<vmem>>, vector<1x196xf32>
    tpu.vector_store %arg18[%c5_147, %c0_148], %176 {strides = array<i32>} : memref<16x196xf32, #tpu.memory_space<vmem>>, vector<1x196xf32>,
    %c0_149 = arith.constant 0 : index
    %c28_150 = arith.constant 28 : index
    %178 = vector.load %arg16[%c0_149, %c28_150] : memref<1x226xf32, #tpu.memory_space<vmem>>, vector<1x196xf32>
    %179 = arith.mulf %178, %157 : vector<1x196xf32>
    %c6_151 = arith.constant 6 : index
    %c0_152 = arith.constant 0 : index
    %180 = vector.load %arg18[%c6_151, %c0_152] : memref<16x196xf32, #tpu.memory_space<vmem>>, vector<1x196xf32>
    tpu.vector_store %arg18[%c6_151, %c0_152], %179 {strides = array<i32>} : memref<16x196xf32, #tpu.memory_space<vmem>>, vector<1x196xf32>,
    %c0_153 = arith.constant 0 : index
    %c29_154 = arith.constant 29 : index
    %181 = vector.load %arg16[%c0_153, %c29_154] : memref<1x226xf32, #tpu.memory_space<vmem>>, vector<1x196xf32>
    %c7_155 = arith.constant 7 : index
    %c0_156 = arith.constant 0 : index
    %182 = vector.load %arg18[%c7_155, %c0_156] : memref<16x196xf32, #tpu.memory_space<vmem>>, vector<1x196xf32>
    tpu.vector_store %arg18[%c7_155, %c0_156], %181 {strides = array<i32>} : memref<16x196xf32, #tpu.memory_space<vmem>>, vector<1x196xf32>,
    %c0_157 = arith.constant 0 : index
    %c30_158 = arith.constant 30 : index
    %183 = vector.load %arg16[%c0_157, %c30_158] : memref<1x226xf32, #tpu.memory_space<vmem>>, vector<1x196xf32>
    %184 = arith.mulf %183, %161 : vector<1x196xf32>
    %c8_159 = arith.constant 8 : index
    %c0_160 = arith.constant 0 : index
    %185 = vector.load %arg18[%c8_159, %c0_160] : memref<16x196xf32, #tpu.memory_space<vmem>>, vector<1x196xf32>
    tpu.vector_store %arg18[%c8_159, %c0_160], %184 {strides = array<i32>} : memref<16x196xf32, #tpu.memory_space<vmem>>, vector<1x196xf32>,
    %c0_161 = arith.constant 0 : index
    %c0_162 = arith.constant 0 : index
    %186 = vector.load %arg6[%c0_161, %c0_162] : memref<64x16xbf16, #tpu.memory_space<vmem>>, vector<64x16xbf16>
    %c0_163 = arith.constant 0 : index
    %c0_164 = arith.constant 0 : index
    %187 = vector.load %arg18[%c0_163, %c0_164] : memref<16x196xf32, #tpu.memory_space<vmem>>, vector<16x196xf32>
    %188 = arith.truncf %187 : vector<16x196xf32> to vector<16x196xbf16>
    %cst_165 = arith.constant dense<0.000000e+00> : vector<64x196xf32>
    %189 = tpu.matmul %186, %188, %cst_165 {dimension_numbers = #tpu.dot_dimension_numbers<[1], [0], [0], [1], [0, 0, 1, 1], [], []>} : vector<64x16xbf16>, vector<16x196xbf16>, vector<64x196xf32> -> vector<64x196xf32>
    %c0_166 = arith.constant 0 : index
    %c0_167 = arith.constant 0 : index
    %190 = vector.load %arg7[%c0_166, %c0_167] : memref<64x1xf32, #tpu.memory_space<vmem>>, vector<64x1xf32>
    %cst_168 = arith.constant 6.400000e+01 : f32
    %191 = vector.broadcast %cst_168 : f32 to vector<64x1xf32>
    %192 = arith.mulf %191, %190 : vector<64x1xf32>
    %193 = vector.broadcast %192 : vector<64x1xf32> to vector<64x196xf32>
    %194 = arith.addf %189, %193 : vector<64x196xf32>
    %cst_169 = arith.constant 0.000000e+00 : f32
    %195 = vector.broadcast %cst_169 : f32 to vector<64x196xf32>
    %196 = arith.maximumf %194, %195 : vector<64x196xf32>
    %cst_170 = arith.constant dense<0.000000e+00> : vector<196xf32>
    %197 = vector.multi_reduction <add>, %196, %cst_170 [0] : vector<64x196xf32> to vector<196xf32>
    %198 = vector.shape_cast %197 : vector<196xf32> to vector<1x196xf32>
    %cst_171 = arith.constant 0.000000e+00 : f32
    %199 = vector.broadcast %cst_171 : f32 to vector<1x15xf32>
    %c0_172 = arith.constant 0 : index
    %c0_173 = arith.constant 0 : index
    %200 = vector.load %arg16[%c0_172, %c0_173] : memref<1x226xf32, #tpu.memory_space<vmem>>, vector<1x15xf32>
    tpu.vector_store %arg16[%c0_172, %c0_173], %199 {strides = array<i32>} : memref<1x226xf32, #tpu.memory_space<vmem>>, vector<1x15xf32>,
    %cst_174 = arith.constant 0.000000e+00 : f32
    %201 = vector.broadcast %cst_174 : f32 to vector<1x15xf32>
    %c0_175 = arith.constant 0 : index
    %c211_176 = arith.constant 211 : index
    %202 = vector.load %arg16[%c0_175, %c211_176] : memref<1x226xf32, #tpu.memory_space<vmem>>, vector<1x15xf32>
    tpu.vector_store %arg16[%c0_175, %c211_176], %201 {strides = array<i32>} : memref<1x226xf32, #tpu.memory_space<vmem>>, vector<1x15xf32>,
    %cst_177 = arith.constant 0.000000e+00 : f32
    %203 = vector.broadcast %cst_177 : f32 to vector<7x196xf32>
    %c9_178 = arith.constant 9 : index
    %c0_179 = arith.constant 0 : index
    %204 = vector.load %arg18[%c9_178, %c0_179] : memref<16x196xf32, #tpu.memory_space<vmem>>, vector<7x196xf32>
    tpu.vector_store %arg18[%c9_178, %c0_179], %203 {strides = array<i32>} : memref<16x196xf32, #tpu.memory_space<vmem>>, vector<7x196xf32>,
    %c0_180 = arith.constant 0 : index
    %c15_181 = arith.constant 15 : index
    %205 = vector.load %arg16[%c0_180, %c15_181] : memref<1x226xf32, #tpu.memory_space<vmem>>, vector<1x196xf32>
    tpu.vector_store %arg16[%c0_180, %c15_181], %198 {strides = array<i32>} : memref<1x226xf32, #tpu.memory_space<vmem>>, vector<1x196xf32>,
    %206 = tpu.iota {dimensions = array<i32: 1>} : vector<1x196xi32>
    %207 = arith.sitofp %206 : vector<1x196xi32> to vector<1x196xf32>
    %cst_182 = arith.constant 5.000000e-01 : f32
    %208 = vector.broadcast %cst_182 : f32 to vector<1x196xf32>
    %209 = arith.addf %207, %208 : vector<1x196xf32>
    %cst_183 = arith.constant 0.0714285746 : f32
    %210 = vector.broadcast %cst_183 : f32 to vector<1x196xf32>
    %211 = arith.mulf %209, %210 : vector<1x196xf32>
    %212 = math.floor %211 : vector<1x196xf32>
    %cst_184 = arith.constant 1.400000e+01 : f32
    %213 = vector.broadcast %cst_184 : f32 to vector<1x196xf32>
    %214 = arith.mulf %212, %213 : vector<1x196xf32>
    %215 = arith.subf %207, %214 : vector<1x196xf32>
    %cst_185 = arith.constant 5.000000e-01 : f32
    %216 = vector.broadcast %cst_185 : f32 to vector<1x196xf32>
    %217 = arith.cmpf ogt, %215, %216 : vector<1x196xf32>
    %218 = arith.extui %217 : vector<1x196xi1> to vector<1x196xi32>
    %219 = arith.sitofp %218 : vector<1x196xi32> to vector<1x196xf32>
    %cst_186 = arith.constant 1.250000e+01 : f32
    %220 = vector.broadcast %cst_186 : f32 to vector<1x196xf32>
    %221 = arith.cmpf olt, %215, %220 : vector<1x196xf32>
    %222 = arith.extui %221 : vector<1x196xi1> to vector<1x196xi32>
    %223 = arith.sitofp %222 : vector<1x196xi32> to vector<1x196xf32>
    %c0_187 = arith.constant 0 : index
    %c0_188 = arith.constant 0 : index
    %224 = vector.load %arg16[%c0_187, %c0_188] : memref<1x226xf32, #tpu.memory_space<vmem>>, vector<1x196xf32>
    %225 = arith.mulf %224, %219 : vector<1x196xf32>
    %c0_189 = arith.constant 0 : index
    %c0_190 = arith.constant 0 : index
    %226 = vector.load %arg18[%c0_189, %c0_190] : memref<16x196xf32, #tpu.memory_space<vmem>>, vector<1x196xf32>
    tpu.vector_store %arg18[%c0_189, %c0_190], %225 {strides = array<i32>} : memref<16x196xf32, #tpu.memory_space<vmem>>, vector<1x196xf32>,
    %c0_191 = arith.constant 0 : index
    %c1_192 = arith.constant 1 : index
    %227 = vector.load %arg16[%c0_191, %c1_192] : memref<1x226xf32, #tpu.memory_space<vmem>>, vector<1x196xf32>
    %c1_193 = arith.constant 1 : index
    %c0_194 = arith.constant 0 : index
    %228 = vector.load %arg18[%c1_193, %c0_194] : memref<16x196xf32, #tpu.memory_space<vmem>>, vector<1x196xf32>
    tpu.vector_store %arg18[%c1_193, %c0_194], %227 {strides = array<i32>} : memref<16x196xf32, #tpu.memory_space<vmem>>, vector<1x196xf32>,
    %c0_195 = arith.constant 0 : index
    %c2_196 = arith.constant 2 : index
    %229 = vector.load %arg16[%c0_195, %c2_196] : memref<1x226xf32, #tpu.memory_space<vmem>>, vector<1x196xf32>
    %230 = arith.mulf %229, %223 : vector<1x196xf32>
    %c2_197 = arith.constant 2 : index
    %c0_198 = arith.constant 0 : index
    %231 = vector.load %arg18[%c2_197, %c0_198] : memref<16x196xf32, #tpu.memory_space<vmem>>, vector<1x196xf32>
    tpu.vector_store %arg18[%c2_197, %c0_198], %230 {strides = array<i32>} : memref<16x196xf32, #tpu.memory_space<vmem>>, vector<1x196xf32>,
    %c0_199 = arith.constant 0 : index
    %c14_200 = arith.constant 14 : index
    %232 = vector.load %arg16[%c0_199, %c14_200] : memref<1x226xf32, #tpu.memory_space<vmem>>, vector<1x196xf32>
    %233 = arith.mulf %232, %219 : vector<1x196xf32>
    %c3_201 = arith.constant 3 : index
    %c0_202 = arith.constant 0 : index
    %234 = vector.load %arg18[%c3_201, %c0_202] : memref<16x196xf32, #tpu.memory_space<vmem>>, vector<1x196xf32>
    tpu.vector_store %arg18[%c3_201, %c0_202], %233 {strides = array<i32>} : memref<16x196xf32, #tpu.memory_space<vmem>>, vector<1x196xf32>,
    %c0_203 = arith.constant 0 : index
    %c15_204 = arith.constant 15 : index
    %235 = vector.load %arg16[%c0_203, %c15_204] : memref<1x226xf32, #tpu.memory_space<vmem>>, vector<1x196xf32>
    %c4_205 = arith.constant 4 : index
    %c0_206 = arith.constant 0 : index
    %236 = vector.load %arg18[%c4_205, %c0_206] : memref<16x196xf32, #tpu.memory_space<vmem>>, vector<1x196xf32>
    tpu.vector_store %arg18[%c4_205, %c0_206], %235 {strides = array<i32>} : memref<16x196xf32, #tpu.memory_space<vmem>>, vector<1x196xf32>,
    %c0_207 = arith.constant 0 : index
    %c16_208 = arith.constant 16 : index
    %237 = vector.load %arg16[%c0_207, %c16_208] : memref<1x226xf32, #tpu.memory_space<vmem>>, vector<1x196xf32>
    %238 = arith.mulf %237, %223 : vector<1x196xf32>
    %c5_209 = arith.constant 5 : index
    %c0_210 = arith.constant 0 : index
    %239 = vector.load %arg18[%c5_209, %c0_210] : memref<16x196xf32, #tpu.memory_space<vmem>>, vector<1x196xf32>
    tpu.vector_store %arg18[%c5_209, %c0_210], %238 {strides = array<i32>} : memref<16x196xf32, #tpu.memory_space<vmem>>, vector<1x196xf32>,
    %c0_211 = arith.constant 0 : index
    %c28_212 = arith.constant 28 : index
    %240 = vector.load %arg16[%c0_211, %c28_212] : memref<1x226xf32, #tpu.memory_space<vmem>>, vector<1x196xf32>
    %241 = arith.mulf %240, %219 : vector<1x196xf32>
    %c6_213 = arith.constant 6 : index
    %c0_214 = arith.constant 0 : index
    %242 = vector.load %arg18[%c6_213, %c0_214] : memref<16x196xf32, #tpu.memory_space<vmem>>, vector<1x196xf32>
    tpu.vector_store %arg18[%c6_213, %c0_214], %241 {strides = array<i32>} : memref<16x196xf32, #tpu.memory_space<vmem>>, vector<1x196xf32>,
    %c0_215 = arith.constant 0 : index
    %c29_216 = arith.constant 29 : index
    %243 = vector.load %arg16[%c0_215, %c29_216] : memref<1x226xf32, #tpu.memory_space<vmem>>, vector<1x196xf32>
    %c7_217 = arith.constant 7 : index
    %c0_218 = arith.constant 0 : index
    %244 = vector.load %arg18[%c7_217, %c0_218] : memref<16x196xf32, #tpu.memory_space<vmem>>, vector<1x196xf32>
    tpu.vector_store %arg18[%c7_217, %c0_218], %243 {strides = array<i32>} : memref<16x196xf32, #tpu.memory_space<vmem>>, vector<1x196xf32>,
    %c0_219 = arith.constant 0 : index
    %c30_220 = arith.constant 30 : index
    %245 = vector.load %arg16[%c0_219, %c30_220] : memref<1x226xf32, #tpu.memory_space<vmem>>, vector<1x196xf32>
    %246 = arith.mulf %245, %223 : vector<1x196xf32>
    %c8_221 = arith.constant 8 : index
    %c0_222 = arith.constant 0 : index
    %247 = vector.load %arg18[%c8_221, %c0_222] : memref<16x196xf32, #tpu.memory_space<vmem>>, vector<1x196xf32>
    tpu.vector_store %arg18[%c8_221, %c0_222], %246 {strides = array<i32>} : memref<16x196xf32, #tpu.memory_space<vmem>>, vector<1x196xf32>,
    %c0_223 = arith.constant 0 : index
    %c0_224 = arith.constant 0 : index
    %248 = vector.load %arg8[%c0_223, %c0_224] : memref<16x16xbf16, #tpu.memory_space<vmem>>, vector<16x16xbf16>
    %c0_225 = arith.constant 0 : index
    %c0_226 = arith.constant 0 : index
    %249 = vector.load %arg18[%c0_225, %c0_226] : memref<16x196xf32, #tpu.memory_space<vmem>>, vector<16x196xf32>
    %250 = arith.truncf %249 : vector<16x196xf32> to vector<16x196xbf16>
    %cst_227 = arith.constant dense<0.000000e+00> : vector<16x196xf32>
    %251 = tpu.matmul %248, %250, %cst_227 {dimension_numbers = #tpu.dot_dimension_numbers<[1], [0], [0], [1], [0, 0, 1, 1], [], []>} : vector<16x16xbf16>, vector<16x196xbf16>, vector<16x196xf32> -> vector<16x196xf32>
    %c0_228 = arith.constant 0 : index
    %c0_229 = arith.constant 0 : index
    %252 = vector.load %arg9[%c0_228, %c0_229] : memref<16x1xf32, #tpu.memory_space<vmem>>, vector<16x1xf32>
    %cst_230 = arith.constant 6.400000e+01 : f32
    %253 = vector.broadcast %cst_230 : f32 to vector<16x1xf32>
    %254 = arith.mulf %253, %252 : vector<16x1xf32>
    %255 = vector.broadcast %254 : vector<16x1xf32> to vector<16x196xf32>
    %256 = arith.addf %251, %255 : vector<16x196xf32>
    %cst_231 = arith.constant 0.000000e+00 : f32
    %257 = vector.broadcast %cst_231 : f32 to vector<16x196xf32>
    %258 = arith.maximumf %256, %257 : vector<16x196xf32>
    %259 = vector.extract_strided_slice %258 {offsets = [0, 0], sizes = [16, 182], strides = [1, 1]} : vector<16x196xf32> to vector<16x182xf32>
    %260 = vector.extract_strided_slice %258 {offsets = [0, 14], sizes = [16, 182], strides = [1, 1]} : vector<16x196xf32> to vector<16x182xf32>
    %261 = arith.maximumf %259, %260 : vector<16x182xf32>
    %262 = vector.extract_strided_slice %261 {offsets = [0, 0], sizes = [16, 181], strides = [1, 1]} : vector<16x182xf32> to vector<16x181xf32>
    %263 = vector.extract_strided_slice %261 {offsets = [0, 1], sizes = [16, 181], strides = [1, 1]} : vector<16x182xf32> to vector<16x181xf32>
    %264 = arith.maximumf %262, %263 : vector<16x181xf32>
    %265 = arith.truncf %264 : vector<16x181xf32> to vector<16x181xbf16>
    %c0_232 = arith.constant 0 : index
    %c0_233 = arith.constant 0 : index
    %266 = vector.load %arg11[%c0_232, %c0_233] : memref<181x49xbf16, #tpu.memory_space<vmem>>, vector<181x49xbf16>
    %cst_234 = arith.constant dense<0.000000e+00> : vector<16x49xf32>
    %267 = tpu.matmul %265, %266, %cst_234 {dimension_numbers = #tpu.dot_dimension_numbers<[1], [0], [0], [1], [0, 0, 1, 1], [], []>} : vector<16x181xbf16>, vector<181x49xbf16>, vector<16x49xf32> -> vector<16x49xf32>
    %c0_235 = arith.constant 0 : index
    %c0_236 = arith.constant 0 : index
    %268 = vector.load %arg13[%c0_235, %c0_236] : memref<1x10xf32, #tpu.memory_space<vmem>>, vector<1x10xf32>
    %269 = vector.extract_strided_slice %267 {offsets = [0, 0], sizes = [1, 49], strides = [1, 1]} : vector<16x49xf32> to vector<1x49xf32>
    %270 = arith.truncf %269 : vector<1x49xf32> to vector<1x49xbf16>
    %c0_237 = arith.constant 0 : index
    %c0_238 = arith.constant 0 : index
    %c0_239 = arith.constant 0 : index
    %271 = vector.load %arg12[%c0_237, %c0_238, %c0_239] : memref<16x49x10xbf16, #tpu.memory_space<vmem>>, vector<1x49x10xbf16>
    %272 = vector.shape_cast %271 : vector<1x49x10xbf16> to vector<49x10xbf16>
    %cst_240 = arith.constant dense<0.000000e+00> : vector<1x10xf32>
    %273 = tpu.matmul %270, %272, %cst_240 {dimension_numbers = #tpu.dot_dimension_numbers<[1], [0], [0], [1], [0, 0, 1, 1], [], []>} : vector<1x49xbf16>, vector<49x10xbf16>, vector<1x10xf32> -> vector<1x10xf32>
    %274 = arith.addf %268, %273 : vector<1x10xf32>
    %275 = vector.extract_strided_slice %267 {offsets = [1, 0], sizes = [1, 49], strides = [1, 1]} : vector<16x49xf32> to vector<1x49xf32>
    %276 = arith.truncf %275 : vector<1x49xf32> to vector<1x49xbf16>
    %c1_241 = arith.constant 1 : index
    %c0_242 = arith.constant 0 : index
    %c0_243 = arith.constant 0 : index
    %277 = vector.load %arg12[%c1_241, %c0_242, %c0_243] : memref<16x49x10xbf16, #tpu.memory_space<vmem>>, vector<1x49x10xbf16>
    %278 = vector.shape_cast %277 : vector<1x49x10xbf16> to vector<49x10xbf16>
    %cst_244 = arith.constant dense<0.000000e+00> : vector<1x10xf32>
    %279 = tpu.matmul %276, %278, %cst_244 {dimension_numbers = #tpu.dot_dimension_numbers<[1], [0], [0], [1], [0, 0, 1, 1], [], []>} : vector<1x49xbf16>, vector<49x10xbf16>, vector<1x10xf32> -> vector<1x10xf32>
    %280 = arith.addf %274, %279 : vector<1x10xf32>
    %281 = vector.extract_strided_slice %267 {offsets = [2, 0], sizes = [1, 49], strides = [1, 1]} : vector<16x49xf32> to vector<1x49xf32>
    %282 = arith.truncf %281 : vector<1x49xf32> to vector<1x49xbf16>
    %c2_245 = arith.constant 2 : index
    %c0_246 = arith.constant 0 : index
    %c0_247 = arith.constant 0 : index
    %283 = vector.load %arg12[%c2_245, %c0_246, %c0_247] : memref<16x49x10xbf16, #tpu.memory_space<vmem>>, vector<1x49x10xbf16>
    %284 = vector.shape_cast %283 : vector<1x49x10xbf16> to vector<49x10xbf16>
    %cst_248 = arith.constant dense<0.000000e+00> : vector<1x10xf32>
    %285 = tpu.matmul %282, %284, %cst_248 {dimension_numbers = #tpu.dot_dimension_numbers<[1], [0], [0], [1], [0, 0, 1, 1], [], []>} : vector<1x49xbf16>, vector<49x10xbf16>, vector<1x10xf32> -> vector<1x10xf32>
    %286 = arith.addf %280, %285 : vector<1x10xf32>
    %287 = vector.extract_strided_slice %267 {offsets = [3, 0], sizes = [1, 49], strides = [1, 1]} : vector<16x49xf32> to vector<1x49xf32>
    %288 = arith.truncf %287 : vector<1x49xf32> to vector<1x49xbf16>
    %c3_249 = arith.constant 3 : index
    %c0_250 = arith.constant 0 : index
    %c0_251 = arith.constant 0 : index
    %289 = vector.load %arg12[%c3_249, %c0_250, %c0_251] : memref<16x49x10xbf16, #tpu.memory_space<vmem>>, vector<1x49x10xbf16>
    %290 = vector.shape_cast %289 : vector<1x49x10xbf16> to vector<49x10xbf16>
    %cst_252 = arith.constant dense<0.000000e+00> : vector<1x10xf32>
    %291 = tpu.matmul %288, %290, %cst_252 {dimension_numbers = #tpu.dot_dimension_numbers<[1], [0], [0], [1], [0, 0, 1, 1], [], []>} : vector<1x49xbf16>, vector<49x10xbf16>, vector<1x10xf32> -> vector<1x10xf32>
    %292 = arith.addf %286, %291 : vector<1x10xf32>
    %293 = vector.extract_strided_slice %267 {offsets = [4, 0], sizes = [1, 49], strides = [1, 1]} : vector<16x49xf32> to vector<1x49xf32>
    %294 = arith.truncf %293 : vector<1x49xf32> to vector<1x49xbf16>
    %c4_253 = arith.constant 4 : index
    %c0_254 = arith.constant 0 : index
    %c0_255 = arith.constant 0 : index
    %295 = vector.load %arg12[%c4_253, %c0_254, %c0_255] : memref<16x49x10xbf16, #tpu.memory_space<vmem>>, vector<1x49x10xbf16>
    %296 = vector.shape_cast %295 : vector<1x49x10xbf16> to vector<49x10xbf16>
    %cst_256 = arith.constant dense<0.000000e+00> : vector<1x10xf32>
    %297 = tpu.matmul %294, %296, %cst_256 {dimension_numbers = #tpu.dot_dimension_numbers<[1], [0], [0], [1], [0, 0, 1, 1], [], []>} : vector<1x49xbf16>, vector<49x10xbf16>, vector<1x10xf32> -> vector<1x10xf32>
    %298 = arith.addf %292, %297 : vector<1x10xf32>
    %299 = vector.extract_strided_slice %267 {offsets = [5, 0], sizes = [1, 49], strides = [1, 1]} : vector<16x49xf32> to vector<1x49xf32>
    %300 = arith.truncf %299 : vector<1x49xf32> to vector<1x49xbf16>
    %c5_257 = arith.constant 5 : index
    %c0_258 = arith.constant 0 : index
    %c0_259 = arith.constant 0 : index
    %301 = vector.load %arg12[%c5_257, %c0_258, %c0_259] : memref<16x49x10xbf16, #tpu.memory_space<vmem>>, vector<1x49x10xbf16>
    %302 = vector.shape_cast %301 : vector<1x49x10xbf16> to vector<49x10xbf16>
    %cst_260 = arith.constant dense<0.000000e+00> : vector<1x10xf32>
    %303 = tpu.matmul %300, %302, %cst_260 {dimension_numbers = #tpu.dot_dimension_numbers<[1], [0], [0], [1], [0, 0, 1, 1], [], []>} : vector<1x49xbf16>, vector<49x10xbf16>, vector<1x10xf32> -> vector<1x10xf32>
    %304 = arith.addf %298, %303 : vector<1x10xf32>
    %305 = vector.extract_strided_slice %267 {offsets = [6, 0], sizes = [1, 49], strides = [1, 1]} : vector<16x49xf32> to vector<1x49xf32>
    %306 = arith.truncf %305 : vector<1x49xf32> to vector<1x49xbf16>
    %c6_261 = arith.constant 6 : index
    %c0_262 = arith.constant 0 : index
    %c0_263 = arith.constant 0 : index
    %307 = vector.load %arg12[%c6_261, %c0_262, %c0_263] : memref<16x49x10xbf16, #tpu.memory_space<vmem>>, vector<1x49x10xbf16>
    %308 = vector.shape_cast %307 : vector<1x49x10xbf16> to vector<49x10xbf16>
    %cst_264 = arith.constant dense<0.000000e+00> : vector<1x10xf32>
    %309 = tpu.matmul %306, %308, %cst_264 {dimension_numbers = #tpu.dot_dimension_numbers<[1], [0], [0], [1], [0, 0, 1, 1], [], []>} : vector<1x49xbf16>, vector<49x10xbf16>, vector<1x10xf32> -> vector<1x10xf32>
    %310 = arith.addf %304, %309 : vector<1x10xf32>
    %311 = vector.extract_strided_slice %267 {offsets = [7, 0], sizes = [1, 49], strides = [1, 1]} : vector<16x49xf32> to vector<1x49xf32>
    %312 = arith.truncf %311 : vector<1x49xf32> to vector<1x49xbf16>
    %c7_265 = arith.constant 7 : index
    %c0_266 = arith.constant 0 : index
    %c0_267 = arith.constant 0 : index
    %313 = vector.load %arg12[%c7_265, %c0_266, %c0_267] : memref<16x49x10xbf16, #tpu.memory_space<vmem>>, vector<1x49x10xbf16>
    %314 = vector.shape_cast %313 : vector<1x49x10xbf16> to vector<49x10xbf16>
    %cst_268 = arith.constant dense<0.000000e+00> : vector<1x10xf32>
    %315 = tpu.matmul %312, %314, %cst_268 {dimension_numbers = #tpu.dot_dimension_numbers<[1], [0], [0], [1], [0, 0, 1, 1], [], []>} : vector<1x49xbf16>, vector<49x10xbf16>, vector<1x10xf32> -> vector<1x10xf32>
    %316 = arith.addf %310, %315 : vector<1x10xf32>
    %317 = vector.extract_strided_slice %267 {offsets = [8, 0], sizes = [1, 49], strides = [1, 1]} : vector<16x49xf32> to vector<1x49xf32>
    %318 = arith.truncf %317 : vector<1x49xf32> to vector<1x49xbf16>
    %c8_269 = arith.constant 8 : index
    %c0_270 = arith.constant 0 : index
    %c0_271 = arith.constant 0 : index
    %319 = vector.load %arg12[%c8_269, %c0_270, %c0_271] : memref<16x49x10xbf16, #tpu.memory_space<vmem>>, vector<1x49x10xbf16>
    %320 = vector.shape_cast %319 : vector<1x49x10xbf16> to vector<49x10xbf16>
    %cst_272 = arith.constant dense<0.000000e+00> : vector<1x10xf32>
    %321 = tpu.matmul %318, %320, %cst_272 {dimension_numbers = #tpu.dot_dimension_numbers<[1], [0], [0], [1], [0, 0, 1, 1], [], []>} : vector<1x49xbf16>, vector<49x10xbf16>, vector<1x10xf32> -> vector<1x10xf32>
    %322 = arith.addf %316, %321 : vector<1x10xf32>
    %323 = vector.extract_strided_slice %267 {offsets = [9, 0], sizes = [1, 49], strides = [1, 1]} : vector<16x49xf32> to vector<1x49xf32>
    %324 = arith.truncf %323 : vector<1x49xf32> to vector<1x49xbf16>
    %c9_273 = arith.constant 9 : index
    %c0_274 = arith.constant 0 : index
    %c0_275 = arith.constant 0 : index
    %325 = vector.load %arg12[%c9_273, %c0_274, %c0_275] : memref<16x49x10xbf16, #tpu.memory_space<vmem>>, vector<1x49x10xbf16>
    %326 = vector.shape_cast %325 : vector<1x49x10xbf16> to vector<49x10xbf16>
    %cst_276 = arith.constant dense<0.000000e+00> : vector<1x10xf32>
    %327 = tpu.matmul %324, %326, %cst_276 {dimension_numbers = #tpu.dot_dimension_numbers<[1], [0], [0], [1], [0, 0, 1, 1], [], []>} : vector<1x49xbf16>, vector<49x10xbf16>, vector<1x10xf32> -> vector<1x10xf32>
    %328 = arith.addf %322, %327 : vector<1x10xf32>
    %329 = vector.extract_strided_slice %267 {offsets = [10, 0], sizes = [1, 49], strides = [1, 1]} : vector<16x49xf32> to vector<1x49xf32>
    %330 = arith.truncf %329 : vector<1x49xf32> to vector<1x49xbf16>
    %c10 = arith.constant 10 : index
    %c0_277 = arith.constant 0 : index
    %c0_278 = arith.constant 0 : index
    %331 = vector.load %arg12[%c10, %c0_277, %c0_278] : memref<16x49x10xbf16, #tpu.memory_space<vmem>>, vector<1x49x10xbf16>
    %332 = vector.shape_cast %331 : vector<1x49x10xbf16> to vector<49x10xbf16>
    %cst_279 = arith.constant dense<0.000000e+00> : vector<1x10xf32>
    %333 = tpu.matmul %330, %332, %cst_279 {dimension_numbers = #tpu.dot_dimension_numbers<[1], [0], [0], [1], [0, 0, 1, 1], [], []>} : vector<1x49xbf16>, vector<49x10xbf16>, vector<1x10xf32> -> vector<1x10xf32>
    %334 = arith.addf %328, %333 : vector<1x10xf32>
    %335 = vector.extract_strided_slice %267 {offsets = [11, 0], sizes = [1, 49], strides = [1, 1]} : vector<16x49xf32> to vector<1x49xf32>
    %336 = arith.truncf %335 : vector<1x49xf32> to vector<1x49xbf16>
    %c11 = arith.constant 11 : index
    %c0_280 = arith.constant 0 : index
    %c0_281 = arith.constant 0 : index
    %337 = vector.load %arg12[%c11, %c0_280, %c0_281] : memref<16x49x10xbf16, #tpu.memory_space<vmem>>, vector<1x49x10xbf16>
    %338 = vector.shape_cast %337 : vector<1x49x10xbf16> to vector<49x10xbf16>
    %cst_282 = arith.constant dense<0.000000e+00> : vector<1x10xf32>
    %339 = tpu.matmul %336, %338, %cst_282 {dimension_numbers = #tpu.dot_dimension_numbers<[1], [0], [0], [1], [0, 0, 1, 1], [], []>} : vector<1x49xbf16>, vector<49x10xbf16>, vector<1x10xf32> -> vector<1x10xf32>
    %340 = arith.addf %334, %339 : vector<1x10xf32>
    %341 = vector.extract_strided_slice %267 {offsets = [12, 0], sizes = [1, 49], strides = [1, 1]} : vector<16x49xf32> to vector<1x49xf32>
    %342 = arith.truncf %341 : vector<1x49xf32> to vector<1x49xbf16>
    %c12 = arith.constant 12 : index
    %c0_283 = arith.constant 0 : index
    %c0_284 = arith.constant 0 : index
    %343 = vector.load %arg12[%c12, %c0_283, %c0_284] : memref<16x49x10xbf16, #tpu.memory_space<vmem>>, vector<1x49x10xbf16>
    %344 = vector.shape_cast %343 : vector<1x49x10xbf16> to vector<49x10xbf16>
    %cst_285 = arith.constant dense<0.000000e+00> : vector<1x10xf32>
    %345 = tpu.matmul %342, %344, %cst_285 {dimension_numbers = #tpu.dot_dimension_numbers<[1], [0], [0], [1], [0, 0, 1, 1], [], []>} : vector<1x49xbf16>, vector<49x10xbf16>, vector<1x10xf32> -> vector<1x10xf32>
    %346 = arith.addf %340, %345 : vector<1x10xf32>
    %347 = vector.extract_strided_slice %267 {offsets = [13, 0], sizes = [1, 49], strides = [1, 1]} : vector<16x49xf32> to vector<1x49xf32>
    %348 = arith.truncf %347 : vector<1x49xf32> to vector<1x49xbf16>
    %c13 = arith.constant 13 : index
    %c0_286 = arith.constant 0 : index
    %c0_287 = arith.constant 0 : index
    %349 = vector.load %arg12[%c13, %c0_286, %c0_287] : memref<16x49x10xbf16, #tpu.memory_space<vmem>>, vector<1x49x10xbf16>
    %350 = vector.shape_cast %349 : vector<1x49x10xbf16> to vector<49x10xbf16>
    %cst_288 = arith.constant dense<0.000000e+00> : vector<1x10xf32>
    %351 = tpu.matmul %348, %350, %cst_288 {dimension_numbers = #tpu.dot_dimension_numbers<[1], [0], [0], [1], [0, 0, 1, 1], [], []>} : vector<1x49xbf16>, vector<49x10xbf16>, vector<1x10xf32> -> vector<1x10xf32>
    %352 = arith.addf %346, %351 : vector<1x10xf32>
    %353 = vector.extract_strided_slice %267 {offsets = [14, 0], sizes = [1, 49], strides = [1, 1]} : vector<16x49xf32> to vector<1x49xf32>
    %354 = arith.truncf %353 : vector<1x49xf32> to vector<1x49xbf16>
    %c14_289 = arith.constant 14 : index
    %c0_290 = arith.constant 0 : index
    %c0_291 = arith.constant 0 : index
    %355 = vector.load %arg12[%c14_289, %c0_290, %c0_291] : memref<16x49x10xbf16, #tpu.memory_space<vmem>>, vector<1x49x10xbf16>
    %356 = vector.shape_cast %355 : vector<1x49x10xbf16> to vector<49x10xbf16>
    %cst_292 = arith.constant dense<0.000000e+00> : vector<1x10xf32>
    %357 = tpu.matmul %354, %356, %cst_292 {dimension_numbers = #tpu.dot_dimension_numbers<[1], [0], [0], [1], [0, 0, 1, 1], [], []>} : vector<1x49xbf16>, vector<49x10xbf16>, vector<1x10xf32> -> vector<1x10xf32>
    %358 = arith.addf %352, %357 : vector<1x10xf32>
    %359 = vector.extract_strided_slice %267 {offsets = [15, 0], sizes = [1, 49], strides = [1, 1]} : vector<16x49xf32> to vector<1x49xf32>
    %360 = arith.truncf %359 : vector<1x49xf32> to vector<1x49xbf16>
    %c15_293 = arith.constant 15 : index
    %c0_294 = arith.constant 0 : index
    %c0_295 = arith.constant 0 : index
    %361 = vector.load %arg12[%c15_293, %c0_294, %c0_295] : memref<16x49x10xbf16, #tpu.memory_space<vmem>>, vector<1x49x10xbf16>
    %362 = vector.shape_cast %361 : vector<1x49x10xbf16> to vector<49x10xbf16>
    %cst_296 = arith.constant dense<0.000000e+00> : vector<1x10xf32>
    %363 = tpu.matmul %360, %362, %cst_296 {dimension_numbers = #tpu.dot_dimension_numbers<[1], [0], [0], [1], [0, 0, 1, 1], [], []>} : vector<1x49xbf16>, vector<49x10xbf16>, vector<1x10xf32> -> vector<1x10xf32>
    %364 = arith.addf %358, %363 : vector<1x10xf32>
    %c0_297 = arith.constant 0 : index
    %c0_298 = arith.constant 0 : index
    %c0_299 = arith.constant 0 : index
    %365 = vector.load %arg14[%c0_297, %c0_298, %c0_299] : memref<1x1x10xf32, #tpu.memory_space<vmem>>, vector<1x1x10xf32>
    %366 = vector.shape_cast %365 : vector<1x1x10xf32> to vector<1x10xf32>
    %367 = vector.shape_cast %364 : vector<1x10xf32> to vector<1x1x10xf32>
    tpu.vector_store %arg14[%c0_297, %c0_298, %c0_299], %367 {strides = array<i32>} : memref<1x1x10xf32, #tpu.memory_space<vmem>>, vector<1x1x10xf32>,
    return
  }
  func.func @transform_0(%arg0: i32) -> (i32, i32, i32) {
    %c0_i32 = arith.constant 0 : i32
    %c0_i32_0 = arith.constant 0 : i32
    %c0_i32_1 = arith.constant 0 : i32
    return %arg0, %c0_i32, %c0_i32_0 : i32, i32, i32
  }
  func.func @transform_1(%arg0: i32) -> (i32, i32) {
    %c0_i32 = arith.constant 0 : i32
    %c0_i32_0 = arith.constant 0 : i32
    %c0_i32_1 = arith.constant 0 : i32
    return %c0_i32, %c0_i32_0 : i32, i32
  }
  func.func @transform_2(%arg0: i32) -> (i32, i32) {
    %c0_i32 = arith.constant 0 : i32
    %c0_i32_0 = arith.constant 0 : i32
    %c0_i32_1 = arith.constant 0 : i32
    return %c0_i32, %c0_i32_0 : i32, i32
  }
  func.func @transform_3(%arg0: i32) -> (i32, i32) {
    %c0_i32 = arith.constant 0 : i32
    %c0_i32_0 = arith.constant 0 : i32
    %c0_i32_1 = arith.constant 0 : i32
    return %c0_i32, %c0_i32_0 : i32, i32
  }
  func.func @transform_4(%arg0: i32) -> (i32, i32) {
    %c0_i32 = arith.constant 0 : i32
    %c0_i32_0 = arith.constant 0 : i32
    %c0_i32_1 = arith.constant 0 : i32
    return %c0_i32, %c0_i32_0 : i32, i32
  }
  func.func @transform_5(%arg0: i32) -> (i32, i32) {
    %c0_i32 = arith.constant 0 : i32
    %c0_i32_0 = arith.constant 0 : i32
    %c0_i32_1 = arith.constant 0 : i32
    return %c0_i32, %c0_i32_0 : i32, i32
  }
  func.func @transform_6(%arg0: i32) -> (i32, i32) {
    %c0_i32 = arith.constant 0 : i32
    %c0_i32_0 = arith.constant 0 : i32
    %c0_i32_1 = arith.constant 0 : i32
    return %c0_i32, %c0_i32_0 : i32, i32
  }
  func.func @transform_7(%arg0: i32) -> (i32, i32) {
    %c0_i32 = arith.constant 0 : i32
    %c0_i32_0 = arith.constant 0 : i32
    %c0_i32_1 = arith.constant 0 : i32
    return %c0_i32, %c0_i32_0 : i32, i32
  }
  func.func @transform_8(%arg0: i32) -> (i32, i32) {
    %c0_i32 = arith.constant 0 : i32
    %c0_i32_0 = arith.constant 0 : i32
    %c0_i32_1 = arith.constant 0 : i32
    return %c0_i32, %c0_i32_0 : i32, i32
  }
  func.func @transform_9(%arg0: i32) -> (i32, i32) {
    %c0_i32 = arith.constant 0 : i32
    %c0_i32_0 = arith.constant 0 : i32
    %c0_i32_1 = arith.constant 0 : i32
    return %c0_i32, %c0_i32_0 : i32, i32
  }
  func.func @transform_10(%arg0: i32) -> (i32, i32) {
    %c0_i32 = arith.constant 0 : i32
    %c0_i32_0 = arith.constant 0 : i32
    %c0_i32_1 = arith.constant 0 : i32
    return %c0_i32, %c0_i32_0 : i32, i32
  }
  func.func @transform_11(%arg0: i32) -> (i32, i32, i32) {
    %c0_i32 = arith.constant 0 : i32
    %c0_i32_0 = arith.constant 0 : i32
    %c0_i32_1 = arith.constant 0 : i32
    %c0_i32_2 = arith.constant 0 : i32
    return %c0_i32, %c0_i32_0, %c0_i32_1 : i32, i32, i32
  }
  func.func @transform_12(%arg0: i32) -> (i32, i32) {
    %c0_i32 = arith.constant 0 : i32
    %c0_i32_0 = arith.constant 0 : i32
    %c0_i32_1 = arith.constant 0 : i32
    return %c0_i32, %c0_i32_0 : i32, i32
  }
  func.func @transform_13(%arg0: i32) -> (i32, i32, i32) {
    %c0_i32 = arith.constant 0 : i32
    %c0_i32_0 = arith.constant 0 : i32
    %c0_i32_1 = arith.constant 0 : i32
    return %arg0, %c0_i32, %c0_i32_0 : i32, i32, i32
  }
}

</mosaic_0001>

<llo_original>
// kernel: net_forward.1
$region0: #{net_forward.1}
  #allocation0 [shape = 'u32[]', space=smem, size = 0x4, offset = 0x4, fixed_abs, tag = 'smem constant byte address 0x4 - core index']
  #allocation1 [shape = 'u32[144,128]{1,0:T(1,128)}', space=vmem, size = 0x12000, scoped, tag = 'internal scratch']
  #allocation2 [shape = 'f32[1,842]{1,0:T(1,128)}', space=vmem, size = 0xe00, scoped, tag = 'scratch operand']
  #allocation3 [shape = 'f32[1,226]{1,0:T(1,128)}', space=vmem, size = 0x400, scoped, tag = 'scratch operand']
  #allocation4 [shape = 'f32[16,784]{1,0:T(8,128)}', space=vmem, size = 0xe000, scoped, tag = 'scratch operand']
  #allocation5 [shape = 'f32[16,196]{1,0:T(8,128)}', space=vmem, size = 0x4000, scoped, tag = 'scratch operand']
  %s0 = inlined_call_operand.vmem [shape: f32[2,1,784], index: 0, kind: input, shape index: {}]
  %s1 = inlined_call_operand.vmem [shape: bf16[32,16], index: 1, kind: input, shape index: {}]
  %s2 = inlined_call_operand.vmem [shape: f32[32,1], index: 2, kind: input, shape index: {}]
  %s3 = inlined_call_operand.vmem [shape: bf16[64,16], index: 3, kind: input, shape index: {}]
  %s4 = inlined_call_operand.vmem [shape: f32[64,1], index: 4, kind: input, shape index: {}]
  %s5 = inlined_call_operand.vmem [shape: bf16[64,16], index: 5, kind: input, shape index: {}]
  %s6 = inlined_call_operand.vmem [shape: f32[64,1], index: 6, kind: input, shape index: {}]
  %s7 = inlined_call_operand.vmem [shape: bf16[16,16], index: 7, kind: input, shape index: {}]
  %s8 = inlined_call_operand.vmem [shape: f32[16,1], index: 8, kind: input, shape index: {}]
  %s9 = inlined_call_operand.vmem [shape: bf16[755,196], index: 9, kind: input, shape index: {}]
  %s10 = inlined_call_operand.vmem [shape: bf16[181,49], index: 10, kind: input, shape index: {}]
  %s11 = inlined_call_operand.vmem [shape: bf16[16,49,10], index: 11, kind: input, shape index: {}]
  %s12 = inlined_call_operand.vmem [shape: f32[1,10], index: 12, kind: input, shape index: {}]
  %s13 = inlined_call_operand.hbm [shape: f32[2,1,10], index: 13, kind: output, shape index: {}]
  %s14 = sld [smem:[#allocation0]]
  $region85: #{net_forward.1} parent=0
    _
  %s16 = ssub.s32 1, %s14
  %s17 = scalar_select 0, %s16, %s14
  $region1: #{net_forward.1} parent=0
    #allocation6 [shape = 'u8[1024]{0}', space=vmem, size = 0x400, scoped, tag = 'output window, operand 0']
    #allocation7 [shape = 's32[2]{0}', space=sflag, size = 0x8, scoped, tag = 'scoped memory for net_forward.1']
    %18 = vsyncpa [#allocation7], 0
    %s19 = scalar_lea.sflag [#allocation7], 1
    %20 = vsyncpa %s19, 0
    loop: start=0, step=1, limit=4
    $region2: #{net_forward.1} parent=1 // loop_pre_header
      _
    $region3: #{net_forward.1} parent=1 // loop_header
      %s22 = sphi 0, %s26
      %p23 = scmp.ge.s32.totalorder %s22, 4
      %s32 = sphi 0, %s34
      %s35 = sphi 0, %s32
      %s36 = sphi 0, %s35
      %s52 = sphi 0, %s36
      %s56 = sphi 0, %s56
      %s58 = sphi 0, %s56
      %s59 = sphi 0, %s58
      %s73 = sphi 0, %s59
      %s77 = sphi 0, %s77
      %s79 = sphi 0, %s77
      %s80 = sphi 0, %s79
      %s94 = sphi 0, %s80
      %s98 = sphi 0, %s98
      %s100 = sphi 0, %s98
      %s101 = sphi 0, %s100
      %s115 = sphi 0, %s101
      %s119 = sphi 0, %s119
      %s121 = sphi 0, %s119
      %s122 = sphi 0, %s121
      %s136 = sphi 0, %s122
      %s140 = sphi 0, %s140
      %s142 = sphi 0, %s140
      %s143 = sphi 0, %s142
      %s157 = sphi 0, %s143
      %s161 = sphi 0, %s161
      %s163 = sphi 0, %s161
      %s164 = sphi 0, %s163
      %s178 = sphi 0, %s164
      %s182 = sphi 0, %s182
      %s184 = sphi 0, %s182
      %s185 = sphi 0, %s184
      %s199 = sphi 0, %s185
      %s203 = sphi 0, %s203
      %s205 = sphi 0, %s203
      %s206 = sphi 0, %s205
      %s220 = sphi 0, %s206
      %s224 = sphi 0, %s224
      %s226 = sphi 0, %s224
      %s227 = sphi 0, %s226
      %s241 = sphi 0, %s227
      %s245 = sphi 0, %s245
      %s247 = sphi 0, %s245
      %s248 = sphi 0, %s247
      %s262 = sphi 0, %s248
      %s266 = sphi 0, %s266
      %s268 = sphi 0, %s266
      %s269 = sphi 0, %s268
      %s283 = sphi 0, %s269
      %s287 = sphi 0, %s287
      %s289 = sphi 0, %s287
      %s290 = sphi 0, %s289
      %s304 = sphi 0, %s290
      %s310 = sphi 0, %s312
      %s313 = sphi 0, %s310
      %s314 = sphi 0, %s313
      %s330 = sphi 0, %s314
    $region4: #{net_forward.1} parent=1 // loop_header_branch
      %25 = sbr.rel (%p23) target = $region8
    $region5: #{net_forward.1} parent=1 // loop_body
      %s27 = ssub.s32 %s22, 1
      %s28 = ssub.s32 %s22, 2
      %s29 = sadd.s32 %s22, 1
      %s30 = ssub.s32 %s22, %s29
      %p31 = scmp.eq.s32.totalorder %s30, 0
      %s33 = sadd.s32 %s32, 1
      %s34 = scalar_select %p31, %s32, %s33
      %p37 = pneg %p31
      %p38 = scmp.eq.s32.totalorder %s22, 1
      %p39 = por %p37, %p38
      %p40 = scmp.ne.s32.totalorder %s32, %s35
      %p41 = scmp.eq.s32.totalorder %s22, 0
      %p42 = por %p40, %p41
      %p43 = scmp.ne.s32.totalorder %s32, %s35
      %p44 = scmp.eq.s32.totalorder %s27, 1
      %p45 = por %p43, %p44
      %p46 = scmp.ne.s32.totalorder %s35, %s36
      %p47 = scmp.eq.s32.totalorder %s27, 0
      %p48 = por %p46, %p47
      %p49 = scmp.ne.s32.totalorder %s35, %s36
      %p50 = scmp.eq.s32.totalorder %s28, 1
      %p51 = por %p49, %p50
      %p53 = scmp.ne.s32.totalorder %s36, %s52
      %p54 = scmp.eq.s32.totalorder %s28, 0
      %p55 = por %p53, %p54
      %s57 = sadd.s32 %s56, 1
      %p60 = scmp.eq.s32.totalorder %s22, 1
      %p61 = scmp.ne.s32.totalorder %s56, %s58
      %p62 = scmp.eq.s32.totalorder %s22, 0
      %p63 = por %p61, %p62
      %p64 = scmp.ne.s32.totalorder %s56, %s58
      %p65 = scmp.eq.s32.totalorder %s27, 1
      %p66 = por %p64, %p65
      %p67 = scmp.ne.s32.totalorder %s58, %s59
      %p68 = scmp.eq.s32.totalorder %s27, 0
      %p69 = por %p67, %p68
      %p70 = scmp.ne.s32.totalorder %s58, %s59
      %p71 = scmp.eq.s32.totalorder %s28, 1
      %p72 = por %p70, %p71
      %p74 = scmp.ne.s32.totalorder %s59, %s73
      %p75 = scmp.eq.s32.totalorder %s28, 0
      %p76 = por %p74, %p75
      %s78 = sadd.s32 %s77, 1
      %p81 = scmp.eq.s32.totalorder %s22, 1
      %p82 = scmp.ne.s32.totalorder %s77, %s79
      %p83 = scmp.eq.s32.totalorder %s22, 0
      %p84 = por %p82, %p83
      %p85 = scmp.ne.s32.totalorder %s77, %s79
      %p86 = scmp.eq.s32.totalorder %s27, 1
      %p87 = por %p85, %p86
      %p88 = scmp.ne.s32.totalorder %s79, %s80
      %p89 = scmp.eq.s32.totalorder %s27, 0
      %p90 = por %p88, %p89
      %p91 = scmp.ne.s32.totalorder %s79, %s80
      %p92 = scmp.eq.s32.totalorder %s28, 1
      %p93 = por %p91, %p92
      %p95 = scmp.ne.s32.totalorder %s80, %s94
      %p96 = scmp.eq.s32.totalorder %s28, 0
      %p97 = por %p95, %p96
      %s99 = sadd.s32 %s98, 1
      %p102 = scmp.eq.s32.totalorder %s22, 1
      %p103 = scmp.ne.s32.totalorder %s98, %s100
      %p104 = scmp.eq.s32.totalorder %s22, 0
      %p105 = por %p103, %p104
      %p106 = scmp.ne.s32.totalorder %s98, %s100
      %p107 = scmp.eq.s32.totalorder %s27, 1
      %p108 = por %p106, %p107
      %p109 = scmp.ne.s32.totalorder %s100, %s101
      %p110 = scmp.eq.s32.totalorder %s27, 0
      %p111 = por %p109, %p110
      %p112 = scmp.ne.s32.totalorder %s100, %s101
      %p113 = scmp.eq.s32.totalorder %s28, 1
      %p114 = por %p112, %p113
      %p116 = scmp.ne.s32.totalorder %s101, %s115
      %p117 = scmp.eq.s32.totalorder %s28, 0
      %p118 = por %p116, %p117
      %s120 = sadd.s32 %s119, 1
      %p123 = scmp.eq.s32.totalorder %s22, 1
      %p124 = scmp.ne.s32.totalorder %s119, %s121
      %p125 = scmp.eq.s32.totalorder %s22, 0
      %p126 = por %p124, %p125
      %p127 = scmp.ne.s32.totalorder %s119, %s121
      %p128 = scmp.eq.s32.totalorder %s27, 1
      %p129 = por %p127, %p128
      %p130 = scmp.ne.s32.totalorder %s121, %s122
      %p131 = scmp.eq.s32.totalorder %s27, 0
      %p132 = por %p130, %p131
      %p133 = scmp.ne.s32.totalorder %s121, %s122
      %p134 = scmp.eq.s32.totalorder %s28, 1
      %p135 = por %p133, %p134
      %p137 = scmp.ne.s32.totalorder %s122, %s136
      %p138 = scmp.eq.s32.totalorder %s28, 0
      %p139 = por %p137, %p138
      %s141 = sadd.s32 %s140, 1
      %p144 = scmp.eq.s32.totalorder %s22, 1
      %p145 = scmp.ne.s32.totalorder %s140, %s142
      %p146 = scmp.eq.s32.totalorder %s22, 0
      %p147 = por %p145, %p146
      %p148 = scmp.ne.s32.totalorder %s140, %s142
      %p149 = scmp.eq.s32.totalorder %s27, 1
      %p150 = por %p148, %p149
      %p151 = scmp.ne.s32.totalorder %s142, %s143
      %p152 = scmp.eq.s32.totalorder %s27, 0
      %p153 = por %p151, %p152
      %p154 = scmp.ne.s32.totalorder %s142, %s143
      %p155 = scmp.eq.s32.totalorder %s28, 1
      %p156 = por %p154, %p155
      %p158 = scmp.ne.s32.totalorder %s143, %s157
      %p159 = scmp.eq.s32.totalorder %s28, 0
      %p160 = por %p158, %p159
      %s162 = sadd.s32 %s161, 1
      %p165 = scmp.eq.s32.totalorder %s22, 1
      %p166 = scmp.ne.s32.totalorder %s161, %s163
      %p167 = scmp.eq.s32.totalorder %s22, 0
      %p168 = por %p166, %p167
      %p169 = scmp.ne.s32.totalorder %s161, %s163
      %p170 = scmp.eq.s32.totalorder %s27, 1
      %p171 = por %p169, %p170
      %p172 = scmp.ne.s32.totalorder %s163, %s164
      %p173 = scmp.eq.s32.totalorder %s27, 0
      %p174 = por %p172, %p173
      %p175 = scmp.ne.s32.totalorder %s163, %s164
      %p176 = scmp.eq.s32.totalorder %s28, 1
      %p177 = por %p175, %p176
      %p179 = scmp.ne.s32.totalorder %s164, %s178
      %p180 = scmp.eq.s32.totalorder %s28, 0
      %p181 = por %p179, %p180
      %s183 = sadd.s32 %s182, 1
      %p186 = scmp.eq.s32.totalorder %s22, 1
      %p187 = scmp.ne.s32.totalorder %s182, %s184
      %p188 = scmp.eq.s32.totalorder %s22, 0
      %p189 = por %p187, %p188
      %p190 = scmp.ne.s32.totalorder %s182, %s184
      %p191 = scmp.eq.s32.totalorder %s27, 1
      %p192 = por %p190, %p191
      %p193 = scmp.ne.s32.totalorder %s184, %s185
      %p194 = scmp.eq.s32.totalorder %s27, 0
      %p195 = por %p193, %p194
      %p196 = scmp.ne.s32.totalorder %s184, %s185
      %p197 = scmp.eq.s32.totalorder %s28, 1
      %p198 = por %p196, %p197
      %p200 = scmp.ne.s32.totalorder %s185, %s199
      %p201 = scmp.eq.s32.totalorder %s28, 0
      %p202 = por %p200, %p201
      %s204 = sadd.s32 %s203, 1
      %p207 = scmp.eq.s32.totalorder %s22, 1
      %p208 = scmp.ne.s32.totalorder %s203, %s205
      %p209 = scmp.eq.s32.totalorder %s22, 0
      %p210 = por %p208, %p209
      %p211 = scmp.ne.s32.totalorder %s203, %s205
      %p212 = scmp.eq.s32.totalorder %s27, 1
      %p213 = por %p211, %p212
      %p214 = scmp.ne.s32.totalorder %s205, %s206
      %p215 = scmp.eq.s32.totalorder %s27, 0
      %p216 = por %p214, %p215
      %p217 = scmp.ne.s32.totalorder %s205, %s206
      %p218 = scmp.eq.s32.totalorder %s28, 1
      %p219 = por %p217, %p218
      %p221 = scmp.ne.s32.totalorder %s206, %s220
      %p222 = scmp.eq.s32.totalorder %s28, 0
      %p223 = por %p221, %p222
      %s225 = sadd.s32 %s224, 1
      %p228 = scmp.eq.s32.totalorder %s22, 1
      %p229 = scmp.ne.s32.totalorder %s224, %s226
      %p230 = scmp.eq.s32.totalorder %s22, 0
      %p231 = por %p229, %p230
      %p232 = scmp.ne.s32.totalorder %s224, %s226
      %p233 = scmp.eq.s32.totalorder %s27, 1
      %p234 = por %p232, %p233
      %p235 = scmp.ne.s32.totalorder %s226, %s227
      %p236 = scmp.eq.s32.totalorder %s27, 0
      %p237 = por %p235, %p236
      %p238 = scmp.ne.s32.totalorder %s226, %s227
      %p239 = scmp.eq.s32.totalorder %s28, 1
      %p240 = por %p238, %p239
      %p242 = scmp.ne.s32.totalorder %s227, %s241
      %p243 = scmp.eq.s32.totalorder %s28, 0
      %p244 = por %p242, %p243
      %s246 = sadd.s32 %s245, 1
      %p249 = scmp.eq.s32.totalorder %s22, 1
      %p250 = scmp.ne.s32.totalorder %s245, %s247
      %p251 = scmp.eq.s32.totalorder %s22, 0
      %p252 = por %p250, %p251
      %p253 = scmp.ne.s32.totalorder %s245, %s247
      %p254 = scmp.eq.s32.totalorder %s27, 1
      %p255 = por %p253, %p254
      %p256 = scmp.ne.s32.totalorder %s247, %s248
      %p257 = scmp.eq.s32.totalorder %s27, 0
      %p258 = por %p256, %p257
      %p259 = scmp.ne.s32.totalorder %s247, %s248
      %p260 = scmp.eq.s32.totalorder %s28, 1
      %p261 = por %p259, %p260
      %p263 = scmp.ne.s32.totalorder %s248, %s262
      %p264 = scmp.eq.s32.totalorder %s28, 0
      %p265 = por %p263, %p264
      %s267 = sadd.s32 %s266, 1
      %p270 = scmp.eq.s32.totalorder %s22, 1
      %p271 = scmp.ne.s32.totalorder %s266, %s268
      %p272 = scmp.eq.s32.totalorder %s22, 0
      %p273 = por %p271, %p272
      %p274 = scmp.ne.s32.totalorder %s266, %s268
      %p275 = scmp.eq.s32.totalorder %s27, 1
      %p276 = por %p274, %p275
      %p277 = scmp.ne.s32.totalorder %s268, %s269
      %p278 = scmp.eq.s32.totalorder %s27, 0
      %p279 = por %p277, %p278
      %p280 = scmp.ne.s32.totalorder %s268, %s269
      %p281 = scmp.eq.s32.totalorder %s28, 1
      %p282 = por %p280, %p281
      %p284 = scmp.ne.s32.totalorder %s269, %s283
      %p285 = scmp.eq.s32.totalorder %s28, 0
      %p286 = por %p284, %p285
      %s288 = sadd.s32 %s287, 1
      %p291 = scmp.eq.s32.totalorder %s22, 1
      %p292 = scmp.ne.s32.totalorder %s287, %s289
      %p293 = scmp.eq.s32.totalorder %s22, 0
      %p294 = por %p292, %p293
      %p295 = scmp.ne.s32.totalorder %s287, %s289
      %p296 = scmp.eq.s32.totalorder %s27, 1
      %p297 = por %p295, %p296
      %p298 = scmp.ne.s32.totalorder %s289, %s290
      %p299 = scmp.eq.s32.totalorder %s27, 0
      %p300 = por %p298, %p299
      %p301 = scmp.ne.s32.totalorder %s289, %s290
      %p302 = scmp.eq.s32.totalorder %s28, 1
      %p303 = por %p301, %p302
      %p305 = scmp.ne.s32.totalorder %s290, %s304
      %p306 = scmp.eq.s32.totalorder %s28, 0
      %p307 = por %p305, %p306
      %s308 = ssub.s32 %s22, %s29
      %p309 = scmp.eq.s32.totalorder %s308, 0
      %s311 = sadd.s32 %s310, 1
      %s312 = scalar_select %p309, %s310, %s311
      %p315 = pneg %p309
      %p316 = scmp.eq.s32.totalorder %s22, 1
      %p317 = por %p315, %p316
      %p318 = scmp.ne.s32.totalorder %s310, %s313
      %p319 = scmp.eq.s32.totalorder %s22, 0
      %p320 = por %p318, %p319
      %p321 = scmp.ne.s32.totalorder %s310, %s313
      %p322 = scmp.eq.s32.totalorder %s27, 1
      %p323 = por %p321, %p322
      %p324 = scmp.ne.s32.totalorder %s313, %s314
      %p325 = scmp.eq.s32.totalorder %s27, 0
      %p326 = por %p324, %p325
      %p327 = scmp.ne.s32.totalorder %s313, %s314
      %p328 = scmp.eq.s32.totalorder %s28, 1
      %p329 = por %p327, %p328
      %p331 = scmp.ne.s32.totalorder %s314, %s330
      %p332 = scmp.eq.s32.totalorder %s28, 0
      %p333 = por %p331, %p332
      %p334 = scmp.le.s32.totalorder 1, %s22
      %p335 = scmp.lt.s32.totalorder %s22, 3
      %p336 = pnand %p334, %p335
      %p337 = pneg %p336
      // Predicated region
      $region9: #{net_forward.1} parent=5 // pred_check
        _
      $region10: #{net_forward.1} parent=5 // pred_check_branch
        %339 = sbr.rel (%p336) target = $region12
      $region11: #{net_forward.1} parent=5 // pred_region
        %s340 = ssub.s32 %s22, 1
        // Predicated region
        $region13: #{net_forward.1} parent=11 // pred_check
          %p341 = pneg %p69
        $region14: #{net_forward.1} parent=11 // pred_check_branch
          %343 = sbr.rel (%p341) target = $region16
        $region15: #{net_forward.1} parent=11 // pred_region
          _
        $region16: #{net_forward.1} parent=11 // pred_fallthru
          _
        // Predicated region
        $region17: #{net_forward.1} parent=11 // pred_check
          %p344 = pneg %p90
        $region18: #{net_forward.1} parent=11 // pred_check_branch
          %346 = sbr.rel (%p344) target = $region20
        $region19: #{net_forward.1} parent=11 // pred_region
          _
        $region20: #{net_forward.1} parent=11 // pred_fallthru
          _
        // Predicated region
        $region21: #{net_forward.1} parent=11 // pred_check
          %p347 = pneg %p111
        $region22: #{net_forward.1} parent=11 // pred_check_branch
          %349 = sbr.rel (%p347) target = $region24
        $region23: #{net_forward.1} parent=11 // pred_region
          _
        $region24: #{net_forward.1} parent=11 // pred_fallthru
          _
        // Predicated region
        $region25: #{net_forward.1} parent=11 // pred_check
          %p350 = pneg %p132
        $region26: #{net_forward.1} parent=11 // pred_check_branch
          %352 = sbr.rel (%p350) target = $region28
        $region27: #{net_forward.1} parent=11 // pred_region
          _
        $region28: #{net_forward.1} parent=11 // pred_fallthru
          _
        // Predicated region
        $region29: #{net_forward.1} parent=11 // pred_check
          %p353 = pneg %p153
        $region30: #{net_forward.1} parent=11 // pred_check_branch
          %355 = sbr.rel (%p353) target = $region32
        $region31: #{net_forward.1} parent=11 // pred_region
          _
        $region32: #{net_forward.1} parent=11 // pred_fallthru
          _
        // Predicated region
        $region33: #{net_forward.1} parent=11 // pred_check
          %p356 = pneg %p174
        $region34: #{net_forward.1} parent=11 // pred_check_branch
          %358 = sbr.rel (%p356) target = $region36
        $region35: #{net_forward.1} parent=11 // pred_region
          _
        $region36: #{net_forward.1} parent=11 // pred_fallthru
          _
        // Predicated region
        $region37: #{net_forward.1} parent=11 // pred_check
          %p359 = pneg %p195
        $region38: #{net_forward.1} parent=11 // pred_check_branch
          %361 = sbr.rel (%p359) target = $region40
        $region39: #{net_forward.1} parent=11 // pred_region
          _
        $region40: #{net_forward.1} parent=11 // pred_fallthru
          _
        // Predicated region
        $region41: #{net_forward.1} parent=11 // pred_check
          %p362 = pneg %p216
        $region42: #{net_forward.1} parent=11 // pred_check_branch
          %364 = sbr.rel (%p362) target = $region44
        $region43: #{net_forward.1} parent=11 // pred_region
          _
        $region44: #{net_forward.1} parent=11 // pred_fallthru
          _
        // Predicated region
        $region45: #{net_forward.1} parent=11 // pred_check
          %p365 = pneg %p237
        $region46: #{net_forward.1} parent=11 // pred_check_branch
          %367 = sbr.rel (%p365) target = $region48
        $region47: #{net_forward.1} parent=11 // pred_region
          _
        $region48: #{net_forward.1} parent=11 // pred_fallthru
          _
        // Predicated region
        $region49: #{net_forward.1} parent=11 // pred_check
          %p368 = pneg %p258
        $region50: #{net_forward.1} parent=11 // pred_check_branch
          %370 = sbr.rel (%p368) target = $region52
        $region51: #{net_forward.1} parent=11 // pred_region
          _
        $region52: #{net_forward.1} parent=11 // pred_fallthru
          _
        // Predicated region
        $region53: #{net_forward.1} parent=11 // pred_check
          %p371 = pneg %p279
        $region54: #{net_forward.1} parent=11 // pred_check_branch
          %373 = sbr.rel (%p371) target = $region56
        $region55: #{net_forward.1} parent=11 // pred_region
          _
        $region56: #{net_forward.1} parent=11 // pred_fallthru
          _
        // Predicated region
        $region57: #{net_forward.1} parent=11 // pred_check
          %p374 = pneg %p300
        $region58: #{net_forward.1} parent=11 // pred_check_branch
          %376 = sbr.rel (%p374) target = $region60
        $region59: #{net_forward.1} parent=11 // pred_region
          _
        $region60: #{net_forward.1} parent=11 // pred_fallthru
          _
      $region12: #{net_forward.1} parent=5 // pred_fallthru
        _
      %p377 = scmp.lt.s32.totalorder %s22, 2
      // Predicated region
      $region61: #{net_forward.1} parent=5 // pred_check
        %p378 = pneg %p377
      $region62: #{net_forward.1} parent=5 // pred_check_branch
        %380 = sbr.rel (%p378) target = $region64
      $region63: #{net_forward.1} parent=5 // pred_region
        // Predicated region
        $region65: #{net_forward.1} parent=63 // pred_check
          %p381 = pneg %p42
        $region66: #{net_forward.1} parent=63 // pred_check_branch
          %383 = sbr.rel (%p381) target = $region68
        $region67: #{net_forward.1} parent=63 // pred_region
          %p384 = scmp.lt.s32.totalorder %s22, 1
          %s385 = scalar_select %p384, %s22, 1
          %s386 = smul.addr %s385, 7
          %s387 = scalar_lea.vmem %s0, %s386
        $region68: #{net_forward.1} parent=63 // pred_fallthru
          _
      $region64: #{net_forward.1} parent=5 // pred_fallthru
        _
      %p388 = scmp.le.s32.totalorder 1, %s22
      %p389 = scmp.lt.s32.totalorder %s22, 3
      %p390 = pnand %p388, %p389
      %p391 = pneg %p390
      // Predicated region
      $region69: #{net_forward.1} parent=5 // pred_check
        _
      $region70: #{net_forward.1} parent=5 // pred_check_branch
        %393 = sbr.rel (%p390) target = $region72
      $region71: #{net_forward.1} parent=5 // pred_region
        %s394 = ssub.s32 %s22, 1
        %p395 = scmp.lt.s32.totalorder %s27, 1
        %s396 = scalar_select %p395, %s27, 1
        %s397 = smul.addr %s396, 7
        %s398 = scalar_lea.vmem %s0, %s397
        %p399 = pneg %p48
        %p400 = pneg %p45
        %p401 = pneg %p69
        %p402 = pneg %p66
        %p403 = pneg %p90
        %p404 = pneg %p87
        %p405 = pneg %p111
        %p406 = pneg %p108
        %p407 = pneg %p132
        %p408 = pneg %p129
        %p409 = pneg %p153
        %p410 = pneg %p150
        %p411 = pneg %p174
        %p412 = pneg %p171
        %p413 = pneg %p195
        %p414 = pneg %p192
        %p415 = pneg %p216
        %p416 = pneg %p213
        %p417 = pneg %p237
        %p418 = pneg %p234
        %p419 = pneg %p258
        %p420 = pneg %p255
        %p421 = pneg %p279
        %p422 = pneg %p276
        %p423 = pneg %p300
        %p424 = pneg %p297
        %p425 = pneg %p326
        %p426 = pneg %p323
        %s427 = sand.u32 %s313, 1
        %s428 = scalar_lea.sflag [#allocation7], %s427
        %s429 = sand.u32 %s313, 1
        %s430 = scalar_lea.vmem [#allocation6], %s429
        %p431 = scmp.lt.s32.totalorder %s27, 1
        %s432 = scalar_select %p431, %s27, 1
        %s433 = smul.addr %s432, 7
        %s434 = scalar_lea.vmem %s0, %s433
        %v436 = vld [vmem:[%s434] sm:$0x7f]
        %v437 = vadd.f32 %v436, 0.0
        %v438 = vlaneseq
        %vm439 = vcmp.ge.s32.totalorder %v438, 0
        %vm440 = vcmp.lt.s32.totalorder %v438, 29
        %vm441 = vmand %vm439, %vm440
        %442 = vst.msk [vmem:[#allocation2] sm:$0x1] %vm441, 0.0
        %vm443 = vcmp.ge.s32.totalorder %v438, 45
        %vm444 = vcmp.lt.s32.totalorder %v438, 74
        %vm445 = vmand %vm443, %vm444
        %446 = vst.msk [vmem:[#allocation2 + $0x6] sm:$0x1] %vm445, 0.0
        %447 = vst [vmem:[#allocation4 + $0x38] sm:$0xfe] 0.0
        %448 = vst [vmem:[#allocation4 + $0x40] sm:$0xfe] 0.0
        %449 = vst [vmem:[#allocation4 + $0x48] sm:$0xfe] 0.0
        %450 = vst [vmem:[#allocation4 + $0x50] sm:$0xfe] 0.0
        %451 = vst [vmem:[#allocation4 + $0x58] sm:$0xfe] 0.0
        %452 = vst [vmem:[#allocation4 + $0x60] sm:$0xfe] 0.0
        %vm453 = vcmask 130049
        %454 = vst.msk [vmem:[#allocation4 + $0x68] sm:$0xfe] %vm453, 0.0
        %456 = vrot.lane.b32.xlu0 %v437, 29
        %v457 = vpop.permute.xlu0 %456
        %v458 = vrot.slane %v457, 7
        %vm459 = vcmask 236544
        %v460 = vsel %vm459, %v458, %v457
        %vm462 = vcmp.ge.s32.totalorder %v438, 29
        %vm463 = vcmp.lt.s32.totalorder %v438, 813
        %vm464 = vmand %vm462, %vm463
        %465 = vst.msk [vmem:[#allocation2] sm:$0x7f] %vm464, %v460
        %v466 = vlaneseq
        %v467 = vand.u32 %v466, 127
        %v468 = vadd.s32 %v467, 128
        %v469 = vadd.s32 %v467, 256
        %v470 = vadd.s32 %v467, 384
        %v471 = vadd.s32 %v467, 512
        %v472 = vadd.s32 %v467, 640
        %v473 = vadd.s32 %v467, 768
        %v474 = vcvt.s32.f32 %v467
        %v475 = vcvt.s32.f32 %v468
        %v476 = vcvt.s32.f32 %v469
        %v477 = vcvt.s32.f32 %v470
        %v478 = vcvt.s32.f32 %v471
        %v479 = vcvt.s32.f32 %v472
        %v480 = vcvt.s32.f32 %v473
        %v481 = vadd.f32 %v474, 0.5
        %v482 = vadd.f32 %v475, 0.5
        %v483 = vadd.f32 %v476, 0.5
        %v484 = vadd.f32 %v477, 0.5
        %v485 = vadd.f32 %v478, 0.5
        %v486 = vadd.f32 %v479, 0.5
        %v487 = vadd.f32 %v480, 0.5
        %v488 = vmul.f32 %v481, 0.035714287
        %v489 = vmul.f32 %v482, 0.035714287
        %v490 = vmul.f32 %v483, 0.035714287
        %v491 = vmul.f32 %v484, 0.035714287
        %v492 = vmul.f32 %v485, 0.035714287
        %v493 = vmul.f32 %v486, 0.035714287
        %v494 = vmul.f32 %v487, 0.035714287
        %v495 = vfloor.f32 %v488
        %v496 = vfloor.f32 %v489
        %v497 = vfloor.f32 %v490
        %v498 = vfloor.f32 %v491
        %v499 = vfloor.f32 %v492
        %v500 = vfloor.f32 %v493
        %v501 = vfloor.f32 %v494
        %v502 = vmul.f32 %v495, 28.0
        %v503 = vmul.f32 %v496, 28.0
        %v504 = vmul.f32 %v497, 28.0
        %v505 = vmul.f32 %v498, 28.0
        %v506 = vmul.f32 %v499, 28.0
        %v507 = vmul.f32 %v500, 28.0
        %v508 = vmul.f32 %v501, 28.0
        %v509 = vsub.f32 %v474, %v502
        %v510 = vsub.f32 %v475, %v503
        %v511 = vsub.f32 %v476, %v504
        %v512 = vsub.f32 %v477, %v505
        %v513 = vsub.f32 %v478, %v506
        %v514 = vsub.f32 %v479, %v507
        %v515 = vsub.f32 %v480, %v508
        %vm516 = vcmp.gt.f32.partialorder %v509, 0.5
        %vm517 = vcmp.gt.f32.partialorder %v510, 0.5
        %vm518 = vcmp.gt.f32.partialorder %v511, 0.5
        %vm519 = vcmp.gt.f32.partialorder %v512, 0.5
        %vm520 = vcmp.gt.f32.partialorder %v513, 0.5
        %vm521 = vcmp.gt.f32.partialorder %v514, 0.5
        %vm522 = vcmp.gt.f32.partialorder %v515, 0.5
        %v523 = vsel %vm516, 1, 0
        %v524 = vsel %vm517, 1, 0
        %v525 = vsel %vm518, 1, 0
        %v526 = vsel %vm519, 1, 0
        %v527 = vsel %vm520, 1, 0
        %v528 = vsel %vm521, 1, 0
        %v529 = vsel %vm522, 1, 0
        %v530 = vcvt.s32.f32 %v523
        %v531 = vcvt.s32.f32 %v524
        %v532 = vcvt.s32.f32 %v525
        %v533 = vcvt.s32.f32 %v526
        %v534 = vcvt.s32.f32 %v527
        %v535 = vcvt.s32.f32 %v528
        %v536 = vcvt.s32.f32 %v529
        %vm537 = vcmp.lt.f32.partialorder %v509, 26.5
        %vm538 = vcmp.lt.f32.partialorder %v510, 26.5
        %vm539 = vcmp.lt.f32.partialorder %v511, 26.5
        %vm540 = vcmp.lt.f32.partialorder %v512, 26.5
        %vm541 = vcmp.lt.f32.partialorder %v513, 26.5
        %vm542 = vcmp.lt.f32.partialorder %v514, 26.5
        %vm543 = vcmp.lt.f32.partialorder %v515, 26.5
        %v544 = vsel %vm537, 1, 0
        %v545 = vsel %vm538, 1, 0
        %v546 = vsel %vm539, 1, 0
        %v547 = vsel %vm540, 1, 0
        %v548 = vsel %vm541, 1, 0
        %v549 = vsel %vm542, 1, 0
        %v550 = vsel %vm543, 1, 0
        %v551 = vcvt.s32.f32 %v544
        %v552 = vcvt.s32.f32 %v545
        %v553 = vcvt.s32.f32 %v546
        %v554 = vcvt.s32.f32 %v547
        %v555 = vcvt.s32.f32 %v548
        %v556 = vcvt.s32.f32 %v549
        %v557 = vcvt.s32.f32 %v550
        %v558 = vld [vmem:[#allocation2] sm:$0x7f]
        %v566 = vcombine.low %v530, %v531
        %v567 = vcombine.low %v532, %v533
        %v568 = vcombine.low %v534, %v535
        %v570 = vunpack.c.l.s4 1966171168
        %v571 = vunpack.c.0.s8 %v570
        %v572 = vlaneseq
        %v573 = vshrl.u32 %v572, 7
        %v574 = vsub.s32 %v571, %v573
        %v575 = vrot.slane %v566, %v574
        %v577 = vunpack.c.l.s4 1966171168
        %v578 = vunpack.c.0.s8 %v577
        %v579 = vlaneseq
        %v580 = vshrl.u32 %v579, 7
        %v581 = vsub.s32 %v578, %v580
        %v582 = vrot.slane %v567, %v581
        %v584 = vunpack.c.l.s4 1966171168
        %v585 = vunpack.c.0.s8 %v584
        %v586 = vlaneseq
        %v587 = vshrl.u32 %v586, 7
        %v588 = vsub.s32 %v585, %v587
        %v589 = vrot.slane %v568, %v588
        %v591 = vunpack.c.l.s4 1966171168
        %v592 = vunpack.c.0.s8 %v591
        %v593 = vlaneseq
        %v594 = vshrl.u32 %v593, 7
        %v595 = vsub.s32 %v592, %v594
        %v596 = vrot.slane %v536, %v595
        %v597 = vcombine.low %v575, %v582
        %v598 = vcombine.low %v589, %v596
        %v600 = vunpack.c.l.s4 1966171168
        %v601 = vunpack.c.0.s8 %v600
        %v602 = vlaneseq
        %v603 = vshrl.u32 %v602, 7
        %v604 = vsub.s32 %v601, %v603
        %v605 = vrot.slane %v597, %v604
        %v607 = vunpack.c.l.s4 1966171168
        %v608 = vunpack.c.0.s8 %v607
        %v609 = vlaneseq
        %v610 = vshrl.u32 %v609, 7
        %v611 = vsub.s32 %v608, %v610
        %v612 = vrot.slane %v598, %v611
        %v613 = vcombine.low %v605, %v612
        %v615 = vmul.f32 %v558, %v613
        %vm616 = vcmp.lt.s32.totalorder %v438, 784
        %vm617 = vmand %vm439, %vm616
        %618 = vst.msk [vmem:[#allocation4] ss:$8 sm:$0xf] %vm617, %v615
        %619 = vst.msk [vmem:[#allocation4] ss:$8 sm:$0x70] %vm617, %v615
        %v620 = vld [vmem:[#allocation2] sm:$0x7f]
        %622 = vrot.lane.b32.xlu0 %v620, 127
        %v623 = vpop.permute.xlu0 %622
        %v624 = vrot.slane %v623, 1
        %vm625 = vcmask 1039360
        %v626 = vsel %vm625, %v623, %v624
        %s628 = scalar_lea.vmem [#allocation4], 1
        %629 = vst.msk [vmem:[%s628] ss:$8 sm:$0xf] %vm617, %v626
        %630 = vst.msk [vmem:[%s628] ss:$8 sm:$0x70] %vm617, %v626
        %v631 = vld [vmem:[#allocation2] sm:$0x7f]
        %v639 = vcombine.low %v551, %v552
        %v640 = vcombine.low %v553, %v554
        %v641 = vcombine.low %v555, %v556
        %v643 = vunpack.c.l.s4 1966171168
        %v644 = vunpack.c.0.s8 %v643
        %v645 = vlaneseq
        %v646 = vshrl.u32 %v645, 7
        %v647 = vsub.s32 %v644, %v646
        %v648 = vrot.slane %v639, %v647
        %v650 = vunpack.c.l.s4 1966171168
        %v651 = vunpack.c.0.s8 %v650
        %v652 = vlaneseq
        %v653 = vshrl.u32 %v652, 7
        %v654 = vsub.s32 %v651, %v653
        %v655 = vrot.slane %v640, %v654
        %v657 = vunpack.c.l.s4 1966171168
        %v658 = vunpack.c.0.s8 %v657
        %v659 = vlaneseq
        %v660 = vshrl.u32 %v659, 7
        %v661 = vsub.s32 %v658, %v660
        %v662 = vrot.slane %v641, %v661
        %v664 = vunpack.c.l.s4 1966171168
        %v665 = vunpack.c.0.s8 %v664
        %v666 = vlaneseq
        %v667 = vshrl.u32 %v666, 7
        %v668 = vsub.s32 %v665, %v667
        %v669 = vrot.slane %v557, %v668
        %v670 = vcombine.low %v648, %v655
        %v671 = vcombine.low %v662, %v669
        %v673 = vunpack.c.l.s4 1966171168
        %v674 = vunpack.c.0.s8 %v673
        %v675 = vlaneseq
        %v676 = vshrl.u32 %v675, 7
        %v677 = vsub.s32 %v674, %v676
        %v678 = vrot.slane %v670, %v677
        %v680 = vunpack.c.l.s4 1966171168
        %v681 = vunpack.c.0.s8 %v680
        %v682 = vlaneseq
        %v683 = vshrl.u32 %v682, 7
        %v684 = vsub.s32 %v681, %v683
        %v685 = vrot.slane %v671, %v684
        %v686 = vcombine.low %v678, %v685
        %687 = vrot.lane.b32.xlu0 %v686, 2
        %v688 = vpop.permute.xlu0 %687
        %v689 = vrot.slane %v688, 7
        %vm690 = vcmask 15360
        %v691 = vsel %vm690, %v689, %v688
        %v693 = vmul.f32 %v631, %v691
        %695 = vrot.lane.b32.xlu0 %v693, 126
        %v696 = vpop.permute.xlu0 %695
        %v697 = vrot.slane %v696, 1
        %vm698 = vcmask 1031168
        %v699 = vsel %vm698, %v696, %v697
        %s701 = scalar_lea.vmem [#allocation4], 2
        %702 = vst.msk [vmem:[%s701] ss:$8 sm:$0xf] %vm617, %v699
        %703 = vst.msk [vmem:[%s701] ss:$8 sm:$0x70] %vm617, %v699
        %v704 = vld [vmem:[#allocation2] sm:$0x7f]
        %705 = vrot.lane.b32.xlu0 %v613, 28
        %v706 = vpop.permute.xlu0 %705
        %v707 = vrot.slane %v706, 7
        %vm708 = vcmask 228352
        %v709 = vsel %vm708, %v707, %v706
        %v711 = vmul.f32 %v704, %v709
        %713 = vrot.lane.b32.xlu0 %v711, 100
        %v714 = vpop.permute.xlu0 %713
        %v715 = vrot.slane %v714, 1
        %vm716 = vcmask 818176
        %v717 = vsel %vm716, %v714, %v715
        %s719 = scalar_lea.vmem [#allocation4], 3
        %720 = vst.msk [vmem:[%s719] ss:$8 sm:$0xf] %vm617, %v717
        %721 = vst.msk [vmem:[%s719] ss:$8 sm:$0x70] %vm617, %v717
        %v722 = vld [vmem:[#allocation2] sm:$0x7f]
        %724 = vrot.lane.b32.xlu0 %v722, 99
        %v725 = vpop.permute.xlu0 %724
        %v726 = vrot.slane %v725, 1
        %vm727 = vcmask 809984
        %v728 = vsel %vm727, %v725, %v726
        %s730 = scalar_lea.vmem [#allocation4], 4
        %731 = vst.msk [vmem:[%s730] ss:$8 sm:$0xf] %vm617, %v728
        %732 = vst.msk [vmem:[%s730] ss:$8 sm:$0x70] %vm617, %v728
        %v733 = vld [vmem:[#allocation2] sm:$0x7f]
        %734 = vrot.lane.b32.xlu0 %v686, 30
        %v735 = vpop.permute.xlu0 %734
        %v736 = vrot.slane %v735, 7
        %vm737 = vcmask 244736
        %v738 = vsel %vm737, %v736, %v735
        %v740 = vmul.f32 %v733, %v738
        %742 = vrot.lane.b32.xlu0 %v740, 98
        %v743 = vpop.permute.xlu0 %742
        %v744 = vrot.slane %v743, 1
        %vm745 = vcmask 801792
        %v746 = vsel %vm745, %v743, %v744
        %s748 = scalar_lea.vmem [#allocation4], 5
        %749 = vst.msk [vmem:[%s748] ss:$8 sm:$0xf] %vm617, %v746
        %750 = vst.msk [vmem:[%s748] ss:$8 sm:$0x70] %vm617, %v746
        %v751 = vld [vmem:[#allocation2] sm:$0x7f]
        %752 = vrot.lane.b32.xlu0 %v613, 56
        %v753 = vpop.permute.xlu0 %752
        %v754 = vrot.slane %v753, 7
        %vm755 = vcmask 457728
        %v756 = vsel %vm755, %v754, %v753
        %v758 = vmul.f32 %v751, %v756
        %760 = vrot.lane.b32.xlu0 %v758, 72
        %v761 = vpop.permute.xlu0 %760
        %v762 = vrot.slane %v761, 1
        %vm763 = vcmask 588800
        %v764 = vsel %vm763, %v761, %v762
        %s766 = scalar_lea.vmem [#allocation4], 6
        %767 = vst.msk [vmem:[%s766] ss:$8 sm:$0xf] %vm617, %v764
        %768 = vst.msk [vmem:[%s766] ss:$8 sm:$0x70] %vm617, %v764
        %v769 = vld [vmem:[#allocation2] sm:$0x7f]
        %771 = vrot.lane.b32.xlu0 %v769, 71
        %v772 = vpop.permute.xlu0 %771
        %v773 = vrot.slane %v772, 1
        %vm774 = vcmask 580608
        %v775 = vsel %vm774, %v772, %v773
        %s777 = scalar_lea.vmem [#allocation4], 7
        %778 = vst.msk [vmem:[%s777] ss:$8 sm:$0xf] %vm617, %v775
        %779 = vst.msk [vmem:[%s777] ss:$8 sm:$0x70] %vm617, %v775
        %v780 = vld [vmem:[#allocation2] sm:$0x7f]
        %781 = vrot.lane.b32.xlu0 %v686, 58
        %v782 = vpop.permute.xlu0 %781
        %v783 = vrot.slane %v782, 7
        %vm784 = vcmask 474112
        %v785 = vsel %vm784, %v783, %v782
        %v787 = vmul.f32 %v780, %v785
        %789 = vrot.lane.b32.xlu0 %v787, 70
        %v790 = vpop.permute.xlu0 %789
        %v791 = vrot.slane %v790, 1
        %vm792 = vcmask 572416
        %v793 = vsel %vm792, %v790, %v791
        %s795 = scalar_lea.vmem [#allocation4], 56
        %796 = vst.msk [vmem:[%s795] ss:$8 sm:$0xf] %vm617, %v793
        %797 = vst.msk [vmem:[%s795] ss:$8 sm:$0x70] %vm617, %v793
        %v798 = vld [vmem:[%s1] sm:$0xf]
        %v799 = vld [vmem:[%s1 + $0x4] sm:$0xf]
        %v800 = vld [vmem:[%s1 + $0x8] sm:$0xf]
        %v801 = vld [vmem:[%s1 + $0xc] sm:$0xf]
        %v802 = vld [vmem:[#allocation4] sm:$0xff]
        %v803 = vld [vmem:[#allocation4 + $0x8] sm:$0xff]
        %v804 = vld [vmem:[#allocation4 + $0x10] sm:$0xff]
        %v805 = vld [vmem:[#allocation4 + $0x18] sm:$0xff]
        %v806 = vld [vmem:[#allocation4 + $0x20] sm:$0xff]
        %v807 = vld [vmem:[#allocation4 + $0x28] sm:$0xff]
        %v808 = vld [vmem:[#allocation4 + $0x30] sm:$0xff]
        %v809 = vld [vmem:[#allocation4 + $0x38] sm:$0xff]
        %v810 = vld [vmem:[#allocation4 + $0x40] sm:$0xff]
        %v811 = vld [vmem:[#allocation4 + $0x48] sm:$0xff]
        %v812 = vld [vmem:[#allocation4 + $0x50] sm:$0xff]
        %v813 = vld [vmem:[#allocation4 + $0x58] sm:$0xff]
        %v814 = vld [vmem:[#allocation4 + $0x60] sm:$0xff]
        %v815 = vld [vmem:[#allocation4 + $0x68] sm:$0xff]
        %v816 = vpack.c.bf16 %v809, %v802
        %v817 = vpack.c.bf16 %v810, %v803
        %v818 = vpack.c.bf16 %v811, %v804
        %v819 = vpack.c.bf16 %v812, %v805
        %v820 = vpack.c.bf16 %v813, %v806
        %v821 = vpack.c.bf16 %v814, %v807
        %v822 = vpack.c.bf16 %v815, %v808
        %v823 = vld [vmem:[%s2] sm:$0xff]
        %v824 = vld [vmem:[%s2 + $0x8] sm:$0xff]
        %v825 = vld [vmem:[%s2 + $0x10] sm:$0xff]
        %v826 = vld [vmem:[%s2 + $0x18] sm:$0xff]
        %828 = vset.pattern.permute.xlu0 0
        %829 = vperm.xlu0 %828, %v823
        %v830 = vpop.permute.xlu0 %829
        %833 = vset.pattern.permute.xlu0 0
        %834 = vperm.xlu0 %833, %v824
        %v835 = vpop.permute.xlu0 %834
        %838 = vset.pattern.permute.xlu0 0
        %839 = vperm.xlu0 %838, %v825
        %v840 = vpop.permute.xlu0 %839
        %843 = vset.pattern.permute.xlu0 0
        %844 = vperm.xlu0 %843, %v826
        %v845 = vpop.permute.xlu0 %844
        %v851 = vunpack.c.l.b16 %v798
        %v852 = vunpack.c.l.b16 %v799
        %v853 = vunpack.c.l.b16 %v800
        %v854 = vunpack.c.l.b16 %v801
        %v855 = vpack.c.b16 %v852, %v851
        %v856 = vpack.c.b16 %v854, %v853
        %vm857 = vcmask 130048
        %v859 = vsel %vm857, %v855, 0
        %v862 = vsel %vm857, %v856, 0
        %864 = vmatprep.subr.bf16.mxu0 %v817
        %865 = vmatpush1.bf16.msra.mxu0 %v816
        %866 = vmatprep.subr.bf16.mxu0 0
        %867 = vmatpush1.bf16.msra.mxu0 0
        %868 = vmatprep.subr.bf16.mxu0 0
        %869 = vmatpush1.bf16.msra.mxu0 0
        %870 = vmatprep.subr.bf16.mxu0 0
        %871 = vmatpush1.bf16.msra.mxu0 0
        %872 = vmatprep.subr.bf16.mxu0 0
        %873 = vmatpush1.bf16.msra.mxu0 0
        %874 = vmatprep.subr.bf16.mxu0 0
        %875 = vmatpush1.bf16.msra.mxu0 0
        %876 = vmatprep.subr.bf16.mxu0 0
        %877 = vmatpush1.bf16.msra.mxu0 0
        %878 = vmatprep.subr.bf16.mxu0 0
        %879 = vmatpush1.bf16.msra.mxu0 0
        %880 = vmatprep.subr.bf16.mxu0 0
        %881 = vmatpush1.bf16.msra.mxu0 0
        %882 = vmatprep.subr.bf16.mxu0 0
        %883 = vmatpush1.bf16.msra.mxu0 0
        %884 = vmatprep.subr.bf16.mxu0 0
        %885 = vmatpush1.bf16.msra.mxu0 0
        %886 = vmatprep.subr.bf16.mxu0 0
        %887 = vmatpush1.bf16.msra.mxu0 0
        %888 = vmatprep.subr.bf16.mxu0 0
        %889 = vmatpush1.bf16.msra.mxu0 0
        %890 = vmatprep.subr.bf16.mxu0 0
        %891 = vmatpush1.bf16.msra.mxu0 0
        %892 = vmatprep.subr.bf16.mxu0 0
        %893 = vmatpush1.bf16.msra.mxu0 0
        %894 = vmatprep.subr.bf16.mxu0 0
        %895 = vmatpush1.bf16.msra.mxu0 0
        %896 = vmatprep.mubr.bf16.mxu0 0
        %897 = vmatmul.mubr.bf16.gmra.mrb[0].mxu0 %v859
        %v898 = vpop.f32.mrb[0].mxu0
        %v899 = vadd.f32 %v830, %v898
        %v900 = vpop.f32.mrb[0].mxu0
        %v901 = vadd.f32 %v830, %v900
        %v902 = vpop.f32.mrb[0].mxu0
        %v903 = vadd.f32 %v835, %v902
        %v904 = vpop.f32.mrb[0].mxu0
        %v905 = vadd.f32 %v835, %v904
        %906 = vmatprep.mubr.bf16.mxu0 0
        %907 = vmatmul.mubr.bf16.gmra.mrb[0].mxu0 %v862
        %v908 = vpop.f32.mrb[0].mxu0
        %v909 = vadd.f32 %v840, %v908
        %v910 = vpop.f32.mrb[0].mxu0
        %v911 = vadd.f32 %v840, %v910
        %v912 = vpop.f32.mrb[0].mxu0
        %v913 = vadd.f32 %v845, %v912
        %v914 = vpop.f32.mrb[0].mxu0
        %v915 = vadd.f32 %v845, %v914
        %916 = vdwg.mxu0
        %917 = vmatprep.subr.bf16.mxu0 %v819
        %918 = vmatpush1.bf16.msra.mxu0 %v818
        %919 = vmatprep.subr.bf16.mxu0 0
        %920 = vmatpush1.bf16.msra.mxu0 0
        %921 = vmatprep.subr.bf16.mxu0 0
        %922 = vmatpush1.bf16.msra.mxu0 0
        %923 = vmatprep.subr.bf16.mxu0 0
        %924 = vmatpush1.bf16.msra.mxu0 0
        %925 = vmatprep.subr.bf16.mxu0 0
        %926 = vmatpush1.bf16.msra.mxu0 0
        %927 = vmatprep.subr.bf16.mxu0 0
        %928 = vmatpush1.bf16.msra.mxu0 0
        %929 = vmatprep.subr.bf16.mxu0 0
        %930 = vmatpush1.bf16.msra.mxu0 0
        %931 = vmatprep.subr.bf16.mxu0 0
        %932 = vmatpush1.bf16.msra.mxu0 0
        %933 = vmatprep.subr.bf16.mxu0 0
        %934 = vmatpush1.bf16.msra.mxu0 0
        %935 = vmatprep.subr.bf16.mxu0 0
        %936 = vmatpush1.bf16.msra.mxu0 0
        %937 = vmatprep.subr.bf16.mxu0 0
        %938 = vmatpush1.bf16.msra.mxu0 0
        %939 = vmatprep.subr.bf16.mxu0 0
        %940 = vmatpush1.bf16.msra.mxu0 0
        %941 = vmatprep.subr.bf16.mxu0 0
        %942 = vmatpush1.bf16.msra.mxu0 0
        %943 = vmatprep.subr.bf16.mxu0 0
        %944 = vmatpush1.bf16.msra.mxu0 0
        %945 = vmatprep.subr.bf16.mxu0 0
        %946 = vmatpush1.bf16.msra.mxu0 0
        %947 = vmatprep.subr.bf16.mxu0 0
        %948 = vmatpush1.bf16.msra.mxu0 0
        %949 = vmatprep.mubr.bf16.mxu0 0
        %950 = vmatmul.mubr.bf16.gmra.mrb[0].mxu0 %v859
        %v951 = vpop.f32.mrb[0].mxu0
        %v952 = vadd.f32 %v830, %v951
        %v953 = vpop.f32.mrb[0].mxu0
        %v954 = vadd.f32 %v830, %v953
        %v955 = vpop.f32.mrb[0].mxu0
        %v956 = vadd.f32 %v835, %v955
        %v957 = vpop.f32.mrb[0].mxu0
        %v958 = vadd.f32 %v835, %v957
        %959 = vmatprep.mubr.bf16.mxu0 0
        %960 = vmatmul.mubr.bf16.gmra.mrb[0].mxu0 %v862
        %v961 = vpop.f32.mrb[0].mxu0
        %v962 = vadd.f32 %v840, %v961
        %v963 = vpop.f32.mrb[0].mxu0
        %v964 = vadd.f32 %v840, %v963
        %v965 = vpop.f32.mrb[0].mxu0
        %v966 = vadd.f32 %v845, %v965
        %v967 = vpop.f32.mrb[0].mxu0
        %v968 = vadd.f32 %v845, %v967
        %969 = vdwg.mxu0
        %970 = vmatprep.subr.bf16.mxu0 %v821
        %971 = vmatpush1.bf16.msra.mxu0 %v820
        %972 = vmatprep.subr.bf16.mxu0 0
        %973 = vmatpush1.bf16.msra.mxu0 0
        %974 = vmatprep.subr.bf16.mxu0 0
        %975 = vmatpush1.bf16.msra.mxu0 0
        %976 = vmatprep.subr.bf16.mxu0 0
        %977 = vmatpush1.bf16.msra.mxu0 0
        %978 = vmatprep.subr.bf16.mxu0 0
        %979 = vmatpush1.bf16.msra.mxu0 0
        %980 = vmatprep.subr.bf16.mxu0 0
        %981 = vmatpush1.bf16.msra.mxu0 0
        %982 = vmatprep.subr.bf16.mxu0 0
        %983 = vmatpush1.bf16.msra.mxu0 0
        %984 = vmatprep.subr.bf16.mxu0 0
        %985 = vmatpush1.bf16.msra.mxu0 0
        %986 = vmatprep.subr.bf16.mxu0 0
        %987 = vmatpush1.bf16.msra.mxu0 0
        %988 = vmatprep.subr.bf16.mxu0 0
        %989 = vmatpush1.bf16.msra.mxu0 0
        %990 = vmatprep.subr.bf16.mxu0 0
        %991 = vmatpush1.bf16.msra.mxu0 0
        %992 = vmatprep.subr.bf16.mxu0 0
        %993 = vmatpush1.bf16.msra.mxu0 0
        %994 = vmatprep.subr.bf16.mxu0 0
        %995 = vmatpush1.bf16.msra.mxu0 0
        %996 = vmatprep.subr.bf16.mxu0 0
        %997 = vmatpush1.bf16.msra.mxu0 0
        %998 = vmatprep.subr.bf16.mxu0 0
        %999 = vmatpush1.bf16.msra.mxu0 0
        %1000 = vmatprep.subr.bf16.mxu0 0
        %1001 = vmatpush1.bf16.msra.mxu0 0
        %1002 = vmatprep.mubr.bf16.mxu0 0
        %1003 = vmatmul.mubr.bf16.gmra.mrb[0].mxu0 %v859
        %v1004 = vpop.f32.mrb[0].mxu0
        %v1005 = vadd.f32 %v830, %v1004
        %v1006 = vpop.f32.mrb[0].mxu0
        %v1007 = vadd.f32 %v830, %v1006
        %v1008 = vpop.f32.mrb[0].mxu0
        %v1009 = vadd.f32 %v835, %v1008
        %v1010 = vpop.f32.mrb[0].mxu0
        %v1011 = vadd.f32 %v835, %v1010
        %1012 = vmatprep.mubr.bf16.mxu0 0
        %1013 = vmatmul.mubr.bf16.gmra.mrb[0].mxu0 %v862
        %v1014 = vpop.f32.mrb[0].mxu0
        %v1015 = vadd.f32 %v840, %v1014
        %v1016 = vpop.f32.mrb[0].mxu0
        %v1017 = vadd.f32 %v840, %v1016
        %v1018 = vpop.f32.mrb[0].mxu0
        %v1019 = vadd.f32 %v845, %v1018
        %v1020 = vpop.f32.mrb[0].mxu0
        %v1021 = vadd.f32 %v845, %v1020
        %1022 = vdwg.mxu0
        %1023 = vmatprep.subr.bf16.mxu0 0
        %1024 = vmatpush1.bf16.msra.mxu0 %v822
        %1025 = vmatprep.subr.bf16.mxu0 0
        %1026 = vmatpush1.bf16.msra.mxu0 0
        %1027 = vmatprep.subr.bf16.mxu0 0
        %1028 = vmatpush1.bf16.msra.mxu0 0
        %1029 = vmatprep.subr.bf16.mxu0 0
        %1030 = vmatpush1.bf16.msra.mxu0 0
        %1031 = vmatprep.subr.bf16.mxu0 0
        %1032 = vmatpush1.bf16.msra.mxu0 0
        %1033 = vmatprep.subr.bf16.mxu0 0
        %1034 = vmatpush1.bf16.msra.mxu0 0
        %1035 = vmatprep.subr.bf16.mxu0 0
        %1036 = vmatpush1.bf16.msra.mxu0 0
        %1037 = vmatprep.subr.bf16.mxu0 0
        %1038 = vmatpush1.bf16.msra.mxu0 0
        %1039 = vmatprep.subr.bf16.mxu0 0
        %1040 = vmatpush1.bf16.msra.mxu0 0
        %1041 = vmatprep.subr.bf16.mxu0 0
        %1042 = vmatpush1.bf16.msra.mxu0 0
        %1043 = vmatprep.subr.bf16.mxu0 0
        %1044 = vmatpush1.bf16.msra.mxu0 0
        %1045 = vmatprep.subr.bf16.mxu0 0
        %1046 = vmatpush1.bf16.msra.mxu0 0
        %1047 = vmatprep.subr.bf16.mxu0 0
        %1048 = vmatpush1.bf16.msra.mxu0 0
        %1049 = vmatprep.subr.bf16.mxu0 0
        %1050 = vmatpush1.bf16.msra.mxu0 0
        %1051 = vmatprep.subr.bf16.mxu0 0
        %1052 = vmatpush1.bf16.msra.mxu0 0
        %1053 = vmatprep.subr.bf16.mxu0 0
        %1054 = vmatpush1.bf16.msra.mxu0 0
        %1055 = vmatprep.mubr.bf16.mxu0 0
        %1056 = vmatmul.mubr.bf16.gmra.mrb[0].mxu0 %v859
        %v1057 = vpop.f32.mrb[0].mxu0
        %v1058 = vadd.f32 %v830, %v1057
        %v1059 = vpop.f32.mrb[0].mxu0
        %v1060 = vpop.f32.mrb[0].mxu0
        %v1061 = vadd.f32 %v835, %v1060
        %v1062 = vpop.f32.mrb[0].mxu0
        %1063 = vmatprep.mubr.bf16.mxu0 0
        %1064 = vmatmul.mubr.bf16.gmra.mrb[0].mxu0 %v862
        %v1065 = vpop.f32.mrb[0].mxu0
        %v1066 = vadd.f32 %v840, %v1065
        %v1067 = vpop.f32.mrb[0].mxu0
        %v1068 = vpop.f32.mrb[0].mxu0
        %v1069 = vadd.f32 %v845, %v1068
        %v1070 = vpop.f32.mrb[0].mxu0
        %1071 = vdwg.mxu0
        %v1072 = vmax.f32 %v899, 0.0
        %v1073 = vmax.f32 %v901, 0.0
        %v1074 = vmax.f32 %v952, 0.0
        %v1075 = vmax.f32 %v954, 0.0
        %v1076 = vmax.f32 %v1005, 0.0
        %v1077 = vmax.f32 %v1007, 0.0
        %v1078 = vmax.f32 %v1058, 0.0
        %v1079 = vmax.f32 %v903, 0.0
        %v1080 = vmax.f32 %v905, 0.0
        %v1081 = vmax.f32 %v956, 0.0
        %v1082 = vmax.f32 %v958, 0.0
        %v1083 = vmax.f32 %v1009, 0.0
        %v1084 = vmax.f32 %v1011, 0.0
        %v1085 = vmax.f32 %v1061, 0.0
        %v1086 = vmax.f32 %v909, 0.0
        %v1087 = vmax.f32 %v911, 0.0
        %v1088 = vmax.f32 %v962, 0.0
        %v1089 = vmax.f32 %v964, 0.0
        %v1090 = vmax.f32 %v1015, 0.0
        %v1091 = vmax.f32 %v1017, 0.0
        %v1092 = vmax.f32 %v1066, 0.0
        %v1093 = vmax.f32 %v913, 0.0
        %v1094 = vmax.f32 %v915, 0.0
        %v1095 = vmax.f32 %v966, 0.0
        %v1096 = vmax.f32 %v968, 0.0
        %v1097 = vmax.f32 %v1019, 0.0
        %v1098 = vmax.f32 %v1021, 0.0
        %v1099 = vmax.f32 %v1069, 0.0
        %v1100 = vadd.f32 %v1072, %v1079
        %v1101 = vadd.f32 %v1100, %v1086
        %v1102 = vadd.f32 %v1101, %v1093
        %v1103 = vrot.slane %v1102, 4
        %v1104 = vadd.f32 %v1102, %v1103
        %v1105 = vrot.slane %v1104, 2
        %v1106 = vadd.f32 %v1104, %v1105
        %v1107 = vrot.slane %v1106, 1
        %v1108 = vadd.f32 %v1106, %v1107
        %v1109 = vadd.f32 %v1073, %v1080
        %v1110 = vadd.f32 %v1109, %v1087
        %v1111 = vadd.f32 %v1110, %v1094
        %v1112 = vrot.slane %v1111, 4
        %v1113 = vadd.f32 %v1111, %v1112
        %v1114 = vrot.slane %v1113, 2
        %v1115 = vadd.f32 %v1113, %v1114
        %v1116 = vrot.slane %v1115, 1
        %v1117 = vadd.f32 %v1115, %v1116
        %v1118 = vadd.f32 %v1074, %v1081
        %v1119 = vadd.f32 %v1118, %v1088
        %v1120 = vadd.f32 %v1119, %v1095
        %v1121 = vrot.slane %v1120, 4
        %v1122 = vadd.f32 %v1120, %v1121
        %v1123 = vrot.slane %v1122, 2
        %v1124 = vadd.f32 %v1122, %v1123
        %v1125 = vrot.slane %v1124, 1
        %v1126 = vadd.f32 %v1124, %v1125
        %v1127 = vadd.f32 %v1075, %v1082
        %v1128 = vadd.f32 %v1127, %v1089
        %v1129 = vadd.f32 %v1128, %v1096
        %v1130 = vrot.slane %v1129, 4
        %v1131 = vadd.f32 %v1129, %v1130
        %v1132 = vrot.slane %v1131, 2
        %v1133 = vadd.f32 %v1131, %v1132
        %v1134 = vrot.slane %v1133, 1
        %v1135 = vadd.f32 %v1133, %v1134
        %v1136 = vadd.f32 %v1076, %v1083
        %v1137 = vadd.f32 %v1136, %v1090
        %v1138 = vadd.f32 %v1137, %v1097
        %v1139 = vrot.slane %v1138, 4
        %v1140 = vadd.f32 %v1138, %v1139
        %v1141 = vrot.slane %v1140, 2
        %v1142 = vadd.f32 %v1140, %v1141
        %v1143 = vrot.slane %v1142, 1
        %v1144 = vadd.f32 %v1142, %v1143
        %v1145 = vadd.f32 %v1077, %v1084
        %v1146 = vadd.f32 %v1145, %v1091
        %v1147 = vadd.f32 %v1146, %v1098
        %v1148 = vrot.slane %v1147, 4
        %v1149 = vadd.f32 %v1147, %v1148
        %v1150 = vrot.slane %v1149, 2
        %v1151 = vadd.f32 %v1149, %v1150
        %v1152 = vrot.slane %v1151, 1
        %v1153 = vadd.f32 %v1151, %v1152
        %v1154 = vsel %vm857, %v1078, 0.0
        %v1155 = vsel %vm857, %v1085, 0.0
        %v1156 = vadd.f32 %v1154, %v1155
        %v1157 = vsel %vm857, %v1092, 0.0
        %v1158 = vadd.f32 %v1156, %v1157
        %v1159 = vsel %vm857, %v1099, 0.0
        %v1160 = vadd.f32 %v1158, %v1159
        %v1161 = vrot.slane %v1160, 4
        %v1162 = vadd.f32 %v1160, %v1161
        %v1163 = vrot.slane %v1162, 2
        %v1164 = vadd.f32 %v1162, %v1163
        %v1165 = vrot.slane %v1164, 1
        %v1166 = vadd.f32 %v1164, %v1165
        %1167 = vst.msk [vmem:[#allocation2] sm:$0x1] %vm441, 0.0
        %1168 = vst.msk [vmem:[#allocation2 + $0x6] sm:$0x1] %vm445, 0.0
        %1169 = vst [vmem:[#allocation4 + $0x38] sm:$0xfe] 0.0
        %1170 = vst [vmem:[#allocation4 + $0x40] sm:$0xfe] 0.0
        %1171 = vst [vmem:[#allocation4 + $0x48] sm:$0xfe] 0.0
        %1172 = vst [vmem:[#allocation4 + $0x50] sm:$0xfe] 0.0
        %1173 = vst [vmem:[#allocation4 + $0x58] sm:$0xfe] 0.0
        %1174 = vst [vmem:[#allocation4 + $0x60] sm:$0xfe] 0.0
        %1175 = vst.msk [vmem:[#allocation4 + $0x68] sm:$0xfe] %vm453, 0.0
        %v1183 = vcombine.low %v1108, %v1117
        %v1184 = vcombine.low %v1126, %v1135
        %v1185 = vcombine.low %v1144, %v1153
        %v1187 = vunpack.c.l.s4 1966171168
        %v1188 = vunpack.c.0.s8 %v1187
        %v1189 = vlaneseq
        %v1190 = vshrl.u32 %v1189, 7
        %v1191 = vsub.s32 %v1188, %v1190
        %v1192 = vrot.slane %v1183, %v1191
        %v1194 = vunpack.c.l.s4 1966171168
        %v1195 = vunpack.c.0.s8 %v1194
        %v1196 = vlaneseq
        %v1197 = vshrl.u32 %v1196, 7
        %v1198 = vsub.s32 %v1195, %v1197
        %v1199 = vrot.slane %v1184, %v1198
        %v1201 = vunpack.c.l.s4 1966171168
        %v1202 = vunpack.c.0.s8 %v1201
        %v1203 = vlaneseq
        %v1204 = vshrl.u32 %v1203, 7
        %v1205 = vsub.s32 %v1202, %v1204
        %v1206 = vrot.slane %v1185, %v1205
        %v1208 = vunpack.c.l.s4 1966171168
        %v1209 = vunpack.c.0.s8 %v1208
        %v1210 = vlaneseq
        %v1211 = vshrl.u32 %v1210, 7
        %v1212 = vsub.s32 %v1209, %v1211
        %v1213 = vrot.slane %v1166, %v1212
        %v1214 = vcombine.low %v1192, %v1199
        %v1215 = vcombine.low %v1206, %v1213
        %v1217 = vunpack.c.l.s4 1966171168
        %v1218 = vunpack.c.0.s8 %v1217
        %v1219 = vlaneseq
        %v1220 = vshrl.u32 %v1219, 7
        %v1221 = vsub.s32 %v1218, %v1220
        %v1222 = vrot.slane %v1214, %v1221
        %v1224 = vunpack.c.l.s4 1966171168
        %v1225 = vunpack.c.0.s8 %v1224
        %v1226 = vlaneseq
        %v1227 = vshrl.u32 %v1226, 7
        %v1228 = vsub.s32 %v1225, %v1227
        %v1229 = vrot.slane %v1215, %v1228
        %v1230 = vcombine.low %v1222, %v1229
        %1231 = vrot.lane.b32.xlu0 %v1230, 29
        %v1232 = vpop.permute.xlu0 %1231
        %v1233 = vrot.slane %v1232, 7
        %v1234 = vsel %vm459, %v1233, %v1232
        %1236 = vst.msk [vmem:[#allocation2] sm:$0x7f] %vm464, %v1234
        %v1237 = vld [vmem:[#allocation2] sm:$0x7f]
        %v1238 = vmul.f32 %v1237, %v613
        %1239 = vst.msk [vmem:[#allocation4] ss:$8 sm:$0xf] %vm617, %v1238
        %1240 = vst.msk [vmem:[#allocation4] ss:$8 sm:$0x70] %vm617, %v1238
        %v1241 = vld [vmem:[#allocation2] sm:$0x7f]
        %1243 = vrot.lane.b32.xlu0 %v1241, 127
        %v1244 = vpop.permute.xlu0 %1243
        %v1245 = vrot.slane %v1244, 1
        %v1246 = vsel %vm625, %v1244, %v1245
        %1248 = vst.msk [vmem:[%s628] ss:$8 sm:$0xf] %vm617, %v1246
        %1249 = vst.msk [vmem:[%s628] ss:$8 sm:$0x70] %vm617, %v1246
        %v1250 = vld [vmem:[#allocation2] sm:$0x7f]
        %v1251 = vmul.f32 %v1250, %v691
        %1253 = vrot.lane.b32.xlu0 %v1251, 126
        %v1254 = vpop.permute.xlu0 %1253
        %v1255 = vrot.slane %v1254, 1
        %v1256 = vsel %vm698, %v1254, %v1255
        %1258 = vst.msk [vmem:[%s701] ss:$8 sm:$0xf] %vm617, %v1256
        %1259 = vst.msk [vmem:[%s701] ss:$8 sm:$0x70] %vm617, %v1256
        %v1260 = vld [vmem:[#allocation2] sm:$0x7f]
        %v1261 = vmul.f32 %v1260, %v709
        %1263 = vrot.lane.b32.xlu0 %v1261, 100
        %v1264 = vpop.permute.xlu0 %1263
        %v1265 = vrot.slane %v1264, 1
        %v1266 = vsel %vm716, %v1264, %v1265
        %1268 = vst.msk [vmem:[%s719] ss:$8 sm:$0xf] %vm617, %v1266
        %1269 = vst.msk [vmem:[%s719] ss:$8 sm:$0x70] %vm617, %v1266
        %v1270 = vld [vmem:[#allocation2] sm:$0x7f]
        %1272 = vrot.lane.b32.xlu0 %v1270, 99
        %v1273 = vpop.permute.xlu0 %1272
        %v1274 = vrot.slane %v1273, 1
        %v1275 = vsel %vm727, %v1273, %v1274
        %1277 = vst.msk [vmem:[%s730] ss:$8 sm:$0xf] %vm617, %v1275
        %1278 = vst.msk [vmem:[%s730] ss:$8 sm:$0x70] %vm617, %v1275
        %v1279 = vld [vmem:[#allocation2] sm:$0x7f]
        %v1280 = vmul.f32 %v1279, %v738
        %1282 = vrot.lane.b32.xlu0 %v1280, 98
        %v1283 = vpop.permute.xlu0 %1282
        %v1284 = vrot.slane %v1283, 1
        %v1285 = vsel %vm745, %v1283, %v1284
        %1287 = vst.msk [vmem:[%s748] ss:$8 sm:$0xf] %vm617, %v1285
        %1288 = vst.msk [vmem:[%s748] ss:$8 sm:$0x70] %vm617, %v1285
        %v1289 = vld [vmem:[#allocation2] sm:$0x7f]
        %v1290 = vmul.f32 %v1289, %v756
        %1292 = vrot.lane.b32.xlu0 %v1290, 72
        %v1293 = vpop.permute.xlu0 %1292
        %v1294 = vrot.slane %v1293, 1
        %v1295 = vsel %vm763, %v1293, %v1294
        %1297 = vst.msk [vmem:[%s766] ss:$8 sm:$0xf] %vm617, %v1295
        %1298 = vst.msk [vmem:[%s766] ss:$8 sm:$0x70] %vm617, %v1295
        %v1299 = vld [vmem:[#allocation2] sm:$0x7f]
        %1301 = vrot.lane.b32.xlu0 %v1299, 71
        %v1302 = vpop.permute.xlu0 %1301
        %v1303 = vrot.slane %v1302, 1
        %v1304 = vsel %vm774, %v1302, %v1303
        %1306 = vst.msk [vmem:[%s777] ss:$8 sm:$0xf] %vm617, %v1304
        %1307 = vst.msk [vmem:[%s777] ss:$8 sm:$0x70] %vm617, %v1304
        %v1308 = vld [vmem:[#allocation2] sm:$0x7f]
        %v1309 = vmul.f32 %v1308, %v785
        %1311 = vrot.lane.b32.xlu0 %v1309, 70
        %v1312 = vpop.permute.xlu0 %1311
        %v1313 = vrot.slane %v1312, 1
        %v1314 = vsel %vm792, %v1312, %v1313
        %1316 = vst.msk [vmem:[%s795] ss:$8 sm:$0xf] %vm617, %v1314
        %1317 = vst.msk [vmem:[%s795] ss:$8 sm:$0x70] %vm617, %v1314
        %v1318 = vld [vmem:[%s3] sm:$0xf]
        %v1319 = vld [vmem:[%s3 + $0x4] sm:$0xf]
        %v1320 = vld [vmem:[%s3 + $0x8] sm:$0xf]
        %v1321 = vld [vmem:[%s3 + $0xc] sm:$0xf]
        %v1322 = vld [vmem:[%s3 + $0x10] sm:$0xf]
        %v1323 = vld [vmem:[%s3 + $0x14] sm:$0xf]
        %v1324 = vld [vmem:[%s3 + $0x18] sm:$0xf]
        %v1325 = vld [vmem:[%s3 + $0x1c] sm:$0xf]
        %v1326 = vld [vmem:[#allocation4] sm:$0xff]
        %v1327 = vld [vmem:[#allocation4 + $0x8] sm:$0xff]
        %v1328 = vld [vmem:[#allocation4 + $0x10] sm:$0xff]
        %v1329 = vld [vmem:[#allocation4 + $0x18] sm:$0xff]
        %v1330 = vld [vmem:[#allocation4 + $0x20] sm:$0xff]
        %v1331 = vld [vmem:[#allocation4 + $0x28] sm:$0xff]
        %v1332 = vld [vmem:[#allocation4 + $0x30] sm:$0xff]
        %v1333 = vld [vmem:[#allocation4 + $0x38] sm:$0xff]
        %v1334 = vld [vmem:[#allocation4 + $0x40] sm:$0xff]
        %v1335 = vld [vmem:[#allocation4 + $0x48] sm:$0xff]
        %v1336 = vld [vmem:[#allocation4 + $0x50] sm:$0xff]
        %v1337 = vld [vmem:[#allocation4 + $0x58] sm:$0xff]
        %v1338 = vld [vmem:[#allocation4 + $0x60] sm:$0xff]
        %v1339 = vld [vmem:[#allocation4 + $0x68] sm:$0xff]
        %v1340 = vpack.c.bf16 %v1333, %v1326
        %v1341 = vpack.c.bf16 %v1334, %v1327
        %v1342 = vpack.c.bf16 %v1335, %v1328
        %v1343 = vpack.c.bf16 %v1336, %v1329
        %v1344 = vpack.c.bf16 %v1337, %v1330
        %v1345 = vpack.c.bf16 %v1338, %v1331
        %v1346 = vpack.c.bf16 %v1339, %v1332
        %v1347 = vld [vmem:[%s4] sm:$0xff]
        %v1348 = vld [vmem:[%s4 + $0x8] sm:$0xff]
        %v1349 = vld [vmem:[%s4 + $0x10] sm:$0xff]
        %v1350 = vld [vmem:[%s4 + $0x18] sm:$0xff]
        %v1351 = vld [vmem:[%s4 + $0x20] sm:$0xff]
        %v1352 = vld [vmem:[%s4 + $0x28] sm:$0xff]
        %v1353 = vld [vmem:[%s4 + $0x30] sm:$0xff]
        %v1354 = vld [vmem:[%s4 + $0x38] sm:$0xff]
        %v1355 = vmul.f32 %v1347, 32.0
        %v1356 = vmul.f32 %v1348, 32.0
        %v1357 = vmul.f32 %v1349, 32.0
        %v1358 = vmul.f32 %v1350, 32.0
        %v1359 = vmul.f32 %v1351, 32.0
        %v1360 = vmul.f32 %v1352, 32.0
        %v1361 = vmul.f32 %v1353, 32.0
        %v1362 = vmul.f32 %v1354, 32.0
        %1364 = vset.pattern.permute.xlu0 0
        %1365 = vperm.xlu0 %1364, %v1355
        %v1366 = vpop.permute.xlu0 %1365
        %1369 = vset.pattern.permute.xlu0 0
        %1370 = vperm.xlu0 %1369, %v1356
        %v1371 = vpop.permute.xlu0 %1370
        %1374 = vset.pattern.permute.xlu0 0
        %1375 = vperm.xlu0 %1374, %v1357
        %v1376 = vpop.permute.xlu0 %1375
        %1379 = vset.pattern.permute.xlu0 0
        %1380 = vperm.xlu0 %1379, %v1358
        %v1381 = vpop.permute.xlu0 %1380
        %1384 = vset.pattern.permute.xlu0 0
        %1385 = vperm.xlu0 %1384, %v1359
        %v1386 = vpop.permute.xlu0 %1385
        %1389 = vset.pattern.permute.xlu0 0
        %1390 = vperm.xlu0 %1389, %v1360
        %v1391 = vpop.permute.xlu0 %1390
        %1394 = vset.pattern.permute.xlu0 0
        %1395 = vperm.xlu0 %1394, %v1361
        %v1396 = vpop.permute.xlu0 %1395
        %1399 = vset.pattern.permute.xlu0 0
        %1400 = vperm.xlu0 %1399, %v1362
        %v1401 = vpop.permute.xlu0 %1400
        %v1411 = vunpack.c.l.b16 %v1318
        %v1412 = vunpack.c.l.b16 %v1319
        %v1413 = vunpack.c.l.b16 %v1320
        %v1414 = vunpack.c.l.b16 %v1321
        %v1415 = vunpack.c.l.b16 %v1322
        %v1416 = vunpack.c.l.b16 %v1323
        %v1417 = vunpack.c.l.b16 %v1324
        %v1418 = vunpack.c.l.b16 %v1325
        %v1419 = vpack.c.b16 %v1412, %v1411
        %v1420 = vpack.c.b16 %v1414, %v1413
        %v1421 = vpack.c.b16 %v1416, %v1415
        %v1422 = vpack.c.b16 %v1418, %v1417
        %v1424 = vsel %vm857, %v1419, 0
        %v1427 = vsel %vm857, %v1420, 0
        %v1430 = vsel %vm857, %v1421, 0
        %v1433 = vsel %vm857, %v1422, 0
        %1435 = vmatprep.subr.bf16.mxu0 %v1341
        %1436 = vmatpush1.bf16.msra.mxu0 %v1340
        %1437 = vmatprep.subr.bf16.mxu0 0
        %1438 = vmatpush1.bf16.msra.mxu0 0
        %1439 = vmatprep.subr.bf16.mxu0 0
        %1440 = vmatpush1.bf16.msra.mxu0 0
        %1441 = vmatprep.subr.bf16.mxu0 0
        %1442 = vmatpush1.bf16.msra.mxu0 0
        %1443 = vmatprep.subr.bf16.mxu0 0
        %1444 = vmatpush1.bf16.msra.mxu0 0
        %1445 = vmatprep.subr.bf16.mxu0 0
        %1446 = vmatpush1.bf16.msra.mxu0 0
        %1447 = vmatprep.subr.bf16.mxu0 0
        %1448 = vmatpush1.bf16.msra.mxu0 0
        %1449 = vmatprep.subr.bf16.mxu0 0
        %1450 = vmatpush1.bf16.msra.mxu0 0
        %1451 = vmatprep.subr.bf16.mxu0 0
        %1452 = vmatpush1.bf16.msra.mxu0 0
        %1453 = vmatprep.subr.bf16.mxu0 0
        %1454 = vmatpush1.bf16.msra.mxu0 0
        %1455 = vmatprep.subr.bf16.mxu0 0
        %1456 = vmatpush1.bf16.msra.mxu0 0
        %1457 = vmatprep.subr.bf16.mxu0 0
        %1458 = vmatpush1.bf16.msra.mxu0 0
        %1459 = vmatprep.subr.bf16.mxu0 0
        %1460 = vmatpush1.bf16.msra.mxu0 0
        %1461 = vmatprep.subr.bf16.mxu0 0
        %1462 = vmatpush1.bf16.msra.mxu0 0
        %1463 = vmatprep.subr.bf16.mxu0 0
        %1464 = vmatpush1.bf16.msra.mxu0 0
        %1465 = vmatprep.subr.bf16.mxu0 0
        %1466 = vmatpush1.bf16.msra.mxu0 0
        %1467 = vmatprep.mubr.bf16.mxu0 0
        %1468 = vmatmul.mubr.bf16.gmra.mrb[0].mxu0 %v1424
        %v1469 = vpop.f32.mrb[0].mxu0
        %v1470 = vadd.f32 %v1366, %v1469
        %v1471 = vpop.f32.mrb[0].mxu0
        %v1472 = vadd.f32 %v1366, %v1471
        %v1473 = vpop.f32.mrb[0].mxu0
        %v1474 = vadd.f32 %v1371, %v1473
        %v1475 = vpop.f32.mrb[0].mxu0
        %v1476 = vadd.f32 %v1371, %v1475
        %1477 = vmatprep.mubr.bf16.mxu0 0
        %1478 = vmatmul.mubr.bf16.gmra.mrb[0].mxu0 %v1427
        %v1479 = vpop.f32.mrb[0].mxu0
        %v1480 = vadd.f32 %v1376, %v1479
        %v1481 = vpop.f32.mrb[0].mxu0
        %v1482 = vadd.f32 %v1376, %v1481
        %v1483 = vpop.f32.mrb[0].mxu0
        %v1484 = vadd.f32 %v1381, %v1483
        %v1485 = vpop.f32.mrb[0].mxu0
        %v1486 = vadd.f32 %v1381, %v1485
        %1487 = vmatprep.mubr.bf16.mxu0 0
        %1488 = vmatmul.mubr.bf16.gmra.mrb[0].mxu0 %v1430
        %v1489 = vpop.f32.mrb[0].mxu0
        %v1490 = vadd.f32 %v1386, %v1489
        %v1491 = vpop.f32.mrb[0].mxu0
        %v1492 = vadd.f32 %v1386, %v1491
        %v1493 = vpop.f32.mrb[0].mxu0
        %v1494 = vadd.f32 %v1391, %v1493
        %v1495 = vpop.f32.mrb[0].mxu0
        %v1496 = vadd.f32 %v1391, %v1495
        %1497 = vmatprep.mubr.bf16.mxu0 0
        %1498 = vmatmul.mubr.bf16.gmra.mrb[0].mxu0 %v1433
        %v1499 = vpop.f32.mrb[0].mxu0
        %v1500 = vadd.f32 %v1396, %v1499
        %v1501 = vpop.f32.mrb[0].mxu0
        %v1502 = vadd.f32 %v1396, %v1501
        %v1503 = vpop.f32.mrb[0].mxu0
        %v1504 = vadd.f32 %v1401, %v1503
        %v1505 = vpop.f32.mrb[0].mxu0
        %v1506 = vadd.f32 %v1401, %v1505
        %1507 = vdwg.mxu0
        %1508 = vmatprep.subr.bf16.mxu0 %v1343
        %1509 = vmatpush1.bf16.msra.mxu0 %v1342
        %1510 = vmatprep.subr.bf16.mxu0 0
        %1511 = vmatpush1.bf16.msra.mxu0 0
        %1512 = vmatprep.subr.bf16.mxu0 0
        %1513 = vmatpush1.bf16.msra.mxu0 0
        %1514 = vmatprep.subr.bf16.mxu0 0
        %1515 = vmatpush1.bf16.msra.mxu0 0
        %1516 = vmatprep.subr.bf16.mxu0 0
        %1517 = vmatpush1.bf16.msra.mxu0 0
        %1518 = vmatprep.subr.bf16.mxu0 0
        %1519 = vmatpush1.bf16.msra.mxu0 0
        %1520 = vmatprep.subr.bf16.mxu0 0
        %1521 = vmatpush1.bf16.msra.mxu0 0
        %1522 = vmatprep.subr.bf16.mxu0 0
        %1523 = vmatpush1.bf16.msra.mxu0 0
        %1524 = vmatprep.subr.bf16.mxu0 0
        %1525 = vmatpush1.bf16.msra.mxu0 0
        %1526 = vmatprep.subr.bf16.mxu0 0
        %1527 = vmatpush1.bf16.msra.mxu0 0
        %1528 = vmatprep.subr.bf16.mxu0 0
        %1529 = vmatpush1.bf16.msra.mxu0 0
        %1530 = vmatprep.subr.bf16.mxu0 0
        %1531 = vmatpush1.bf16.msra.mxu0 0
        %1532 = vmatprep.subr.bf16.mxu0 0
        %1533 = vmatpush1.bf16.msra.mxu0 0
        %1534 = vmatprep.subr.bf16.mxu0 0
        %1535 = vmatpush1.bf16.msra.mxu0 0
        %1536 = vmatprep.subr.bf16.mxu0 0
        %1537 = vmatpush1.bf16.msra.mxu0 0
        %1538 = vmatprep.subr.bf16.mxu0 0
        %1539 = vmatpush1.bf16.msra.mxu0 0
        %1540 = vmatprep.mubr.bf16.mxu0 0
        %1541 = vmatmul.mubr.bf16.gmra.mrb[0].mxu0 %v1424
        %v1542 = vpop.f32.mrb[0].mxu0
        %v1543 = vadd.f32 %v1366, %v1542
        %v1544 = vpop.f32.mrb[0].mxu0
        %v1545 = vadd.f32 %v1366, %v1544
        %v1546 = vpop.f32.mrb[0].mxu0
        %v1547 = vadd.f32 %v1371, %v1546
        %v1548 = vpop.f32.mrb[0].mxu0
        %v1549 = vadd.f32 %v1371, %v1548
        %1550 = vmatprep.mubr.bf16.mxu0 0
        %1551 = vmatmul.mubr.bf16.gmra.mrb[0].mxu0 %v1427
        %v1552 = vpop.f32.mrb[0].mxu0
        %v1553 = vadd.f32 %v1376, %v1552
        %v1554 = vpop.f32.mrb[0].mxu0
        %v1555 = vadd.f32 %v1376, %v1554
        %v1556 = vpop.f32.mrb[0].mxu0
        %v1557 = vadd.f32 %v1381, %v1556
        %v1558 = vpop.f32.mrb[0].mxu0
        %v1559 = vadd.f32 %v1381, %v1558
        %1560 = vmatprep.mubr.bf16.mxu0 0
        %1561 = vmatmul.mubr.bf16.gmra.mrb[0].mxu0 %v1430
        %v1562 = vpop.f32.mrb[0].mxu0
        %v1563 = vadd.f32 %v1386, %v1562
        %v1564 = vpop.f32.mrb[0].mxu0
        %v1565 = vadd.f32 %v1386, %v1564
        %v1566 = vpop.f32.mrb[0].mxu0
        %v1567 = vadd.f32 %v1391, %v1566
        %v1568 = vpop.f32.mrb[0].mxu0
        %v1569 = vadd.f32 %v1391, %v1568
        %1570 = vmatprep.mubr.bf16.mxu0 0
        %1571 = vmatmul.mubr.bf16.gmra.mrb[0].mxu0 %v1433
        %v1572 = vpop.f32.mrb[0].mxu0
        %v1573 = vadd.f32 %v1396, %v1572
        %v1574 = vpop.f32.mrb[0].mxu0
        %v1575 = vadd.f32 %v1396, %v1574
        %v1576 = vpop.f32.mrb[0].mxu0
        %v1577 = vadd.f32 %v1401, %v1576
        %v1578 = vpop.f32.mrb[0].mxu0
        %v1579 = vadd.f32 %v1401, %v1578
        %1580 = vdwg.mxu0
        %1581 = vmatprep.subr.bf16.mxu0 %v1345
        %1582 = vmatpush1.bf16.msra.mxu0 %v1344
        %1583 = vmatprep.subr.bf16.mxu0 0
        %1584 = vmatpush1.bf16.msra.mxu0 0
        %1585 = vmatprep.subr.bf16.mxu0 0
        %1586 = vmatpush1.bf16.msra.mxu0 0
        %1587 = vmatprep.subr.bf16.mxu0 0
        %1588 = vmatpush1.bf16.msra.mxu0 0
        %1589 = vmatprep.subr.bf16.mxu0 0
        %1590 = vmatpush1.bf16.msra.mxu0 0
        %1591 = vmatprep.subr.bf16.mxu0 0
        %1592 = vmatpush1.bf16.msra.mxu0 0
        %1593 = vmatprep.subr.bf16.mxu0 0
        %1594 = vmatpush1.bf16.msra.mxu0 0
        %1595 = vmatprep.subr.bf16.mxu0 0
        %1596 = vmatpush1.bf16.msra.mxu0 0
        %1597 = vmatprep.subr.bf16.mxu0 0
        %1598 = vmatpush1.bf16.msra.mxu0 0
        %1599 = vmatprep.subr.bf16.mxu0 0
        %1600 = vmatpush1.bf16.msra.mxu0 0
        %1601 = vmatprep.subr.bf16.mxu0 0
        %1602 = vmatpush1.bf16.msra.mxu0 0
        %1603 = vmatprep.subr.bf16.mxu0 0
        %1604 = vmatpush1.bf16.msra.mxu0 0
        %1605 = vmatprep.subr.bf16.mxu0 0
        %1606 = vmatpush1.bf16.msra.mxu0 0
        %1607 = vmatprep.subr.bf16.mxu0 0
        %1608 = vmatpush1.bf16.msra.mxu0 0
        %1609 = vmatprep.subr.bf16.mxu0 0
        %1610 = vmatpush1.bf16.msra.mxu0 0
        %1611 = vmatprep.subr.bf16.mxu0 0
        %1612 = vmatpush1.bf16.msra.mxu0 0
        %1613 = vmatprep.mubr.bf16.mxu0 0
        %1614 = vmatmul.mubr.bf16.gmra.mrb[0].mxu0 %v1424
        %v1615 = vpop.f32.mrb[0].mxu0
        %v1616 = vadd.f32 %v1366, %v1615
        %v1617 = vpop.f32.mrb[0].mxu0
        %v1618 = vadd.f32 %v1366, %v1617
        %v1619 = vpop.f32.mrb[0].mxu0
        %v1620 = vadd.f32 %v1371, %v1619
        %v1621 = vpop.f32.mrb[0].mxu0
        %v1622 = vadd.f32 %v1371, %v1621
        %1623 = vmatprep.mubr.bf16.mxu0 0
        %1624 = vmatmul.mubr.bf16.gmra.mrb[0].mxu0 %v1427
        %v1625 = vpop.f32.mrb[0].mxu0
        %v1626 = vadd.f32 %v1376, %v1625
        %v1627 = vpop.f32.mrb[0].mxu0
        %v1628 = vadd.f32 %v1376, %v1627
        %v1629 = vpop.f32.mrb[0].mxu0
        %v1630 = vadd.f32 %v1381, %v1629
        %v1631 = vpop.f32.mrb[0].mxu0
        %v1632 = vadd.f32 %v1381, %v1631
        %1633 = vmatprep.mubr.bf16.mxu0 0
        %1634 = vmatmul.mubr.bf16.gmra.mrb[0].mxu0 %v1430
        %v1635 = vpop.f32.mrb[0].mxu0
        %v1636 = vadd.f32 %v1386, %v1635
        %v1637 = vpop.f32.mrb[0].mxu0
        %v1638 = vadd.f32 %v1386, %v1637
        %v1639 = vpop.f32.mrb[0].mxu0
        %v1640 = vadd.f32 %v1391, %v1639
        %v1641 = vpop.f32.mrb[0].mxu0
        %v1642 = vadd.f32 %v1391, %v1641
        %1643 = vmatprep.mubr.bf16.mxu0 0
        %1644 = vmatmul.mubr.bf16.gmra.mrb[0].mxu0 %v1433
        %v1645 = vpop.f32.mrb[0].mxu0
        %v1646 = vadd.f32 %v1396, %v1645
        %v1647 = vpop.f32.mrb[0].mxu0
        %v1648 = vadd.f32 %v1396, %v1647
        %v1649 = vpop.f32.mrb[0].mxu0
        %v1650 = vadd.f32 %v1401, %v1649
        %v1651 = vpop.f32.mrb[0].mxu0
        %v1652 = vadd.f32 %v1401, %v1651
        %1653 = vdwg.mxu0
        %1654 = vmatprep.subr.bf16.mxu0 0
        %1655 = vmatpush1.bf16.msra.mxu0 %v1346
        %1656 = vmatprep.subr.bf16.mxu0 0
        %1657 = vmatpush1.bf16.msra.mxu0 0
        %1658 = vmatprep.subr.bf16.mxu0 0
        %1659 = vmatpush1.bf16.msra.mxu0 0
        %1660 = vmatprep.subr.bf16.mxu0 0
        %1661 = vmatpush1.bf16.msra.mxu0 0
        %1662 = vmatprep.subr.bf16.mxu0 0
        %1663 = vmatpush1.bf16.msra.mxu0 0
        %1664 = vmatprep.subr.bf16.mxu0 0
        %1665 = vmatpush1.bf16.msra.mxu0 0
        %1666 = vmatprep.subr.bf16.mxu0 0
        %1667 = vmatpush1.bf16.msra.mxu0 0
        %1668 = vmatprep.subr.bf16.mxu0 0
        %1669 = vmatpush1.bf16.msra.mxu0 0
        %1670 = vmatprep.subr.bf16.mxu0 0
        %1671 = vmatpush1.bf16.msra.mxu0 0
        %1672 = vmatprep.subr.bf16.mxu0 0
        %1673 = vmatpush1.bf16.msra.mxu0 0
        %1674 = vmatprep.subr.bf16.mxu0 0
        %1675 = vmatpush1.bf16.msra.mxu0 0
        %1676 = vmatprep.subr.bf16.mxu0 0
        %1677 = vmatpush1.bf16.msra.mxu0 0
        %1678 = vmatprep.subr.bf16.mxu0 0
        %1679 = vmatpush1.bf16.msra.mxu0 0
        %1680 = vmatprep.subr.bf16.mxu0 0
        %1681 = vmatpush1.bf16.msra.mxu0 0
        %1682 = vmatprep.subr.bf16.mxu0 0
        %1683 = vmatpush1.bf16.msra.mxu0 0
        %1684 = vmatprep.subr.bf16.mxu0 0
        %1685 = vmatpush1.bf16.msra.mxu0 0
        %1686 = vmatprep.mubr.bf16.mxu0 0
        %1687 = vmatmul.mubr.bf16.gmra.mrb[0].mxu0 %v1424
        %v1688 = vpop.f32.mrb[0].mxu0
        %v1689 = vadd.f32 %v1366, %v1688
        %v1690 = vpop.f32.mrb[0].mxu0
        %v1691 = vpop.f32.mrb[0].mxu0
        %v1692 = vadd.f32 %v1371, %v1691
        %v1693 = vpop.f32.mrb[0].mxu0
        %1694 = vmatprep.mubr.bf16.mxu0 0
        %1695 = vmatmul.mubr.bf16.gmra.mrb[0].mxu0 %v1427
        %v1696 = vpop.f32.mrb[0].mxu0
        %v1697 = vadd.f32 %v1376, %v1696
        %v1698 = vpop.f32.mrb[0].mxu0
        %v1699 = vpop.f32.mrb[0].mxu0
        %v1700 = vadd.f32 %v1381, %v1699
        %v1701 = vpop.f32.mrb[0].mxu0
        %1702 = vmatprep.mubr.bf16.mxu0 0
        %1703 = vmatmul.mubr.bf16.gmra.mrb[0].mxu0 %v1430
        %v1704 = vpop.f32.mrb[0].mxu0
        %v1705 = vadd.f32 %v1386, %v1704
        %v1706 = vpop.f32.mrb[0].mxu0
        %v1707 = vpop.f32.mrb[0].mxu0
        %v1708 = vadd.f32 %v1391, %v1707
        %v1709 = vpop.f32.mrb[0].mxu0
        %1710 = vmatprep.mubr.bf16.mxu0 0
        %1711 = vmatmul.mubr.bf16.gmra.mrb[0].mxu0 %v1433
        %v1712 = vpop.f32.mrb[0].mxu0
        %v1713 = vadd.f32 %v1396, %v1712
        %v1714 = vpop.f32.mrb[0].mxu0
        %v1715 = vpop.f32.mrb[0].mxu0
        %v1716 = vadd.f32 %v1401, %v1715
        %v1717 = vpop.f32.mrb[0].mxu0
        %1718 = vdwg.mxu0
        %v1719 = vmax.f32 %v1470, 0.0
        %v1720 = vmax.f32 %v1472, 0.0
        %v1721 = vmax.f32 %v1543, 0.0
        %v1722 = vmax.f32 %v1545, 0.0
        %v1723 = vmax.f32 %v1616, 0.0
        %v1724 = vmax.f32 %v1618, 0.0
        %v1725 = vmax.f32 %v1689, 0.0
        %v1726 = vmax.f32 %v1474, 0.0
        %v1727 = vmax.f32 %v1476, 0.0
        %v1728 = vmax.f32 %v1547, 0.0
        %v1729 = vmax.f32 %v1549, 0.0
        %v1730 = vmax.f32 %v1620, 0.0
        %v1731 = vmax.f32 %v1622, 0.0
        %v1732 = vmax.f32 %v1692, 0.0
        %v1733 = vmax.f32 %v1480, 0.0
        %v1734 = vmax.f32 %v1482, 0.0
        %v1735 = vmax.f32 %v1553, 0.0
        %v1736 = vmax.f32 %v1555, 0.0
        %v1737 = vmax.f32 %v1626, 0.0
        %v1738 = vmax.f32 %v1628, 0.0
        %v1739 = vmax.f32 %v1697, 0.0
        %v1740 = vmax.f32 %v1484, 0.0
        %v1741 = vmax.f32 %v1486, 0.0
        %v1742 = vmax.f32 %v1557, 0.0
        %v1743 = vmax.f32 %v1559, 0.0
        %v1744 = vmax.f32 %v1630, 0.0
        %v1745 = vmax.f32 %v1632, 0.0
        %v1746 = vmax.f32 %v1700, 0.0
        %v1747 = vmax.f32 %v1490, 0.0
        %v1748 = vmax.f32 %v1492, 0.0
        %v1749 = vmax.f32 %v1563, 0.0
        %v1750 = vmax.f32 %v1565, 0.0
        %v1751 = vmax.f32 %v1636, 0.0
        %v1752 = vmax.f32 %v1638, 0.0
        %v1753 = vmax.f32 %v1705, 0.0
        %v1754 = vmax.f32 %v1494, 0.0
        %v1755 = vmax.f32 %v1496, 0.0
        %v1756 = vmax.f32 %v1567, 0.0
        %v1757 = vmax.f32 %v1569, 0.0
        %v1758 = vmax.f32 %v1640, 0.0
        %v1759 = vmax.f32 %v1642, 0.0
        %v1760 = vmax.f32 %v1708, 0.0
        %v1761 = vmax.f32 %v1500, 0.0
        %v1762 = vmax.f32 %v1502, 0.0
        %v1763 = vmax.f32 %v1573, 0.0
        %v1764 = vmax.f32 %v1575, 0.0
        %v1765 = vmax.f32 %v1646, 0.0
        %v1766 = vmax.f32 %v1648, 0.0
        %v1767 = vmax.f32 %v1713, 0.0
        %v1768 = vmax.f32 %v1504, 0.0
        %v1769 = vmax.f32 %v1506, 0.0
        %v1770 = vmax.f32 %v1577, 0.0
        %v1771 = vmax.f32 %v1579, 0.0
        %v1772 = vmax.f32 %v1650, 0.0
        %v1773 = vmax.f32 %v1652, 0.0
        %v1774 = vmax.f32 %v1716, 0.0
        %1831 = vrot.lane.b32.xlu0 %v1719, 100
        %v1832 = vpop.permute.xlu0 %1831
        %1833 = vrot.lane.b32.xlu0 %v1720, 100
        %v1834 = vpop.permute.xlu0 %1833
        %1835 = vrot.lane.b32.xlu0 %v1721, 100
        %v1836 = vpop.permute.xlu0 %1835
        %1837 = vrot.lane.b32.xlu0 %v1722, 100
        %v1838 = vpop.permute.xlu0 %1837
        %1839 = vrot.lane.b32.xlu0 %v1723, 100
        %v1840 = vpop.permute.xlu0 %1839
        %1841 = vrot.lane.b32.xlu0 %v1724, 100
        %v1842 = vpop.permute.xlu0 %1841
        %1843 = vrot.lane.b32.xlu0 %v1725, 100
        %v1844 = vpop.permute.xlu0 %1843
        %1845 = vrot.lane.b32.xlu0 %v1726, 100
        %v1846 = vpop.permute.xlu0 %1845
        %1847 = vrot.lane.b32.xlu0 %v1727, 100
        %v1848 = vpop.permute.xlu0 %1847
        %1849 = vrot.lane.b32.xlu0 %v1728, 100
        %v1850 = vpop.permute.xlu0 %1849
        %1851 = vrot.lane.b32.xlu0 %v1729, 100
        %v1852 = vpop.permute.xlu0 %1851
        %1853 = vrot.lane.b32.xlu0 %v1730, 100
        %v1854 = vpop.permute.xlu0 %1853
        %1855 = vrot.lane.b32.xlu0 %v1731, 100
        %v1856 = vpop.permute.xlu0 %1855
        %1857 = vrot.lane.b32.xlu0 %v1732, 100
        %v1858 = vpop.permute.xlu0 %1857
        %1859 = vrot.lane.b32.xlu0 %v1733, 100
        %v1860 = vpop.permute.xlu0 %1859
        %1861 = vrot.lane.b32.xlu0 %v1734, 100
        %v1862 = vpop.permute.xlu0 %1861
        %1863 = vrot.lane.b32.xlu0 %v1735, 100
        %v1864 = vpop.permute.xlu0 %1863
        %1865 = vrot.lane.b32.xlu0 %v1736, 100
        %v1866 = vpop.permute.xlu0 %1865
        %1867 = vrot.lane.b32.xlu0 %v1737, 100
        %v1868 = vpop.permute.xlu0 %1867
        %1869 = vrot.lane.b32.xlu0 %v1738, 100
        %v1870 = vpop.permute.xlu0 %1869
        %1871 = vrot.lane.b32.xlu0 %v1739, 100
        %v1872 = vpop.permute.xlu0 %1871
        %1873 = vrot.lane.b32.xlu0 %v1740, 100
        %v1874 = vpop.permute.xlu0 %1873
        %1875 = vrot.lane.b32.xlu0 %v1741, 100
        %v1876 = vpop.permute.xlu0 %1875
        %1877 = vrot.lane.b32.xlu0 %v1742, 100
        %v1878 = vpop.permute.xlu0 %1877
        %1879 = vrot.lane.b32.xlu0 %v1743, 100
        %v1880 = vpop.permute.xlu0 %1879
        %1881 = vrot.lane.b32.xlu0 %v1744, 100
        %v1882 = vpop.permute.xlu0 %1881
        %1883 = vrot.lane.b32.xlu0 %v1745, 100
        %v1884 = vpop.permute.xlu0 %1883
        %1885 = vrot.lane.b32.xlu0 %v1746, 100
        %v1886 = vpop.permute.xlu0 %1885
        %1887 = vrot.lane.b32.xlu0 %v1747, 100
        %v1888 = vpop.permute.xlu0 %1887
        %1889 = vrot.lane.b32.xlu0 %v1748, 100
        %v1890 = vpop.permute.xlu0 %1889
        %1891 = vrot.lane.b32.xlu0 %v1749, 100
        %v1892 = vpop.permute.xlu0 %1891
        %1893 = vrot.lane.b32.xlu0 %v1750, 100
        %v1894 = vpop.permute.xlu0 %1893
        %1895 = vrot.lane.b32.xlu0 %v1751, 100
        %v1896 = vpop.permute.xlu0 %1895
        %1897 = vrot.lane.b32.xlu0 %v1752, 100
        %v1898 = vpop.permute.xlu0 %1897
        %1899 = vrot.lane.b32.xlu0 %v1753, 100
        %v1900 = vpop.permute.xlu0 %1899
        %1901 = vrot.lane.b32.xlu0 %v1754, 100
        %v1902 = vpop.permute.xlu0 %1901
        %1903 = vrot.lane.b32.xlu0 %v1755, 100
        %v1904 = vpop.permute.xlu0 %1903
        %1905 = vrot.lane.b32.xlu0 %v1756, 100
        %v1906 = vpop.permute.xlu0 %1905
        %1907 = vrot.lane.b32.xlu0 %v1757, 100
        %v1908 = vpop.permute.xlu0 %1907
        %1909 = vrot.lane.b32.xlu0 %v1758, 100
        %v1910 = vpop.permute.xlu0 %1909
        %1911 = vrot.lane.b32.xlu0 %v1759, 100
        %v1912 = vpop.permute.xlu0 %1911
        %1913 = vrot.lane.b32.xlu0 %v1760, 100
        %v1914 = vpop.permute.xlu0 %1913
        %1915 = vrot.lane.b32.xlu0 %v1761, 100
        %v1916 = vpop.permute.xlu0 %1915
        %1917 = vrot.lane.b32.xlu0 %v1762, 100
        %v1918 = vpop.permute.xlu0 %1917
        %1919 = vrot.lane.b32.xlu0 %v1763, 100
        %v1920 = vpop.permute.xlu0 %1919
        %1921 = vrot.lane.b32.xlu0 %v1764, 100
        %v1922 = vpop.permute.xlu0 %1921
        %1923 = vrot.lane.b32.xlu0 %v1765, 100
        %v1924 = vpop.permute.xlu0 %1923
        %1925 = vrot.lane.b32.xlu0 %v1766, 100
        %v1926 = vpop.permute.xlu0 %1925
        %1927 = vrot.lane.b32.xlu0 %v1767, 100
        %v1928 = vpop.permute.xlu0 %1927
        %1929 = vrot.lane.b32.xlu0 %v1768, 100
        %v1930 = vpop.permute.xlu0 %1929
        %1931 = vrot.lane.b32.xlu0 %v1769, 100
        %v1932 = vpop.permute.xlu0 %1931
        %1933 = vrot.lane.b32.xlu0 %v1770, 100
        %v1934 = vpop.permute.xlu0 %1933
        %1935 = vrot.lane.b32.xlu0 %v1771, 100
        %v1936 = vpop.permute.xlu0 %1935
        %1937 = vrot.lane.b32.xlu0 %v1772, 100
        %v1938 = vpop.permute.xlu0 %1937
        %1939 = vrot.lane.b32.xlu0 %v1773, 100
        %v1940 = vpop.permute.xlu0 %1939
        %1941 = vrot.lane.b32.xlu0 %v1774, 100
        %v1942 = vpop.permute.xlu0 %1941
        %v1943 = vsel %vm716, %v1832, %v1834
        %v1944 = vsel %vm716, %v1834, %v1836
        %v1945 = vsel %vm716, %v1836, %v1838
        %v1946 = vsel %vm716, %v1838, %v1840
        %v1947 = vsel %vm716, %v1840, %v1842
        %v1948 = vsel %vm716, %v1842, %v1844
        %v1949 = vsel %vm716, %v1846, %v1848
        %v1950 = vsel %vm716, %v1848, %v1850
        %v1951 = vsel %vm716, %v1850, %v1852
        %v1952 = vsel %vm716, %v1852, %v1854
        %v1953 = vsel %vm716, %v1854, %v1856
        %v1954 = vsel %vm716, %v1856, %v1858
        %v1955 = vsel %vm716, %v1860, %v1862
        %v1956 = vsel %vm716, %v1862, %v1864
        %v1957 = vsel %vm716, %v1864, %v1866
        %v1958 = vsel %vm716, %v1866, %v1868
        %v1959 = vsel %vm716, %v1868, %v1870
        %v1960 = vsel %vm716, %v1870, %v1872
        %v1961 = vsel %vm716, %v1874, %v1876
        %v1962 = vsel %vm716, %v1876, %v1878
        %v1963 = vsel %vm716, %v1878, %v1880
        %v1964 = vsel %vm716, %v1880, %v1882
        %v1965 = vsel %vm716, %v1882, %v1884
        %v1966 = vsel %vm716, %v1884, %v1886
        %v1967 = vsel %vm716, %v1888, %v1890
        %v1968 = vsel %vm716, %v1890, %v1892
        %v1969 = vsel %vm716, %v1892, %v1894
        %v1970 = vsel %vm716, %v1894, %v1896
        %v1971 = vsel %vm716, %v1896, %v1898
        %v1972 = vsel %vm716, %v1898, %v1900
        %v1973 = vsel %vm716, %v1902, %v1904
        %v1974 = vsel %vm716, %v1904, %v1906
        %v1975 = vsel %vm716, %v1906, %v1908
        %v1976 = vsel %vm716, %v1908, %v1910
        %v1977 = vsel %vm716, %v1910, %v1912
        %v1978 = vsel %vm716, %v1912, %v1914
        %v1979 = vsel %vm716, %v1916, %v1918
        %v1980 = vsel %vm716, %v1918, %v1920
        %v1981 = vsel %vm716, %v1920, %v1922
        %v1982 = vsel %vm716, %v1922, %v1924
        %v1983 = vsel %vm716, %v1924, %v1926
        %v1984 = vsel %vm716, %v1926, %v1928
        %v1985 = vsel %vm716, %v1930, %v1932
        %v1986 = vsel %vm716, %v1932, %v1934
        %v1987 = vsel %vm716, %v1934, %v1936
        %v1988 = vsel %vm716, %v1936, %v1938
        %v1989 = vsel %vm716, %v1938, %v1940
        %v1990 = vsel %vm716, %v1940, %v1942
        %v2039 = vmax.f32 %v1719, %v1943
        %v2040 = vmax.f32 %v1720, %v1944
        %v2041 = vmax.f32 %v1721, %v1945
        %v2042 = vmax.f32 %v1722, %v1946
        %v2043 = vmax.f32 %v1723, %v1947
        %v2044 = vmax.f32 %v1724, %v1948
        %v2045 = vmax.f32 %v1726, %v1949
        %v2046 = vmax.f32 %v1727, %v1950
        %v2047 = vmax.f32 %v1728, %v1951
        %v2048 = vmax.f32 %v1729, %v1952
        %v2049 = vmax.f32 %v1730, %v1953
        %v2050 = vmax.f32 %v1731, %v1954
        %v2051 = vmax.f32 %v1733, %v1955
        %v2052 = vmax.f32 %v1734, %v1956
        %v2053 = vmax.f32 %v1735, %v1957
        %v2054 = vmax.f32 %v1736, %v1958
        %v2055 = vmax.f32 %v1737, %v1959
        %v2056 = vmax.f32 %v1738, %v1960
        %v2057 = vmax.f32 %v1740, %v1961
        %v2058 = vmax.f32 %v1741, %v1962
        %v2059 = vmax.f32 %v1742, %v1963
        %v2060 = vmax.f32 %v1743, %v1964
        %v2061 = vmax.f32 %v1744, %v1965
        %v2062 = vmax.f32 %v1745, %v1966
        %v2063 = vmax.f32 %v1747, %v1967
        %v2064 = vmax.f32 %v1748, %v1968
        %v2065 = vmax.f32 %v1749, %v1969
        %v2066 = vmax.f32 %v1750, %v1970
        %v2067 = vmax.f32 %v1751, %v1971
        %v2068 = vmax.f32 %v1752, %v1972
        %v2069 = vmax.f32 %v1754, %v1973
        %v2070 = vmax.f32 %v1755, %v1974
        %v2071 = vmax.f32 %v1756, %v1975
        %v2072 = vmax.f32 %v1757, %v1976
        %v2073 = vmax.f32 %v1758, %v1977
        %v2074 = vmax.f32 %v1759, %v1978
        %v2075 = vmax.f32 %v1761, %v1979
        %v2076 = vmax.f32 %v1762, %v1980
        %v2077 = vmax.f32 %v1763, %v1981
        %v2078 = vmax.f32 %v1764, %v1982
        %v2079 = vmax.f32 %v1765, %v1983
        %v2080 = vmax.f32 %v1766, %v1984
        %v2081 = vmax.f32 %v1768, %v1985
        %v2082 = vmax.f32 %v1769, %v1986
        %v2083 = vmax.f32 %v1770, %v1987
        %v2084 = vmax.f32 %v1771, %v1988
        %v2085 = vmax.f32 %v1772, %v1989
        %v2086 = vmax.f32 %v1773, %v1990
        %2135 = vrot.lane.b32.xlu0 %v2039, 127
        %v2136 = vpop.permute.xlu0 %2135
        %2137 = vrot.lane.b32.xlu0 %v2040, 127
        %v2138 = vpop.permute.xlu0 %2137
        %2139 = vrot.lane.b32.xlu0 %v2041, 127
        %v2140 = vpop.permute.xlu0 %2139
        %2141 = vrot.lane.b32.xlu0 %v2042, 127
        %v2142 = vpop.permute.xlu0 %2141
        %2143 = vrot.lane.b32.xlu0 %v2043, 127
        %v2144 = vpop.permute.xlu0 %2143
        %2145 = vrot.lane.b32.xlu0 %v2044, 127
        %v2146 = vpop.permute.xlu0 %2145
        %2147 = vrot.lane.b32.xlu0 %v2045, 127
        %v2148 = vpop.permute.xlu0 %2147
        %2149 = vrot.lane.b32.xlu0 %v2046, 127
        %v2150 = vpop.permute.xlu0 %2149
        %2151 = vrot.lane.b32.xlu0 %v2047, 127
        %v2152 = vpop.permute.xlu0 %2151
        %2153 = vrot.lane.b32.xlu0 %v2048, 127
        %v2154 = vpop.permute.xlu0 %2153
        %2155 = vrot.lane.b32.xlu0 %v2049, 127
        %v2156 = vpop.permute.xlu0 %2155
        %2157 = vrot.lane.b32.xlu0 %v2050, 127
        %v2158 = vpop.permute.xlu0 %2157
        %2159 = vrot.lane.b32.xlu0 %v2051, 127
        %v2160 = vpop.permute.xlu0 %2159
        %2161 = vrot.lane.b32.xlu0 %v2052, 127
        %v2162 = vpop.permute.xlu0 %2161
        %2163 = vrot.lane.b32.xlu0 %v2053, 127
        %v2164 = vpop.permute.xlu0 %2163
        %2165 = vrot.lane.b32.xlu0 %v2054, 127
        %v2166 = vpop.permute.xlu0 %2165
        %2167 = vrot.lane.b32.xlu0 %v2055, 127
        %v2168 = vpop.permute.xlu0 %2167
        %2169 = vrot.lane.b32.xlu0 %v2056, 127
        %v2170 = vpop.permute.xlu0 %2169
        %2171 = vrot.lane.b32.xlu0 %v2057, 127
        %v2172 = vpop.permute.xlu0 %2171
        %2173 = vrot.lane.b32.xlu0 %v2058, 127
        %v2174 = vpop.permute.xlu0 %2173
        %2175 = vrot.lane.b32.xlu0 %v2059, 127
        %v2176 = vpop.permute.xlu0 %2175
        %2177 = vrot.lane.b32.xlu0 %v2060, 127
        %v2178 = vpop.permute.xlu0 %2177
        %2179 = vrot.lane.b32.xlu0 %v2061, 127
        %v2180 = vpop.permute.xlu0 %2179
        %2181 = vrot.lane.b32.xlu0 %v2062, 127
        %v2182 = vpop.permute.xlu0 %2181
        %2183 = vrot.lane.b32.xlu0 %v2063, 127
        %v2184 = vpop.permute.xlu0 %2183
        %2185 = vrot.lane.b32.xlu0 %v2064, 127
        %v2186 = vpop.permute.xlu0 %2185
        %2187 = vrot.lane.b32.xlu0 %v2065, 127
        %v2188 = vpop.permute.xlu0 %2187
        %2189 = vrot.lane.b32.xlu0 %v2066, 127
        %v2190 = vpop.permute.xlu0 %2189
        %2191 = vrot.lane.b32.xlu0 %v2067, 127
        %v2192 = vpop.permute.xlu0 %2191
        %2193 = vrot.lane.b32.xlu0 %v2068, 127
        %v2194 = vpop.permute.xlu0 %2193
        %2195 = vrot.lane.b32.xlu0 %v2069, 127
        %v2196 = vpop.permute.xlu0 %2195
        %2197 = vrot.lane.b32.xlu0 %v2070, 127
        %v2198 = vpop.permute.xlu0 %2197
        %2199 = vrot.lane.b32.xlu0 %v2071, 127
        %v2200 = vpop.permute.xlu0 %2199
        %2201 = vrot.lane.b32.xlu0 %v2072, 127
        %v2202 = vpop.permute.xlu0 %2201
        %2203 = vrot.lane.b32.xlu0 %v2073, 127
        %v2204 = vpop.permute.xlu0 %2203
        %2205 = vrot.lane.b32.xlu0 %v2074, 127
        %v2206 = vpop.permute.xlu0 %2205
        %2207 = vrot.lane.b32.xlu0 %v2075, 127
        %v2208 = vpop.permute.xlu0 %2207
        %2209 = vrot.lane.b32.xlu0 %v2076, 127
        %v2210 = vpop.permute.xlu0 %2209
        %2211 = vrot.lane.b32.xlu0 %v2077, 127
        %v2212 = vpop.permute.xlu0 %2211
        %2213 = vrot.lane.b32.xlu0 %v2078, 127
        %v2214 = vpop.permute.xlu0 %2213
        %2215 = vrot.lane.b32.xlu0 %v2079, 127
        %v2216 = vpop.permute.xlu0 %2215
        %2217 = vrot.lane.b32.xlu0 %v2080, 127
        %v2218 = vpop.permute.xlu0 %2217
        %2219 = vrot.lane.b32.xlu0 %v2081, 127
        %v2220 = vpop.permute.xlu0 %2219
        %2221 = vrot.lane.b32.xlu0 %v2082, 127
        %v2222 = vpop.permute.xlu0 %2221
        %2223 = vrot.lane.b32.xlu0 %v2083, 127
        %v2224 = vpop.permute.xlu0 %2223
        %2225 = vrot.lane.b32.xlu0 %v2084, 127
        %v2226 = vpop.permute.xlu0 %2225
        %2227 = vrot.lane.b32.xlu0 %v2085, 127
        %v2228 = vpop.permute.xlu0 %2227
        %2229 = vrot.lane.b32.xlu0 %v2086, 127
        %v2230 = vpop.permute.xlu0 %2229
        %v2231 = vsel %vm625, %v2136, %v2138
        %v2232 = vsel %vm625, %v2138, %v2140
        %v2233 = vsel %vm625, %v2140, %v2142
        %v2234 = vsel %vm625, %v2142, %v2144
        %v2235 = vsel %vm625, %v2144, %v2146
        %v2236 = vsel %vm625, %v2148, %v2150
        %v2237 = vsel %vm625, %v2150, %v2152
        %v2238 = vsel %vm625, %v2152, %v2154
        %v2239 = vsel %vm625, %v2154, %v2156
        %v2240 = vsel %vm625, %v2156, %v2158
        %v2241 = vsel %vm625, %v2160, %v2162
        %v2242 = vsel %vm625, %v2162, %v2164
        %v2243 = vsel %vm625, %v2164, %v2166
        %v2244 = vsel %vm625, %v2166, %v2168
        %v2245 = vsel %vm625, %v2168, %v2170
        %v2246 = vsel %vm625, %v2172, %v2174
        %v2247 = vsel %vm625, %v2174, %v2176
        %v2248 = vsel %vm625, %v2176, %v2178
        %v2249 = vsel %vm625, %v2178, %v2180
        %v2250 = vsel %vm625, %v2180, %v2182
        %v2251 = vsel %vm625, %v2184, %v2186
        %v2252 = vsel %vm625, %v2186, %v2188
        %v2253 = vsel %vm625, %v2188, %v2190
        %v2254 = vsel %vm625, %v2190, %v2192
        %v2255 = vsel %vm625, %v2192, %v2194
        %v2256 = vsel %vm625, %v2196, %v2198
        %v2257 = vsel %vm625, %v2198, %v2200
        %v2258 = vsel %vm625, %v2200, %v2202
        %v2259 = vsel %vm625, %v2202, %v2204
        %v2260 = vsel %vm625, %v2204, %v2206
        %v2261 = vsel %vm625, %v2208, %v2210
        %v2262 = vsel %vm625, %v2210, %v2212
        %v2263 = vsel %vm625, %v2212, %v2214
        %v2264 = vsel %vm625, %v2214, %v2216
        %v2265 = vsel %vm625, %v2216, %v2218
        %v2266 = vsel %vm625, %v2220, %v2222
        %v2267 = vsel %vm625, %v2222, %v2224
        %v2268 = vsel %vm625, %v2224, %v2226
        %v2269 = vsel %vm625, %v2226, %v2228
        %v2270 = vsel %vm625, %v2228, %v2230
        %v2319 = vmax.f32 %v2039, %v2231
        %v2320 = vmax.f32 %v2040, %v2232
        %v2321 = vmax.f32 %v2041, %v2233
        %v2322 = vmax.f32 %v2042, %v2234
        %v2323 = vmax.f32 %v2043, %v2235
        %v2324 = vmax.f32 %v2044, %v2146
        %v2325 = vmax.f32 %v2045, %v2236
        %v2326 = vmax.f32 %v2046, %v2237
        %v2327 = vmax.f32 %v2047, %v2238
        %v2328 = vmax.f32 %v2048, %v2239
        %v2329 = vmax.f32 %v2049, %v2240
        %v2330 = vmax.f32 %v2050, %v2158
        %v2331 = vmax.f32 %v2051, %v2241
        %v2332 = vmax.f32 %v2052, %v2242
        %v2333 = vmax.f32 %v2053, %v2243
        %v2334 = vmax.f32 %v2054, %v2244
        %v2335 = vmax.f32 %v2055, %v2245
        %v2336 = vmax.f32 %v2056, %v2170
        %v2337 = vmax.f32 %v2057, %v2246
        %v2338 = vmax.f32 %v2058, %v2247
        %v2339 = vmax.f32 %v2059, %v2248
        %v2340 = vmax.f32 %v2060, %v2249
        %v2341 = vmax.f32 %v2061, %v2250
        %v2342 = vmax.f32 %v2062, %v2182
        %v2343 = vmax.f32 %v2063, %v2251
        %v2344 = vmax.f32 %v2064, %v2252
        %v2345 = vmax.f32 %v2065, %v2253
        %v2346 = vmax.f32 %v2066, %v2254
        %v2347 = vmax.f32 %v2067, %v2255
        %v2348 = vmax.f32 %v2068, %v2194
        %v2349 = vmax.f32 %v2069, %v2256
        %v2350 = vmax.f32 %v2070, %v2257
        %v2351 = vmax.f32 %v2071, %v2258
        %v2352 = vmax.f32 %v2072, %v2259
        %v2353 = vmax.f32 %v2073, %v2260
        %v2354 = vmax.f32 %v2074, %v2206
        %v2355 = vmax.f32 %v2075, %v2261
        %v2356 = vmax.f32 %v2076, %v2262
        %v2357 = vmax.f32 %v2077, %v2263
        %v2358 = vmax.f32 %v2078, %v2264
        %v2359 = vmax.f32 %v2079, %v2265
        %v2360 = vmax.f32 %v2080, %v2218
        %v2361 = vmax.f32 %v2081, %v2266
        %v2362 = vmax.f32 %v2082, %v2267
        %v2363 = vmax.f32 %v2083, %v2268
        %v2364 = vmax.f32 %v2084, %v2269
        %v2365 = vmax.f32 %v2085, %v2270
        %v2366 = vmax.f32 %v2086, %v2230
        %v2367 = vpack.c.bf16 %v2325, %v2319
        %v2368 = vpack.c.bf16 %v2326, %v2320
        %v2369 = vpack.c.bf16 %v2327, %v2321
        %v2370 = vpack.c.bf16 %v2328, %v2322
        %v2371 = vpack.c.bf16 %v2329, %v2323
        %v2372 = vpack.c.bf16 %v2330, %v2324
        %v2373 = vpack.c.bf16 %v2337, %v2331
        %v2374 = vpack.c.bf16 %v2338, %v2332
        %v2375 = vpack.c.bf16 %v2339, %v2333
        %v2376 = vpack.c.bf16 %v2340, %v2334
        %v2377 = vpack.c.bf16 %v2341, %v2335
        %v2378 = vpack.c.bf16 %v2342, %v2336
        %v2379 = vpack.c.bf16 %v2349, %v2343
        %v2380 = vpack.c.bf16 %v2350, %v2344
        %v2381 = vpack.c.bf16 %v2351, %v2345
        %v2382 = vpack.c.bf16 %v2352, %v2346
        %v2383 = vpack.c.bf16 %v2353, %v2347
        %v2384 = vpack.c.bf16 %v2354, %v2348
        %v2385 = vpack.c.bf16 %v2361, %v2355
        %v2386 = vpack.c.bf16 %v2362, %v2356
        %v2387 = vpack.c.bf16 %v2363, %v2357
        %v2388 = vpack.c.bf16 %v2364, %v2358
        %v2389 = vpack.c.bf16 %v2365, %v2359
        %v2390 = vpack.c.bf16 %v2366, %v2360
        %v2391 = vld [vmem:[%s9] sm:$0xff]
        %v2392 = vld [vmem:[%s9 + $0x8] sm:$0xff]
        %v2393 = vld [vmem:[%s9 + $0x10] sm:$0xff]
        %v2394 = vld [vmem:[%s9 + $0x18] sm:$0xff]
        %v2395 = vld [vmem:[%s9 + $0x20] sm:$0xff]
        %v2396 = vld [vmem:[%s9 + $0x28] sm:$0xff]
        %v2397 = vld [vmem:[%s9 + $0x30] sm:$0xff]
        %v2398 = vld [vmem:[%s9 + $0x38] sm:$0xff]
        %v2399 = vld [vmem:[%s9 + $0x40] sm:$0xff]
        %v2400 = vld [vmem:[%s9 + $0x48] sm:$0xff]
        %v2401 = vld [vmem:[%s9 + $0x50] sm:$0xff]
        %v2402 = vld [vmem:[%s9 + $0x58] sm:$0xff]
        %v2403 = vld [vmem:[%s9 + $0x60] sm:$0xff]
        %v2404 = vld [vmem:[%s9 + $0x68] sm:$0xff]
        %v2405 = vld [vmem:[%s9 + $0x70] sm:$0xff]
        %v2406 = vld [vmem:[%s9 + $0x78] sm:$0xff]
        %v2407 = vld [vmem:[%s9 + $0x80] sm:$0xff]
        %v2408 = vld [vmem:[%s9 + $0x88] sm:$0xff]
        %v2409 = vld [vmem:[%s9 + $0x90] sm:$0xff]
        %v2410 = vld [vmem:[%s9 + $0x98] sm:$0xff]
        %v2411 = vld [vmem:[%s9 + $0xa0] sm:$0xff]
        %v2412 = vld [vmem:[%s9 + $0xa8] sm:$0xff]
        %v2413 = vld [vmem:[%s9 + $0xb0] sm:$0xff]
        %v2414 = vld [vmem:[%s9 + $0xb8] sm:$0xff]
        %v2415 = vld [vmem:[%s9 + $0xc0] sm:$0xff]
        %v2416 = vld [vmem:[%s9 + $0xc8] sm:$0xff]
        %v2417 = vld [vmem:[%s9 + $0xd0] sm:$0xff]
        %v2418 = vld [vmem:[%s9 + $0xd8] sm:$0xff]
        %v2419 = vld [vmem:[%s9 + $0xe0] sm:$0xff]
        %v2420 = vld [vmem:[%s9 + $0xe8] sm:$0xff]
        %v2421 = vld [vmem:[%s9 + $0xf0] sm:$0xff]
        %v2422 = vld [vmem:[%s9 + $0xf8] sm:$0xff]
        %v2423 = vld [vmem:[%s9 + $0x100] sm:$0xff]
        %v2424 = vld [vmem:[%s9 + $0x108] sm:$0xff]
        %v2425 = vld [vmem:[%s9 + $0x110] sm:$0xff]
        %v2426 = vld [vmem:[%s9 + $0x118] sm:$0xff]
        %v2427 = vld [vmem:[%s9 + $0x120] sm:$0xff]
        %v2428 = vld [vmem:[%s9 + $0x128] sm:$0xff]
        %v2429 = vld [vmem:[%s9 + $0x130] sm:$0xff]
        %v2430 = vld [vmem:[%s9 + $0x138] sm:$0xff]
        %v2431 = vld [vmem:[%s9 + $0x140] sm:$0xff]
        %v2432 = vld [vmem:[%s9 + $0x148] sm:$0xff]
        %v2433 = vld [vmem:[%s9 + $0x150] sm:$0xff]
        %v2434 = vld [vmem:[%s9 + $0x158] sm:$0xff]
        %v2435 = vld [vmem:[%s9 + $0x160] sm:$0xff]
        %v2436 = vld [vmem:[%s9 + $0x168] sm:$0xff]
        %v2437 = vld [vmem:[%s9 + $0x170] sm:$0xff]
        %v2438 = vld [vmem:[%s9 + $0x178] sm:$0xff]
        %v2439 = vld [vmem:[%s9 + $0x180] sm:$0xff]
        %v2440 = vld [vmem:[%s9 + $0x188] sm:$0xff]
        %v2441 = vld [vmem:[%s9 + $0x190] sm:$0xff]
        %v2442 = vld [vmem:[%s9 + $0x198] sm:$0xff]
        %v2443 = vld [vmem:[%s9 + $0x1a0] sm:$0xff]
        %v2444 = vld [vmem:[%s9 + $0x1a8] sm:$0xff]
        %v2445 = vld [vmem:[%s9 + $0x1b0] sm:$0xff]
        %v2446 = vld [vmem:[%s9 + $0x1b8] sm:$0xff]
        %v2447 = vld [vmem:[%s9 + $0x1c0] sm:$0xff]
        %v2448 = vld [vmem:[%s9 + $0x1c8] sm:$0xff]
        %v2449 = vld [vmem:[%s9 + $0x1d0] sm:$0xff]
        %v2450 = vld [vmem:[%s9 + $0x1d8] sm:$0xff]
        %v2451 = vld [vmem:[%s9 + $0x1e0] sm:$0xff]
        %v2452 = vld [vmem:[%s9 + $0x1e8] sm:$0xff]
        %v2453 = vld [vmem:[%s9 + $0x1f0] sm:$0xff]
        %v2454 = vld [vmem:[%s9 + $0x1f8] sm:$0xff]
        %v2455 = vld [vmem:[%s9 + $0x200] sm:$0xff]
        %v2456 = vld [vmem:[%s9 + $0x208] sm:$0xff]
        %v2457 = vld [vmem:[%s9 + $0x210] sm:$0xff]
        %v2458 = vld [vmem:[%s9 + $0x218] sm:$0xff]
        %v2459 = vld [vmem:[%s9 + $0x220] sm:$0xff]
        %v2460 = vld [vmem:[%s9 + $0x228] sm:$0xff]
        %v2461 = vld [vmem:[%s9 + $0x230] sm:$0xff]
        %v2462 = vld [vmem:[%s9 + $0x238] sm:$0xff]
        %v2463 = vld [vmem:[%s9 + $0x240] sm:$0xff]
        %v2464 = vld [vmem:[%s9 + $0x248] sm:$0xff]
        %v2465 = vld [vmem:[%s9 + $0x250] sm:$0xff]
        %v2466 = vld [vmem:[%s9 + $0x258] sm:$0xff]
        %v2467 = vld [vmem:[%s9 + $0x260] sm:$0xff]
        %v2468 = vld [vmem:[%s9 + $0x268] sm:$0xff]
        %v2469 = vld [vmem:[%s9 + $0x270] sm:$0xff]
        %v2470 = vld [vmem:[%s9 + $0x278] sm:$0xff]
        %v2471 = vld [vmem:[%s9 + $0x280] sm:$0xff]
        %v2472 = vld [vmem:[%s9 + $0x288] sm:$0xff]
        %v2473 = vld [vmem:[%s9 + $0x290] sm:$0xff]
        %v2474 = vld [vmem:[%s9 + $0x298] sm:$0xff]
        %v2475 = vld [vmem:[%s9 + $0x2a0] sm:$0xff]
        %v2476 = vld [vmem:[%s9 + $0x2a8] sm:$0xff]
        %v2477 = vld [vmem:[%s9 + $0x2b0] sm:$0xff]
        %v2478 = vld [vmem:[%s9 + $0x2b8] sm:$0xff]
        %v2479 = vld [vmem:[%s9 + $0x2c0] sm:$0xff]
        %v2480 = vld [vmem:[%s9 + $0x2c8] sm:$0xff]
        %v2481 = vld [vmem:[%s9 + $0x2d0] sm:$0xff]
        %v2482 = vld [vmem:[%s9 + $0x2d8] sm:$0xff]
        %v2483 = vld [vmem:[%s9 + $0x2e0] sm:$0xff]
        %v2484 = vld [vmem:[%s9 + $0x2e8] sm:$0xff]
        %v2485 = vld [vmem:[%s9 + $0x2f0] sm:$0x33]
        %v2581 = vunpack.c.l.b16 %v2391
        %v2582 = vunpack.c.h.b16 %v2391
        %v2583 = vunpack.c.l.b16 %v2392
        %v2584 = vunpack.c.h.b16 %v2392
        %v2585 = vunpack.c.l.b16 %v2393
        %v2586 = vunpack.c.h.b16 %v2393
        %v2587 = vunpack.c.l.b16 %v2394
        %v2588 = vunpack.c.h.b16 %v2394
        %v2589 = vunpack.c.l.b16 %v2395
        %v2590 = vunpack.c.h.b16 %v2395
        %v2591 = vunpack.c.l.b16 %v2396
        %v2592 = vunpack.c.h.b16 %v2396
        %v2593 = vunpack.c.l.b16 %v2397
        %v2594 = vunpack.c.h.b16 %v2397
        %v2595 = vunpack.c.l.b16 %v2398
        %v2596 = vunpack.c.h.b16 %v2398
        %v2597 = vunpack.c.l.b16 %v2399
        %v2598 = vunpack.c.h.b16 %v2399
        %v2599 = vunpack.c.l.b16 %v2400
        %v2600 = vunpack.c.h.b16 %v2400
        %v2601 = vunpack.c.l.b16 %v2401
        %v2602 = vunpack.c.h.b16 %v2401
        %v2603 = vunpack.c.l.b16 %v2402
        %v2604 = vunpack.c.h.b16 %v2402
        %v2605 = vunpack.c.l.b16 %v2403
        %v2606 = vunpack.c.h.b16 %v2403
        %v2607 = vunpack.c.l.b16 %v2404
        %v2608 = vunpack.c.h.b16 %v2404
        %v2609 = vunpack.c.l.b16 %v2405
        %v2610 = vunpack.c.h.b16 %v2405
        %v2611 = vunpack.c.l.b16 %v2406
        %v2612 = vunpack.c.h.b16 %v2406
        %v2613 = vunpack.c.l.b16 %v2407
        %v2614 = vunpack.c.h.b16 %v2407
        %v2615 = vunpack.c.l.b16 %v2408
        %v2616 = vunpack.c.h.b16 %v2408
        %v2617 = vunpack.c.l.b16 %v2409
        %v2618 = vunpack.c.h.b16 %v2409
        %v2619 = vunpack.c.l.b16 %v2410
        %v2620 = vunpack.c.h.b16 %v2410
        %v2621 = vunpack.c.l.b16 %v2411
        %v2622 = vunpack.c.h.b16 %v2411
        %v2623 = vunpack.c.l.b16 %v2412
        %v2624 = vunpack.c.h.b16 %v2412
        %v2625 = vunpack.c.l.b16 %v2413
        %v2626 = vunpack.c.h.b16 %v2413
        %v2627 = vunpack.c.l.b16 %v2414
        %v2628 = vunpack.c.h.b16 %v2414
        %v2629 = vunpack.c.l.b16 %v2415
        %v2630 = vunpack.c.h.b16 %v2415
        %v2631 = vunpack.c.l.b16 %v2416
        %v2632 = vunpack.c.h.b16 %v2416
        %v2633 = vunpack.c.l.b16 %v2417
        %v2634 = vunpack.c.h.b16 %v2417
        %v2635 = vunpack.c.l.b16 %v2418
        %v2636 = vunpack.c.h.b16 %v2418
        %v2637 = vunpack.c.l.b16 %v2419
        %v2638 = vunpack.c.h.b16 %v2419
        %v2639 = vunpack.c.l.b16 %v2420
        %v2640 = vunpack.c.h.b16 %v2420
        %v2641 = vunpack.c.l.b16 %v2421
        %v2642 = vunpack.c.h.b16 %v2421
        %v2643 = vunpack.c.l.b16 %v2422
        %v2644 = vunpack.c.h.b16 %v2422
        %v2645 = vunpack.c.l.b16 %v2423
        %v2646 = vunpack.c.h.b16 %v2423
        %v2647 = vunpack.c.l.b16 %v2424
        %v2648 = vunpack.c.h.b16 %v2424
        %v2649 = vunpack.c.l.b16 %v2425
        %v2650 = vunpack.c.h.b16 %v2425
        %v2651 = vunpack.c.l.b16 %v2426
        %v2652 = vunpack.c.h.b16 %v2426
        %v2653 = vunpack.c.l.b16 %v2427
        %v2654 = vunpack.c.h.b16 %v2427
        %v2655 = vunpack.c.l.b16 %v2428
        %v2656 = vunpack.c.h.b16 %v2428
        %v2657 = vunpack.c.l.b16 %v2429
        %v2658 = vunpack.c.h.b16 %v2429
        %v2659 = vunpack.c.l.b16 %v2430
        %v2660 = vunpack.c.h.b16 %v2430
        %v2661 = vunpack.c.l.b16 %v2431
        %v2662 = vunpack.c.h.b16 %v2431
        %v2663 = vunpack.c.l.b16 %v2432
        %v2664 = vunpack.c.h.b16 %v2432
        %v2665 = vunpack.c.l.b16 %v2433
        %v2666 = vunpack.c.h.b16 %v2433
        %v2667 = vunpack.c.l.b16 %v2434
        %v2668 = vunpack.c.h.b16 %v2434
        %v2669 = vunpack.c.l.b16 %v2435
        %v2670 = vunpack.c.h.b16 %v2435
        %v2671 = vunpack.c.l.b16 %v2436
        %v2672 = vunpack.c.h.b16 %v2436
        %v2673 = vunpack.c.l.b16 %v2437
        %v2674 = vunpack.c.h.b16 %v2437
        %v2675 = vunpack.c.l.b16 %v2438
        %v2676 = vunpack.c.h.b16 %v2438
        %v2677 = vunpack.c.l.b16 %v2439
        %v2678 = vunpack.c.h.b16 %v2439
        %v2679 = vunpack.c.l.b16 %v2440
        %v2680 = vunpack.c.h.b16 %v2440
        %v2681 = vunpack.c.l.b16 %v2441
        %v2682 = vunpack.c.h.b16 %v2441
        %v2683 = vunpack.c.l.b16 %v2442
        %v2684 = vunpack.c.h.b16 %v2442
        %v2685 = vunpack.c.l.b16 %v2443
        %v2686 = vunpack.c.h.b16 %v2443
        %v2687 = vunpack.c.l.b16 %v2444
        %v2688 = vunpack.c.h.b16 %v2444
        %v2689 = vunpack.c.l.b16 %v2445
        %v2690 = vunpack.c.h.b16 %v2445
        %v2691 = vunpack.c.l.b16 %v2446
        %v2692 = vunpack.c.h.b16 %v2446
        %v2693 = vunpack.c.l.b16 %v2447
        %v2694 = vunpack.c.h.b16 %v2447
        %v2695 = vunpack.c.l.b16 %v2448
        %v2696 = vunpack.c.h.b16 %v2448
        %v2697 = vunpack.c.l.b16 %v2449
        %v2698 = vunpack.c.h.b16 %v2449
        %v2699 = vunpack.c.l.b16 %v2450
        %v2700 = vunpack.c.h.b16 %v2450
        %v2701 = vunpack.c.l.b16 %v2451
        %v2702 = vunpack.c.h.b16 %v2451
        %v2703 = vunpack.c.l.b16 %v2452
        %v2704 = vunpack.c.h.b16 %v2452
        %v2705 = vunpack.c.l.b16 %v2453
        %v2706 = vunpack.c.h.b16 %v2453
        %v2707 = vunpack.c.l.b16 %v2454
        %v2708 = vunpack.c.h.b16 %v2454
        %v2709 = vunpack.c.l.b16 %v2455
        %v2710 = vunpack.c.h.b16 %v2455
        %v2711 = vunpack.c.l.b16 %v2456
        %v2712 = vunpack.c.h.b16 %v2456
        %v2713 = vunpack.c.l.b16 %v2457
        %v2714 = vunpack.c.h.b16 %v2457
        %v2715 = vunpack.c.l.b16 %v2458
        %v2716 = vunpack.c.h.b16 %v2458
        %v2717 = vunpack.c.l.b16 %v2459
        %v2718 = vunpack.c.h.b16 %v2459
        %v2719 = vunpack.c.l.b16 %v2460
        %v2720 = vunpack.c.h.b16 %v2460
        %v2721 = vunpack.c.l.b16 %v2461
        %v2722 = vunpack.c.h.b16 %v2461
        %v2723 = vunpack.c.l.b16 %v2462
        %v2724 = vunpack.c.h.b16 %v2462
        %v2725 = vunpack.c.l.b16 %v2463
        %v2726 = vunpack.c.h.b16 %v2463
        %v2727 = vunpack.c.l.b16 %v2464
        %v2728 = vunpack.c.h.b16 %v2464
        %v2729 = vunpack.c.l.b16 %v2465
        %v2730 = vunpack.c.h.b16 %v2465
        %v2731 = vunpack.c.l.b16 %v2466
        %v2732 = vunpack.c.h.b16 %v2466
        %v2733 = vunpack.c.l.b16 %v2467
        %v2734 = vunpack.c.h.b16 %v2467
        %v2735 = vunpack.c.l.b16 %v2468
        %v2736 = vunpack.c.h.b16 %v2468
        %v2737 = vunpack.c.l.b16 %v2469
        %v2738 = vunpack.c.h.b16 %v2469
        %v2739 = vunpack.c.l.b16 %v2470
        %v2740 = vunpack.c.h.b16 %v2470
        %v2741 = vunpack.c.l.b16 %v2471
        %v2742 = vunpack.c.h.b16 %v2471
        %v2743 = vunpack.c.l.b16 %v2472
        %v2744 = vunpack.c.h.b16 %v2472
        %v2745 = vunpack.c.l.b16 %v2473
        %v2746 = vunpack.c.h.b16 %v2473
        %v2747 = vunpack.c.l.b16 %v2474
        %v2748 = vunpack.c.h.b16 %v2474
        %v2749 = vunpack.c.l.b16 %v2475
        %v2750 = vunpack.c.h.b16 %v2475
        %v2751 = vunpack.c.l.b16 %v2476
        %v2752 = vunpack.c.h.b16 %v2476
        %v2753 = vunpack.c.l.b16 %v2477
        %v2754 = vunpack.c.h.b16 %v2477
        %v2755 = vunpack.c.l.b16 %v2478
        %v2756 = vunpack.c.h.b16 %v2478
        %v2757 = vunpack.c.l.b16 %v2479
        %v2758 = vunpack.c.h.b16 %v2479
        %v2759 = vunpack.c.l.b16 %v2480
        %v2760 = vunpack.c.h.b16 %v2480
        %v2761 = vunpack.c.l.b16 %v2481
        %v2762 = vunpack.c.h.b16 %v2481
        %v2763 = vunpack.c.l.b16 %v2482
        %v2764 = vunpack.c.h.b16 %v2482
        %v2765 = vunpack.c.l.b16 %v2483
        %v2766 = vunpack.c.h.b16 %v2483
        %v2767 = vunpack.c.l.b16 %v2484
        %v2768 = vunpack.c.h.b16 %v2484
        %v2769 = vunpack.c.l.b16 %v2485
        %v2770 = vunpack.c.h.b16 %v2485
        %v2771 = vpack.c.b16 %v2583, %v2581
        %v2772 = vpack.c.b16 %v2584, %v2582
        %v2773 = vpack.c.b16 %v2587, %v2585
        %v2774 = vpack.c.b16 %v2588, %v2586
        %v2775 = vpack.c.b16 %v2591, %v2589
        %v2776 = vpack.c.b16 %v2592, %v2590
        %v2777 = vpack.c.b16 %v2595, %v2593
        %v2778 = vpack.c.b16 %v2596, %v2594
        %v2779 = vpack.c.b16 %v2599, %v2597
        %v2780 = vpack.c.b16 %v2600, %v2598
        %v2781 = vpack.c.b16 %v2603, %v2601
        %v2782 = vpack.c.b16 %v2604, %v2602
        %v2783 = vpack.c.b16 %v2607, %v2605
        %v2784 = vpack.c.b16 %v2608, %v2606
        %v2785 = vpack.c.b16 %v2611, %v2609
        %v2786 = vpack.c.b16 %v2612, %v2610
        %v2787 = vpack.c.b16 %v2615, %v2613
        %v2788 = vpack.c.b16 %v2616, %v2614
        %v2789 = vpack.c.b16 %v2619, %v2617
        %v2790 = vpack.c.b16 %v2620, %v2618
        %v2791 = vpack.c.b16 %v2623, %v2621
        %v2792 = vpack.c.b16 %v2624, %v2622
        %v2793 = vpack.c.b16 %v2627, %v2625
        %v2794 = vpack.c.b16 %v2628, %v2626
        %v2795 = vpack.c.b16 %v2631, %v2629
        %v2796 = vpack.c.b16 %v2632, %v2630
        %v2797 = vpack.c.b16 %v2635, %v2633
        %v2798 = vpack.c.b16 %v2636, %v2634
        %v2799 = vpack.c.b16 %v2639, %v2637
        %v2800 = vpack.c.b16 %v2640, %v2638
        %v2801 = vpack.c.b16 %v2643, %v2641
        %v2802 = vpack.c.b16 %v2644, %v2642
        %v2803 = vpack.c.b16 %v2647, %v2645
        %v2804 = vpack.c.b16 %v2648, %v2646
        %v2805 = vpack.c.b16 %v2651, %v2649
        %v2806 = vpack.c.b16 %v2652, %v2650
        %v2807 = vpack.c.b16 %v2655, %v2653
        %v2808 = vpack.c.b16 %v2656, %v2654
        %v2809 = vpack.c.b16 %v2659, %v2657
        %v2810 = vpack.c.b16 %v2660, %v2658
        %v2811 = vpack.c.b16 %v2663, %v2661
        %v2812 = vpack.c.b16 %v2664, %v2662
        %v2813 = vpack.c.b16 %v2667, %v2665
        %v2814 = vpack.c.b16 %v2668, %v2666
        %v2815 = vpack.c.b16 %v2671, %v2669
        %v2816 = vpack.c.b16 %v2672, %v2670
        %v2817 = vpack.c.b16 %v2675, %v2673
        %v2818 = vpack.c.b16 %v2676, %v2674
        %v2819 = vpack.c.b16 %v2679, %v2677
        %v2820 = vpack.c.b16 %v2680, %v2678
        %v2821 = vpack.c.b16 %v2683, %v2681
        %v2822 = vpack.c.b16 %v2684, %v2682
        %v2823 = vpack.c.b16 %v2687, %v2685
        %v2824 = vpack.c.b16 %v2688, %v2686
        %v2825 = vpack.c.b16 %v2691, %v2689
        %v2826 = vpack.c.b16 %v2692, %v2690
        %v2827 = vpack.c.b16 %v2695, %v2693
        %v2828 = vpack.c.b16 %v2696, %v2694
        %v2829 = vpack.c.b16 %v2699, %v2697
        %v2830 = vpack.c.b16 %v2700, %v2698
        %v2831 = vpack.c.b16 %v2703, %v2701
        %v2832 = vpack.c.b16 %v2704, %v2702
        %v2833 = vpack.c.b16 %v2707, %v2705
        %v2834 = vpack.c.b16 %v2708, %v2706
        %v2835 = vpack.c.b16 %v2711, %v2709
        %v2836 = vpack.c.b16 %v2712, %v2710
        %v2837 = vpack.c.b16 %v2715, %v2713
        %v2838 = vpack.c.b16 %v2716, %v2714
        %v2839 = vpack.c.b16 %v2719, %v2717
        %v2840 = vpack.c.b16 %v2720, %v2718
        %v2841 = vpack.c.b16 %v2723, %v2721
        %v2842 = vpack.c.b16 %v2724, %v2722
        %v2843 = vpack.c.b16 %v2727, %v2725
        %v2844 = vpack.c.b16 %v2728, %v2726
        %v2845 = vpack.c.b16 %v2731, %v2729
        %v2846 = vpack.c.b16 %v2732, %v2730
        %v2847 = vpack.c.b16 %v2735, %v2733
        %v2848 = vpack.c.b16 %v2736, %v2734
        %v2849 = vpack.c.b16 %v2739, %v2737
        %v2850 = vpack.c.b16 %v2740, %v2738
        %v2851 = vpack.c.b16 %v2743, %v2741
        %v2852 = vpack.c.b16 %v2744, %v2742
        %v2853 = vpack.c.b16 %v2747, %v2745
        %v2854 = vpack.c.b16 %v2748, %v2746
        %v2855 = vpack.c.b16 %v2751, %v2749
        %v2856 = vpack.c.b16 %v2752, %v2750
        %v2857 = vpack.c.b16 %v2755, %v2753
        %v2858 = vpack.c.b16 %v2756, %v2754
        %v2859 = vpack.c.b16 %v2759, %v2757
        %v2860 = vpack.c.b16 %v2760, %v2758
        %v2861 = vpack.c.b16 %v2763, %v2761
        %v2862 = vpack.c.b16 %v2764, %v2762
        %v2863 = vpack.c.b16 %v2767, %v2765
        %v2864 = vpack.c.b16 %v2768, %v2766
        %v2865 = vpack.c.b16 %v2769, %v2769
        %v2866 = vpack.c.b16 %v2770, %v2770
        %vm2961 = vcmask 941056
        %v2963 = vsel %vm2961, %v2372, 0
        %v2966 = vsel %vm2961, %v2378, 0
        %v2969 = vsel %vm2961, %v2384, 0
        %v2972 = vsel %vm2961, %v2390, 0
        %vm2974 = vcmask 1040384
        %vm2975 = vcmask 1041408
        %v2976 = vsel %vm2974, 4294967295, 65535
        %v2977 = vsel %vm2975, %v2976, 0
        %v2979 = vand.u32 %v2865, %v2977
        %v2982 = vand.u32 %v2866, %v2977
        %2984 = vmatprep.subr.bf16.mxu0 %v2772
        %2985 = vmatpush1.bf16.msra.mxu0 %v2771
        %2986 = vmatprep.subr.bf16.mxu0 %v2774
        %2987 = vmatpush1.bf16.msra.mxu0 %v2773
        %2988 = vmatprep.subr.bf16.mxu0 %v2776
        %2989 = vmatpush1.bf16.msra.mxu0 %v2775
        %2990 = vmatprep.subr.bf16.mxu0 %v2778
        %2991 = vmatpush1.bf16.msra.mxu0 %v2777
        %2992 = vmatprep.subr.bf16.mxu0 %v2780
        %2993 = vmatpush1.bf16.msra.mxu0 %v2779
        %2994 = vmatprep.subr.bf16.mxu0 %v2782
        %2995 = vmatpush1.bf16.msra.mxu0 %v2781
        %2996 = vmatprep.subr.bf16.mxu0 %v2784
        %2997 = vmatpush1.bf16.msra.mxu0 %v2783
        %2998 = vmatprep.subr.bf16.mxu0 %v2786
        %2999 = vmatpush1.bf16.msra.mxu0 %v2785
        %3000 = vmatprep.subr.bf16.mxu0 %v2788
        %3001 = vmatpush1.bf16.msra.mxu0 %v2787
        %3002 = vmatprep.subr.bf16.mxu0 %v2790
        %3003 = vmatpush1.bf16.msra.mxu0 %v2789
        %3004 = vmatprep.subr.bf16.mxu0 %v2792
        %3005 = vmatpush1.bf16.msra.mxu0 %v2791
        %3006 = vmatprep.subr.bf16.mxu0 %v2794
        %3007 = vmatpush1.bf16.msra.mxu0 %v2793
        %3008 = vmatprep.subr.bf16.mxu0 %v2796
        %3009 = vmatpush1.bf16.msra.mxu0 %v2795
        %3010 = vmatprep.subr.bf16.mxu0 %v2798
        %3011 = vmatpush1.bf16.msra.mxu0 %v2797
        %3012 = vmatprep.subr.bf16.mxu0 %v2800
        %3013 = vmatpush1.bf16.msra.mxu0 %v2799
        %3014 = vmatprep.subr.bf16.mxu0 %v2802
        %3015 = vmatpush1.bf16.msra.mxu0 %v2801
        %3016 = vmatprep.mubr.bf16.mxu0 %v2368
        %3017 = vmatmul.mubr.bf16.gmra.mrb[0].mxu0 %v2367
        %v3018 = vpop.f32.mrb[0].mxu0
        %v3019 = vadd.f32 0.0, %v3018
        %v3020 = vpop.f32.mrb[0].mxu0
        %v3021 = vadd.f32 0.0, %v3020
        %v3022 = vpop.f32.mrb[0].mxu0
        %v3023 = vadd.f32 0.0, %v3022
        %v3024 = vpop.f32.mrb[0].mxu0
        %v3025 = vadd.f32 0.0, %v3024
        %3026 = vmatprep.mubr.bf16.mxu0 %v2374
        %3027 = vmatmul.mubr.bf16.gmra.mrb[0].mxu0 %v2373
        %v3028 = vpop.f32.mrb[0].mxu0
        %v3029 = vadd.f32 0.0, %v3028
        %v3030 = vpop.f32.mrb[0].mxu0
        %v3031 = vadd.f32 0.0, %v3030
        %v3032 = vpop.f32.mrb[0].mxu0
        %v3033 = vadd.f32 0.0, %v3032
        %v3034 = vpop.f32.mrb[0].mxu0
        %v3035 = vadd.f32 0.0, %v3034
        %3036 = vmatprep.mubr.bf16.mxu0 %v2380
        %3037 = vmatmul.mubr.bf16.gmra.mrb[0].mxu0 %v2379
        %v3038 = vpop.f32.mrb[0].mxu0
        %v3039 = vadd.f32 0.0, %v3038
        %v3040 = vpop.f32.mrb[0].mxu0
        %v3041 = vadd.f32 0.0, %v3040
        %v3042 = vpop.f32.mrb[0].mxu0
        %v3043 = vadd.f32 0.0, %v3042
        %v3044 = vpop.f32.mrb[0].mxu0
        %v3045 = vadd.f32 0.0, %v3044
        %3046 = vmatprep.mubr.bf16.mxu0 %v2386
        %3047 = vmatmul.mubr.bf16.gmra.mrb[0].mxu0 %v2385
        %v3048 = vpop.f32.mrb[0].mxu0
        %v3049 = vadd.f32 0.0, %v3048
        %v3050 = vpop.f32.mrb[0].mxu0
        %v3051 = vadd.f32 0.0, %v3050
        %v3052 = vpop.f32.mrb[0].mxu0
        %v3053 = vadd.f32 0.0, %v3052
        %v3054 = vpop.f32.mrb[0].mxu0
        %v3055 = vadd.f32 0.0, %v3054
        %3056 = vdwg.mxu0
        %3057 = vmatprep.subr.bf16.mxu0 %v2804
        %3058 = vmatpush1.bf16.msra.mxu0 %v2803
        %3059 = vmatprep.subr.bf16.mxu0 %v2806
        %3060 = vmatpush1.bf16.msra.mxu0 %v2805
        %3061 = vmatprep.subr.bf16.mxu0 %v2808
        %3062 = vmatpush1.bf16.msra.mxu0 %v2807
        %3063 = vmatprep.subr.bf16.mxu0 %v2810
        %3064 = vmatpush1.bf16.msra.mxu0 %v2809
        %3065 = vmatprep.subr.bf16.mxu0 %v2812
        %3066 = vmatpush1.bf16.msra.mxu0 %v2811
        %3067 = vmatprep.subr.bf16.mxu0 %v2814
        %3068 = vmatpush1.bf16.msra.mxu0 %v2813
        %3069 = vmatprep.subr.bf16.mxu0 %v2816
        %3070 = vmatpush1.bf16.msra.mxu0 %v2815
        %3071 = vmatprep.subr.bf16.mxu0 %v2818
        %3072 = vmatpush1.bf16.msra.mxu0 %v2817
        %3073 = vmatprep.subr.bf16.mxu0 %v2820
        %3074 = vmatpush1.bf16.msra.mxu0 %v2819
        %3075 = vmatprep.subr.bf16.mxu0 %v2822
        %3076 = vmatpush1.bf16.msra.mxu0 %v2821
        %3077 = vmatprep.subr.bf16.mxu0 %v2824
        %3078 = vmatpush1.bf16.msra.mxu0 %v2823
        %3079 = vmatprep.subr.bf16.mxu0 %v2826
        %3080 = vmatpush1.bf16.msra.mxu0 %v2825
        %3081 = vmatprep.subr.bf16.mxu0 %v2828
        %3082 = vmatpush1.bf16.msra.mxu0 %v2827
        %3083 = vmatprep.subr.bf16.mxu0 %v2830
        %3084 = vmatpush1.bf16.msra.mxu0 %v2829
        %3085 = vmatprep.subr.bf16.mxu0 %v2832
        %3086 = vmatpush1.bf16.msra.mxu0 %v2831
        %3087 = vmatprep.subr.bf16.mxu0 %v2834
        %3088 = vmatpush1.bf16.msra.mxu0 %v2833
        %3089 = vmatprep.mubr.bf16.mxu0 %v2370
        %3090 = vmatmul.mubr.bf16.gmra.mrb[0].mxu0 %v2369
        %v3091 = vpop.f32.mrb[0].mxu0
        %v3092 = vadd.f32 %v3019, %v3091
        %v3093 = vpop.f32.mrb[0].mxu0
        %v3094 = vadd.f32 %v3021, %v3093
        %v3095 = vpop.f32.mrb[0].mxu0
        %v3096 = vadd.f32 %v3023, %v3095
        %v3097 = vpop.f32.mrb[0].mxu0
        %v3098 = vadd.f32 %v3025, %v3097
        %3099 = vmatprep.mubr.bf16.mxu0 %v2376
        %3100 = vmatmul.mubr.bf16.gmra.mrb[0].mxu0 %v2375
        %v3101 = vpop.f32.mrb[0].mxu0
        %v3102 = vadd.f32 %v3029, %v3101
        %v3103 = vpop.f32.mrb[0].mxu0
        %v3104 = vadd.f32 %v3031, %v3103
        %v3105 = vpop.f32.mrb[0].mxu0
        %v3106 = vadd.f32 %v3033, %v3105
        %v3107 = vpop.f32.mrb[0].mxu0
        %v3108 = vadd.f32 %v3035, %v3107
        %3109 = vmatprep.mubr.bf16.mxu0 %v2382
        %3110 = vmatmul.mubr.bf16.gmra.mrb[0].mxu0 %v2381
        %v3111 = vpop.f32.mrb[0].mxu0
        %v3112 = vadd.f32 %v3039, %v3111
        %v3113 = vpop.f32.mrb[0].mxu0
        %v3114 = vadd.f32 %v3041, %v3113
        %v3115 = vpop.f32.mrb[0].mxu0
        %v3116 = vadd.f32 %v3043, %v3115
        %v3117 = vpop.f32.mrb[0].mxu0
        %v3118 = vadd.f32 %v3045, %v3117
        %3119 = vmatprep.mubr.bf16.mxu0 %v2388
        %3120 = vmatmul.mubr.bf16.gmra.mrb[0].mxu0 %v2387
        %v3121 = vpop.f32.mrb[0].mxu0
        %v3122 = vadd.f32 %v3049, %v3121
        %v3123 = vpop.f32.mrb[0].mxu0
        %v3124 = vadd.f32 %v3051, %v3123
        %v3125 = vpop.f32.mrb[0].mxu0
        %v3126 = vadd.f32 %v3053, %v3125
        %v3127 = vpop.f32.mrb[0].mxu0
        %v3128 = vadd.f32 %v3055, %v3127
        %3129 = vdwg.mxu0
        %3130 = vmatprep.subr.bf16.mxu0 %v2836
        %3131 = vmatpush1.bf16.msra.mxu0 %v2835
        %3132 = vmatprep.subr.bf16.mxu0 %v2838
        %3133 = vmatpush1.bf16.msra.mxu0 %v2837
        %3134 = vmatprep.subr.bf16.mxu0 %v2840
        %3135 = vmatpush1.bf16.msra.mxu0 %v2839
        %3136 = vmatprep.subr.bf16.mxu0 %v2842
        %3137 = vmatpush1.bf16.msra.mxu0 %v2841
        %3138 = vmatprep.subr.bf16.mxu0 %v2844
        %3139 = vmatpush1.bf16.msra.mxu0 %v2843
        %3140 = vmatprep.subr.bf16.mxu0 %v2846
        %3141 = vmatpush1.bf16.msra.mxu0 %v2845
        %3142 = vmatprep.subr.bf16.mxu0 %v2848
        %3143 = vmatpush1.bf16.msra.mxu0 %v2847
        %3144 = vmatprep.subr.bf16.mxu0 %v2850
        %3145 = vmatpush1.bf16.msra.mxu0 %v2849
        %3146 = vmatprep.subr.bf16.mxu0 %v2852
        %3147 = vmatpush1.bf16.msra.mxu0 %v2851
        %3148 = vmatprep.subr.bf16.mxu0 %v2854
        %3149 = vmatpush1.bf16.msra.mxu0 %v2853
        %3150 = vmatprep.subr.bf16.mxu0 %v2856
        %3151 = vmatpush1.bf16.msra.mxu0 %v2855
        %3152 = vmatprep.subr.bf16.mxu0 %v2858
        %3153 = vmatpush1.bf16.msra.mxu0 %v2857
        %3154 = vmatprep.subr.bf16.mxu0 %v2860
        %3155 = vmatpush1.bf16.msra.mxu0 %v2859
        %3156 = vmatprep.subr.bf16.mxu0 %v2862
        %3157 = vmatpush1.bf16.msra.mxu0 %v2861
        %3158 = vmatprep.subr.bf16.mxu0 %v2864
        %3159 = vmatpush1.bf16.msra.mxu0 %v2863
        %3160 = vmatprep.subr.bf16.mxu0 %v2982
        %3161 = vmatpush1.bf16.msra.mxu0 %v2979
        %3162 = vmatprep.mubr.bf16.mxu0 %v2963
        %3163 = vmatmul.mubr.bf16.gmra.mrb[0].mxu0 %v2371
        %v3164 = vpop.f32.mrb[0].mxu0
        %v3165 = vadd.f32 %v3092, %v3164
        %v3166 = vpop.f32.mrb[0].mxu0
        %v3167 = vadd.f32 %v3094, %v3166
        %v3168 = vpop.f32.mrb[0].mxu0
        %v3169 = vadd.f32 %v3096, %v3168
        %v3170 = vpop.f32.mrb[0].mxu0
        %v3171 = vadd.f32 %v3098, %v3170
        %3172 = vmatprep.mubr.bf16.mxu0 %v2966
        %3173 = vmatmul.mubr.bf16.gmra.mrb[0].mxu0 %v2377
        %v3174 = vpop.f32.mrb[0].mxu0
        %v3175 = vadd.f32 %v3102, %v3174
        %v3176 = vpop.f32.mrb[0].mxu0
        %v3177 = vadd.f32 %v3104, %v3176
        %v3178 = vpop.f32.mrb[0].mxu0
        %v3179 = vadd.f32 %v3106, %v3178
        %v3180 = vpop.f32.mrb[0].mxu0
        %v3181 = vadd.f32 %v3108, %v3180
        %3182 = vmatprep.mubr.bf16.mxu0 %v2969
        %3183 = vmatmul.mubr.bf16.gmra.mrb[0].mxu0 %v2383
        %v3184 = vpop.f32.mrb[0].mxu0
        %v3185 = vadd.f32 %v3112, %v3184
        %v3186 = vpop.f32.mrb[0].mxu0
        %v3187 = vadd.f32 %v3114, %v3186
        %v3188 = vpop.f32.mrb[0].mxu0
        %v3189 = vadd.f32 %v3116, %v3188
        %v3190 = vpop.f32.mrb[0].mxu0
        %v3191 = vadd.f32 %v3118, %v3190
        %3192 = vmatprep.mubr.bf16.mxu0 %v2972
        %3193 = vmatmul.mubr.bf16.gmra.mrb[0].mxu0 %v2389
        %v3194 = vpop.f32.mrb[0].mxu0
        %v3195 = vadd.f32 %v3122, %v3194
        %v3196 = vpop.f32.mrb[0].mxu0
        %v3197 = vadd.f32 %v3124, %v3196
        %v3198 = vpop.f32.mrb[0].mxu0
        %v3199 = vadd.f32 %v3126, %v3198
        %v3200 = vpop.f32.mrb[0].mxu0
        %v3201 = vadd.f32 %v3128, %v3200
        %3202 = vdwg.mxu0
        %v3203 = vadd.f32 %v3165, %v3169
        %v3204 = vadd.f32 %v3203, %v3175
        %v3205 = vadd.f32 %v3204, %v3179
        %v3206 = vadd.f32 %v3205, %v3185
        %v3207 = vadd.f32 %v3206, %v3189
        %v3208 = vadd.f32 %v3207, %v3195
        %v3209 = vadd.f32 %v3208, %v3199
        %v3210 = vrot.slane %v3209, 4
        %v3211 = vadd.f32 %v3209, %v3210
        %v3212 = vrot.slane %v3211, 2
        %v3213 = vadd.f32 %v3211, %v3212
        %v3214 = vrot.slane %v3213, 1
        %v3215 = vadd.f32 %v3213, %v3214
        %vm3216 = vcmask 556032
        %v3217 = vsel %vm3216, %v3167, 0.0
        %v3218 = vsel %vm3216, %v3171, 0.0
        %v3219 = vadd.f32 %v3217, %v3218
        %v3220 = vsel %vm3216, %v3177, 0.0
        %v3221 = vadd.f32 %v3219, %v3220
        %v3222 = vsel %vm3216, %v3181, 0.0
        %v3223 = vadd.f32 %v3221, %v3222
        %v3224 = vsel %vm3216, %v3187, 0.0
        %v3225 = vadd.f32 %v3223, %v3224
        %v3226 = vsel %vm3216, %v3191, 0.0
        %v3227 = vadd.f32 %v3225, %v3226
        %v3228 = vsel %vm3216, %v3197, 0.0
        %v3229 = vadd.f32 %v3227, %v3228
        %v3230 = vsel %vm3216, %v3201, 0.0
        %v3231 = vadd.f32 %v3229, %v3230
        %v3232 = vrot.slane %v3231, 4
        %v3233 = vadd.f32 %v3231, %v3232
        %v3234 = vrot.slane %v3233, 2
        %v3235 = vadd.f32 %v3233, %v3234
        %v3236 = vrot.slane %v3235, 1
        %v3237 = vadd.f32 %v3235, %v3236
        %vm3238 = vcmp.lt.s32.totalorder %v438, 15
        %vm3239 = vmand %vm439, %vm3238
        %3240 = vst.msk [vmem:[#allocation3] sm:$0x1] %vm3239, 0.0
        %vm3241 = vcmp.ge.s32.totalorder %v438, 83
        %vm3242 = vcmp.lt.s32.totalorder %v438, 98
        %vm3243 = vmand %vm3241, %vm3242
        %3244 = vst.msk [vmem:[#allocation3 + $0x1] sm:$0x1] %vm3243, 0.0
        %3245 = vst [vmem:[#allocation5 + $0x10] sm:$0xfe] 0.0
        %vm3246 = vcmask 556033
        %3247 = vst.msk [vmem:[#allocation5 + $0x18] sm:$0xfe] %vm3246, 0.0
        %v3250 = vcombine.low %v3215, %v3237
        %v3252 = vunpack.c.l.s4 1966171168
        %v3253 = vunpack.c.0.s8 %v3252
        %v3254 = vlaneseq
        %v3255 = vshrl.u32 %v3254, 7
        %v3256 = vsub.s32 %v3253, %v3255
        %v3257 = vrot.slane %v3250, %v3256
        %v3259 = vunpack.c.l.s4 1966171168
        %v3260 = vunpack.c.0.s8 %v3259
        %v3261 = vlaneseq
        %v3262 = vshrl.u32 %v3261, 7
        %v3263 = vsub.s32 %v3260, %v3262
        %v3264 = vrot.slane %v3257, %v3263
        %3265 = vrot.lane.b32.xlu0 %v3264, 15
        %v3266 = vpop.permute.xlu0 %3265
        %v3267 = vrot.slane %v3266, 7
        %vm3268 = vcmask 121856
        %v3269 = vsel %vm3268, %v3267, %v3266
        %vm3271 = vcmp.ge.s32.totalorder %v438, 15
        %vm3272 = vcmp.lt.s32.totalorder %v438, 211
        %vm3273 = vmand %vm3271, %vm3272
        %3274 = vst.msk [vmem:[#allocation3] sm:$0x3] %vm3273, %v3269
        %v3275 = vmul.f32 %v481, 0.071428575
        %v3276 = vmul.f32 %v482, 0.071428575
        %v3277 = vfloor.f32 %v3275
        %v3278 = vfloor.f32 %v3276
        %v3279 = vmul.f32 %v3277, 14.0
        %v3280 = vmul.f32 %v3278, 14.0
        %v3281 = vsub.f32 %v474, %v3279
        %v3282 = vsub.f32 %v475, %v3280
        %vm3283 = vcmp.gt.f32.partialorder %v3281, 0.5
        %vm3284 = vcmp.gt.f32.partialorder %v3282, 0.5
        %v3285 = vsel %vm3283, 1, 0
        %v3286 = vsel %vm3284, 1, 0
        %v3287 = vcvt.s32.f32 %v3285
        %v3288 = vcvt.s32.f32 %v3286
        %vm3289 = vcmp.lt.f32.partialorder %v3281, 12.5
        %vm3290 = vcmp.lt.f32.partialorder %v3282, 12.5
        %v3291 = vsel %vm3289, 1, 0
        %v3292 = vsel %vm3290, 1, 0
        %v3293 = vcvt.s32.f32 %v3291
        %v3294 = vcvt.s32.f32 %v3292
        %v3295 = vld [vmem:[#allocation3] sm:$0x3]
        %v3298 = vcombine.low %v3287, %v3288
        %v3300 = vunpack.c.l.s4 1966171168
        %v3301 = vunpack.c.0.s8 %v3300
        %v3302 = vlaneseq
        %v3303 = vshrl.u32 %v3302, 7
        %v3304 = vsub.s32 %v3301, %v3303
        %v3305 = vrot.slane %v3298, %v3304
        %v3307 = vunpack.c.l.s4 1966171168
        %v3308 = vunpack.c.0.s8 %v3307
        %v3309 = vlaneseq
        %v3310 = vshrl.u32 %v3309, 7
        %v3311 = vsub.s32 %v3308, %v3310
        %v3312 = vrot.slane %v3305, %v3311
        %v3314 = vmul.f32 %v3295, %v3312
        %vm3315 = vcmp.lt.s32.totalorder %v438, 196
        %vm3316 = vmand %vm439, %vm3315
        %3317 = vst.msk [vmem:[#allocation5] ss:$8 sm:$0x3] %vm3316, %v3314
        %3318 = vst.msk [vmem:[#allocation5] ss:$8 sm:$0x0] %vm3316, %v3314
        %v3319 = vld [vmem:[#allocation3] sm:$0x3]
        %3321 = vrot.lane.b32.xlu0 %v3319, 127
        %v3322 = vpop.permute.xlu0 %3321
        %v3323 = vrot.slane %v3322, 1
        %v3324 = vsel %vm625, %v3322, %v3323
        %s3326 = scalar_lea.vmem [#allocation5], 1
        %3327 = vst.msk [vmem:[%s3326] ss:$8 sm:$0x3] %vm3316, %v3324
        %3328 = vst.msk [vmem:[%s3326] ss:$8 sm:$0x0] %vm3316, %v3324
        %v3329 = vld [vmem:[#allocation3] sm:$0x3]
        %v3332 = vcombine.low %v3293, %v3294
        %v3334 = vunpack.c.l.s4 1966171168
        %v3335 = vunpack.c.0.s8 %v3334
        %v3336 = vlaneseq
        %v3337 = vshrl.u32 %v3336, 7
        %v3338 = vsub.s32 %v3335, %v3337
        %v3339 = vrot.slane %v3332, %v3338
        %v3341 = vunpack.c.l.s4 1966171168
        %v3342 = vunpack.c.0.s8 %v3341
        %v3343 = vlaneseq
        %v3344 = vshrl.u32 %v3343, 7
        %v3345 = vsub.s32 %v3342, %v3344
        %v3346 = vrot.slane %v3339, %v3345
        %3347 = vrot.lane.b32.xlu0 %v3346, 2
        %v3348 = vpop.permute.xlu0 %3347
        %v3349 = vrot.slane %v3348, 7
        %v3350 = vsel %vm690, %v3349, %v3348
        %v3352 = vmul.f32 %v3329, %v3350
        %3354 = vrot.lane.b32.xlu0 %v3352, 126
        %v3355 = vpop.permute.xlu0 %3354
        %v3356 = vrot.slane %v3355, 1
        %v3357 = vsel %vm698, %v3355, %v3356
        %s3359 = scalar_lea.vmem [#allocation5], 2
        %3360 = vst.msk [vmem:[%s3359] ss:$8 sm:$0x3] %vm3316, %v3357
        %3361 = vst.msk [vmem:[%s3359] ss:$8 sm:$0x0] %vm3316, %v3357
        %v3362 = vld [vmem:[#allocation3] sm:$0x3]
        %3363 = vrot.lane.b32.xlu0 %v3312, 14
        %v3364 = vpop.permute.xlu0 %3363
        %v3365 = vrot.slane %v3364, 7
        %vm3366 = vcmask 113664
        %v3367 = vsel %vm3366, %v3365, %v3364
        %v3369 = vmul.f32 %v3362, %v3367
        %3371 = vrot.lane.b32.xlu0 %v3369, 114
        %v3372 = vpop.permute.xlu0 %3371
        %v3373 = vrot.slane %v3372, 1
        %vm3374 = vcmask 932864
        %v3375 = vsel %vm3374, %v3372, %v3373
        %s3377 = scalar_lea.vmem [#allocation5], 3
        %3378 = vst.msk [vmem:[%s3377] ss:$8 sm:$0x3] %vm3316, %v3375
        %3379 = vst.msk [vmem:[%s3377] ss:$8 sm:$0x0] %vm3316, %v3375
        %v3380 = vld [vmem:[#allocation3] sm:$0x3]
        %3382 = vrot.lane.b32.xlu0 %v3380, 113
        %v3383 = vpop.permute.xlu0 %3382
        %v3384 = vrot.slane %v3383, 1
        %vm3385 = vcmask 924672
        %v3386 = vsel %vm3385, %v3383, %v3384
        %s3388 = scalar_lea.vmem [#allocation5], 4
        %3389 = vst.msk [vmem:[%s3388] ss:$8 sm:$0x3] %vm3316, %v3386
        %3390 = vst.msk [vmem:[%s3388] ss:$8 sm:$0x0] %vm3316, %v3386
        %v3391 = vld [vmem:[#allocation3] sm:$0x3]
        %3392 = vrot.lane.b32.xlu0 %v3346, 16
        %v3393 = vpop.permute.xlu0 %3392
        %v3394 = vrot.slane %v3393, 7
        %v3395 = vsel %vm857, %v3394, %v3393
        %v3397 = vmul.f32 %v3391, %v3395
        %3399 = vrot.lane.b32.xlu0 %v3397, 112
        %v3400 = vpop.permute.xlu0 %3399
        %v3401 = vrot.slane %v3400, 1
        %vm3402 = vcmask 916480
        %v3403 = vsel %vm3402, %v3400, %v3401
        %s3405 = scalar_lea.vmem [#allocation5], 5
        %3406 = vst.msk [vmem:[%s3405] ss:$8 sm:$0x3] %vm3316, %v3403
        %3407 = vst.msk [vmem:[%s3405] ss:$8 sm:$0x0] %vm3316, %v3403
        %v3408 = vld [vmem:[#allocation3] sm:$0x3]
        %3409 = vrot.lane.b32.xlu0 %v3312, 28
        %v3410 = vpop.permute.xlu0 %3409
        %v3411 = vrot.slane %v3410, 7
        %v3412 = vsel %vm708, %v3411, %v3410
        %v3414 = vmul.f32 %v3408, %v3412
        %3416 = vrot.lane.b32.xlu0 %v3414, 100
        %v3417 = vpop.permute.xlu0 %3416
        %v3418 = vrot.slane %v3417, 1
        %v3419 = vsel %vm716, %v3417, %v3418
        %s3421 = scalar_lea.vmem [#allocation5], 6
        %3422 = vst.msk [vmem:[%s3421] ss:$8 sm:$0x3] %vm3316, %v3419
        %3423 = vst.msk [vmem:[%s3421] ss:$8 sm:$0x0] %vm3316, %v3419
        %v3424 = vld [vmem:[#allocation3] sm:$0x3]
        %3426 = vrot.lane.b32.xlu0 %v3424, 99
        %v3427 = vpop.permute.xlu0 %3426
        %v3428 = vrot.slane %v3427, 1
        %v3429 = vsel %vm727, %v3427, %v3428
        %s3431 = scalar_lea.vmem [#allocation5], 7
        %3432 = vst.msk [vmem:[%s3431] ss:$8 sm:$0x3] %vm3316, %v3429
        %3433 = vst.msk [vmem:[%s3431] ss:$8 sm:$0x0] %vm3316, %v3429
        %v3434 = vld [vmem:[#allocation3] sm:$0x3]
        %3435 = vrot.lane.b32.xlu0 %v3346, 30
        %v3436 = vpop.permute.xlu0 %3435
        %v3437 = vrot.slane %v3436, 7
        %v3438 = vsel %vm737, %v3437, %v3436
        %v3440 = vmul.f32 %v3434, %v3438
        %3442 = vrot.lane.b32.xlu0 %v3440, 98
        %v3443 = vpop.permute.xlu0 %3442
        %v3444 = vrot.slane %v3443, 1
        %v3445 = vsel %vm745, %v3443, %v3444
        %s3447 = scalar_lea.vmem [#allocation5], 16
        %3448 = vst.msk [vmem:[%s3447] ss:$8 sm:$0x3] %vm3316, %v3445
        %3449 = vst.msk [vmem:[%s3447] ss:$8 sm:$0x0] %vm3316, %v3445
        %v3450 = vld [vmem:[%s5] sm:$0xf]
        %v3451 = vld [vmem:[%s5 + $0x4] sm:$0xf]
        %v3452 = vld [vmem:[%s5 + $0x8] sm:$0xf]
        %v3453 = vld [vmem:[%s5 + $0xc] sm:$0xf]
        %v3454 = vld [vmem:[%s5 + $0x10] sm:$0xf]
        %v3455 = vld [vmem:[%s5 + $0x14] sm:$0xf]
        %v3456 = vld [vmem:[%s5 + $0x18] sm:$0xf]
        %v3457 = vld [vmem:[%s5 + $0x1c] sm:$0xf]
        %v3458 = vld [vmem:[#allocation5] sm:$0xff]
        %v3459 = vld [vmem:[#allocation5 + $0x8] sm:$0xff]
        %v3460 = vld [vmem:[#allocation5 + $0x10] sm:$0xff]
        %v3461 = vld [vmem:[#allocation5 + $0x18] sm:$0xff]
        %v3462 = vpack.c.bf16 %v3460, %v3458
        %v3463 = vpack.c.bf16 %v3461, %v3459
        %v3464 = vld [vmem:[%s6] sm:$0xff]
        %v3465 = vld [vmem:[%s6 + $0x8] sm:$0xff]
        %v3466 = vld [vmem:[%s6 + $0x10] sm:$0xff]
        %v3467 = vld [vmem:[%s6 + $0x18] sm:$0xff]
        %v3468 = vld [vmem:[%s6 + $0x20] sm:$0xff]
        %v3469 = vld [vmem:[%s6 + $0x28] sm:$0xff]
        %v3470 = vld [vmem:[%s6 + $0x30] sm:$0xff]
        %v3471 = vld [vmem:[%s6 + $0x38] sm:$0xff]
        %v3472 = vmul.f32 %v3464, 64.0
        %v3473 = vmul.f32 %v3465, 64.0
        %v3474 = vmul.f32 %v3466, 64.0
        %v3475 = vmul.f32 %v3467, 64.0
        %v3476 = vmul.f32 %v3468, 64.0
        %v3477 = vmul.f32 %v3469, 64.0
        %v3478 = vmul.f32 %v3470, 64.0
        %v3479 = vmul.f32 %v3471, 64.0
        %3481 = vset.pattern.permute.xlu0 0
        %3482 = vperm.xlu0 %3481, %v3472
        %v3483 = vpop.permute.xlu0 %3482
        %3486 = vset.pattern.permute.xlu0 0
        %3487 = vperm.xlu0 %3486, %v3473
        %v3488 = vpop.permute.xlu0 %3487
        %3491 = vset.pattern.permute.xlu0 0
        %3492 = vperm.xlu0 %3491, %v3474
        %v3493 = vpop.permute.xlu0 %3492
        %3496 = vset.pattern.permute.xlu0 0
        %3497 = vperm.xlu0 %3496, %v3475
        %v3498 = vpop.permute.xlu0 %3497
        %3501 = vset.pattern.permute.xlu0 0
        %3502 = vperm.xlu0 %3501, %v3476
        %v3503 = vpop.permute.xlu0 %3502
        %3506 = vset.pattern.permute.xlu0 0
        %3507 = vperm.xlu0 %3506, %v3477
        %v3508 = vpop.permute.xlu0 %3507
        %3511 = vset.pattern.permute.xlu0 0
        %3512 = vperm.xlu0 %3511, %v3478
        %v3513 = vpop.permute.xlu0 %3512
        %3516 = vset.pattern.permute.xlu0 0
        %3517 = vperm.xlu0 %3516, %v3479
        %v3518 = vpop.permute.xlu0 %3517
        %v3528 = vunpack.c.l.b16 %v3450
        %v3529 = vunpack.c.l.b16 %v3451
        %v3530 = vunpack.c.l.b16 %v3452
        %v3531 = vunpack.c.l.b16 %v3453
        %v3532 = vunpack.c.l.b16 %v3454
        %v3533 = vunpack.c.l.b16 %v3455
        %v3534 = vunpack.c.l.b16 %v3456
        %v3535 = vunpack.c.l.b16 %v3457
        %v3536 = vpack.c.b16 %v3529, %v3528
        %v3537 = vpack.c.b16 %v3531, %v3530
        %v3538 = vpack.c.b16 %v3533, %v3532
        %v3539 = vpack.c.b16 %v3535, %v3534
        %v3541 = vsel %vm857, %v3536, 0
        %v3544 = vsel %vm857, %v3537, 0
        %v3547 = vsel %vm857, %v3538, 0
        %v3550 = vsel %vm857, %v3539, 0
        %3552 = vmatprep.subr.bf16.mxu0 %v3463
        %3553 = vmatpush1.bf16.msra.mxu0 %v3462
        %3554 = vmatprep.subr.bf16.mxu0 0
        %3555 = vmatpush1.bf16.msra.mxu0 0
        %3556 = vmatprep.subr.bf16.mxu0 0
        %3557 = vmatpush1.bf16.msra.mxu0 0
        %3558 = vmatprep.subr.bf16.mxu0 0
        %3559 = vmatpush1.bf16.msra.mxu0 0
        %3560 = vmatprep.subr.bf16.mxu0 0
        %3561 = vmatpush1.bf16.msra.mxu0 0
        %3562 = vmatprep.subr.bf16.mxu0 0
        %3563 = vmatpush1.bf16.msra.mxu0 0
        %3564 = vmatprep.subr.bf16.mxu0 0
        %3565 = vmatpush1.bf16.msra.mxu0 0
        %3566 = vmatprep.subr.bf16.mxu0 0
        %3567 = vmatpush1.bf16.msra.mxu0 0
        %3568 = vmatprep.subr.bf16.mxu0 0
        %3569 = vmatpush1.bf16.msra.mxu0 0
        %3570 = vmatprep.subr.bf16.mxu0 0
        %3571 = vmatpush1.bf16.msra.mxu0 0
        %3572 = vmatprep.subr.bf16.mxu0 0
        %3573 = vmatpush1.bf16.msra.mxu0 0
        %3574 = vmatprep.subr.bf16.mxu0 0
        %3575 = vmatpush1.bf16.msra.mxu0 0
        %3576 = vmatprep.subr.bf16.mxu0 0
        %3577 = vmatpush1.bf16.msra.mxu0 0
        %3578 = vmatprep.subr.bf16.mxu0 0
        %3579 = vmatpush1.bf16.msra.mxu0 0
        %3580 = vmatprep.subr.bf16.mxu0 0
        %3581 = vmatpush1.bf16.msra.mxu0 0
        %3582 = vmatprep.subr.bf16.mxu0 0
        %3583 = vmatpush1.bf16.msra.mxu0 0
        %3584 = vmatprep.mubr.bf16.mxu0 0
        %3585 = vmatmul.mubr.bf16.gmra.mrb[0].mxu0 %v3541
        %v3586 = vpop.f32.mrb[0].mxu0
        %v3587 = vadd.f32 %v3483, %v3586
        %v3588 = vpop.f32.mrb[0].mxu0
        %v3589 = vadd.f32 %v3483, %v3588
        %v3590 = vpop.f32.mrb[0].mxu0
        %v3591 = vadd.f32 %v3488, %v3590
        %v3592 = vpop.f32.mrb[0].mxu0
        %v3593 = vadd.f32 %v3488, %v3592
        %3594 = vmatprep.mubr.bf16.mxu0 0
        %3595 = vmatmul.mubr.bf16.gmra.mrb[0].mxu0 %v3544
        %v3596 = vpop.f32.mrb[0].mxu0
        %v3597 = vadd.f32 %v3493, %v3596
        %v3598 = vpop.f32.mrb[0].mxu0
        %v3599 = vadd.f32 %v3493, %v3598
        %v3600 = vpop.f32.mrb[0].mxu0
        %v3601 = vadd.f32 %v3498, %v3600
        %v3602 = vpop.f32.mrb[0].mxu0
        %v3603 = vadd.f32 %v3498, %v3602
        %3604 = vmatprep.mubr.bf16.mxu0 0
        %3605 = vmatmul.mubr.bf16.gmra.mrb[0].mxu0 %v3547
        %v3606 = vpop.f32.mrb[0].mxu0
        %v3607 = vadd.f32 %v3503, %v3606
        %v3608 = vpop.f32.mrb[0].mxu0
        %v3609 = vadd.f32 %v3503, %v3608
        %v3610 = vpop.f32.mrb[0].mxu0
        %v3611 = vadd.f32 %v3508, %v3610
        %v3612 = vpop.f32.mrb[0].mxu0
        %v3613 = vadd.f32 %v3508, %v3612
        %3614 = vmatprep.mubr.bf16.mxu0 0
        %3615 = vmatmul.mubr.bf16.gmra.mrb[0].mxu0 %v3550
        %v3616 = vpop.f32.mrb[0].mxu0
        %v3617 = vadd.f32 %v3513, %v3616
        %v3618 = vpop.f32.mrb[0].mxu0
        %v3619 = vadd.f32 %v3513, %v3618
        %v3620 = vpop.f32.mrb[0].mxu0
        %v3621 = vadd.f32 %v3518, %v3620
        %v3622 = vpop.f32.mrb[0].mxu0
        %v3623 = vadd.f32 %v3518, %v3622
        %3624 = vdwg.mxu0
        %v3625 = vmax.f32 %v3587, 0.0
        %v3626 = vmax.f32 %v3589, 0.0
        %v3627 = vmax.f32 %v3591, 0.0
        %v3628 = vmax.f32 %v3593, 0.0
        %v3629 = vmax.f32 %v3597, 0.0
        %v3630 = vmax.f32 %v3599, 0.0
        %v3631 = vmax.f32 %v3601, 0.0
        %v3632 = vmax.f32 %v3603, 0.0
        %v3633 = vmax.f32 %v3607, 0.0
        %v3634 = vmax.f32 %v3609, 0.0
        %v3635 = vmax.f32 %v3611, 0.0
        %v3636 = vmax.f32 %v3613, 0.0
        %v3637 = vmax.f32 %v3617, 0.0
        %v3638 = vmax.f32 %v3619, 0.0
        %v3639 = vmax.f32 %v3621, 0.0
        %v3640 = vmax.f32 %v3623, 0.0
        %v3641 = vadd.f32 %v3625, %v3627
        %v3642 = vadd.f32 %v3641, %v3629
        %v3643 = vadd.f32 %v3642, %v3631
        %v3644 = vadd.f32 %v3643, %v3633
        %v3645 = vadd.f32 %v3644, %v3635
        %v3646 = vadd.f32 %v3645, %v3637
        %v3647 = vadd.f32 %v3646, %v3639
        %v3648 = vrot.slane %v3647, 4
        %v3649 = vadd.f32 %v3647, %v3648
        %v3650 = vrot.slane %v3649, 2
        %v3651 = vadd.f32 %v3649, %v3650
        %v3652 = vrot.slane %v3651, 1
        %v3653 = vadd.f32 %v3651, %v3652
        %v3654 = vsel %vm3216, %v3626, 0.0
        %v3655 = vsel %vm3216, %v3628, 0.0
        %v3656 = vadd.f32 %v3654, %v3655
        %v3657 = vsel %vm3216, %v3630, 0.0
        %v3658 = vadd.f32 %v3656, %v3657
        %v3659 = vsel %vm3216, %v3632, 0.0
        %v3660 = vadd.f32 %v3658, %v3659
        %v3661 = vsel %vm3216, %v3634, 0.0
        %v3662 = vadd.f32 %v3660, %v3661
        %v3663 = vsel %vm3216, %v3636, 0.0
        %v3664 = vadd.f32 %v3662, %v3663
        %v3665 = vsel %vm3216, %v3638, 0.0
        %v3666 = vadd.f32 %v3664, %v3665
        %v3667 = vsel %vm3216, %v3640, 0.0
        %v3668 = vadd.f32 %v3666, %v3667
        %v3669 = vrot.slane %v3668, 4
        %v3670 = vadd.f32 %v3668, %v3669
        %v3671 = vrot.slane %v3670, 2
        %v3672 = vadd.f32 %v3670, %v3671
        %v3673 = vrot.slane %v3672, 1
        %v3674 = vadd.f32 %v3672, %v3673
        %3675 = vst.msk [vmem:[#allocation3] sm:$0x1] %vm3239, 0.0
        %3676 = vst.msk [vmem:[#allocation3 + $0x1] sm:$0x1] %vm3243, 0.0
        %3677 = vst [vmem:[#allocation5 + $0x10] sm:$0xfe] 0.0
        %3678 = vst.msk [vmem:[#allocation5 + $0x18] sm:$0xfe] %vm3246, 0.0
        %v3681 = vcombine.low %v3653, %v3674
        %v3683 = vunpack.c.l.s4 1966171168
        %v3684 = vunpack.c.0.s8 %v3683
        %v3685 = vlaneseq
        %v3686 = vshrl.u32 %v3685, 7
        %v3687 = vsub.s32 %v3684, %v3686
        %v3688 = vrot.slane %v3681, %v3687
        %v3690 = vunpack.c.l.s4 1966171168
        %v3691 = vunpack.c.0.s8 %v3690
        %v3692 = vlaneseq
        %v3693 = vshrl.u32 %v3692, 7
        %v3694 = vsub.s32 %v3691, %v3693
        %v3695 = vrot.slane %v3688, %v3694
        %3696 = vrot.lane.b32.xlu0 %v3695, 15
        %v3697 = vpop.permute.xlu0 %3696
        %v3698 = vrot.slane %v3697, 7
        %v3699 = vsel %vm3268, %v3698, %v3697
        %3701 = vst.msk [vmem:[#allocation3] sm:$0x3] %vm3273, %v3699
        %v3702 = vld [vmem:[#allocation3] sm:$0x3]
        %v3703 = vmul.f32 %v3702, %v3312
        %3704 = vst.msk [vmem:[#allocation5] ss:$8 sm:$0x3] %vm3316, %v3703
        %3705 = vst.msk [vmem:[#allocation5] ss:$8 sm:$0x0] %vm3316, %v3703
        %v3706 = vld [vmem:[#allocation3] sm:$0x3]
        %3708 = vrot.lane.b32.xlu0 %v3706, 127
        %v3709 = vpop.permute.xlu0 %3708
        %v3710 = vrot.slane %v3709, 1
        %v3711 = vsel %vm625, %v3709, %v3710
        %3713 = vst.msk [vmem:[%s3326] ss:$8 sm:$0x3] %vm3316, %v3711
        %3714 = vst.msk [vmem:[%s3326] ss:$8 sm:$0x0] %vm3316, %v3711
        %v3715 = vld [vmem:[#allocation3] sm:$0x3]
        %v3716 = vmul.f32 %v3715, %v3350
        %3718 = vrot.lane.b32.xlu0 %v3716, 126
        %v3719 = vpop.permute.xlu0 %3718
        %v3720 = vrot.slane %v3719, 1
        %v3721 = vsel %vm698, %v3719, %v3720
        %3723 = vst.msk [vmem:[%s3359] ss:$8 sm:$0x3] %vm3316, %v3721
        %3724 = vst.msk [vmem:[%s3359] ss:$8 sm:$0x0] %vm3316, %v3721
        %v3725 = vld [vmem:[#allocation3] sm:$0x3]
        %v3726 = vmul.f32 %v3725, %v3367
        %3728 = vrot.lane.b32.xlu0 %v3726, 114
        %v3729 = vpop.permute.xlu0 %3728
        %v3730 = vrot.slane %v3729, 1
        %v3731 = vsel %vm3374, %v3729, %v3730
        %3733 = vst.msk [vmem:[%s3377] ss:$8 sm:$0x3] %vm3316, %v3731
        %3734 = vst.msk [vmem:[%s3377] ss:$8 sm:$0x0] %vm3316, %v3731
        %v3735 = vld [vmem:[#allocation3] sm:$0x3]
        %3737 = vrot.lane.b32.xlu0 %v3735, 113
        %v3738 = vpop.permute.xlu0 %3737
        %v3739 = vrot.slane %v3738, 1
        %v3740 = vsel %vm3385, %v3738, %v3739
        %3742 = vst.msk [vmem:[%s3388] ss:$8 sm:$0x3] %vm3316, %v3740
        %3743 = vst.msk [vmem:[%s3388] ss:$8 sm:$0x0] %vm3316, %v3740
        %v3744 = vld [vmem:[#allocation3] sm:$0x3]
        %v3745 = vmul.f32 %v3744, %v3395
        %3747 = vrot.lane.b32.xlu0 %v3745, 112
        %v3748 = vpop.permute.xlu0 %3747
        %v3749 = vrot.slane %v3748, 1
        %v3750 = vsel %vm3402, %v3748, %v3749
        %3752 = vst.msk [vmem:[%s3405] ss:$8 sm:$0x3] %vm3316, %v3750
        %3753 = vst.msk [vmem:[%s3405] ss:$8 sm:$0x0] %vm3316, %v3750
        %v3754 = vld [vmem:[#allocation3] sm:$0x3]
        %v3755 = vmul.f32 %v3754, %v3412
        %3757 = vrot.lane.b32.xlu0 %v3755, 100
        %v3758 = vpop.permute.xlu0 %3757
        %v3759 = vrot.slane %v3758, 1
        %v3760 = vsel %vm716, %v3758, %v3759
        %3762 = vst.msk [vmem:[%s3421] ss:$8 sm:$0x3] %vm3316, %v3760
        %3763 = vst.msk [vmem:[%s3421] ss:$8 sm:$0x0] %vm3316, %v3760
        %v3764 = vld [vmem:[#allocation3] sm:$0x3]
        %3766 = vrot.lane.b32.xlu0 %v3764, 99
        %v3767 = vpop.permute.xlu0 %3766
        %v3768 = vrot.slane %v3767, 1
        %v3769 = vsel %vm727, %v3767, %v3768
        %3771 = vst.msk [vmem:[%s3431] ss:$8 sm:$0x3] %vm3316, %v3769
        %3772 = vst.msk [vmem:[%s3431] ss:$8 sm:$0x0] %vm3316, %v3769
        %v3773 = vld [vmem:[#allocation3] sm:$0x3]
        %v3774 = vmul.f32 %v3773, %v3438
        %3776 = vrot.lane.b32.xlu0 %v3774, 98
        %v3777 = vpop.permute.xlu0 %3776
        %v3778 = vrot.slane %v3777, 1
        %v3779 = vsel %vm745, %v3777, %v3778
        %3781 = vst.msk [vmem:[%s3447] ss:$8 sm:$0x3] %vm3316, %v3779
        %3782 = vst.msk [vmem:[%s3447] ss:$8 sm:$0x0] %vm3316, %v3779
        %v3783 = vld [vmem:[%s7] sm:$0xf]
        %v3784 = vld [vmem:[%s7 + $0x4] sm:$0xf]
        %v3785 = vld [vmem:[#allocation5] sm:$0xff]
        %v3786 = vld [vmem:[#allocation5 + $0x8] sm:$0xff]
        %v3787 = vld [vmem:[#allocation5 + $0x10] sm:$0xff]
        %v3788 = vld [vmem:[#allocation5 + $0x18] sm:$0xff]
        %v3789 = vpack.c.bf16 %v3787, %v3785
        %v3790 = vpack.c.bf16 %v3788, %v3786
        %v3791 = vld [vmem:[%s8] sm:$0xff]
        %v3792 = vld [vmem:[%s8 + $0x8] sm:$0xff]
        %v3793 = vmul.f32 %v3791, 64.0
        %v3794 = vmul.f32 %v3792, 64.0
        %3796 = vset.pattern.permute.xlu0 0
        %3797 = vperm.xlu0 %3796, %v3793
        %v3798 = vpop.permute.xlu0 %3797
        %3801 = vset.pattern.permute.xlu0 0
        %3802 = vperm.xlu0 %3801, %v3794
        %v3803 = vpop.permute.xlu0 %3802
        %v3807 = vunpack.c.l.b16 %v3783
        %v3808 = vunpack.c.l.b16 %v3784
        %v3809 = vpack.c.b16 %v3808, %v3807
        %v3811 = vsel %vm857, %v3809, 0
        %3813 = vmatprep.subr.bf16.mxu0 %v3790
        %3814 = vmatpush1.bf16.msra.mxu0 %v3789
        %3815 = vmatprep.subr.bf16.mxu0 0
        %3816 = vmatpush1.bf16.msra.mxu0 0
        %3817 = vmatprep.subr.bf16.mxu0 0
        %3818 = vmatpush1.bf16.msra.mxu0 0
        %3819 = vmatprep.subr.bf16.mxu0 0
        %3820 = vmatpush1.bf16.msra.mxu0 0
        %3821 = vmatprep.subr.bf16.mxu0 0
        %3822 = vmatpush1.bf16.msra.mxu0 0
        %3823 = vmatprep.subr.bf16.mxu0 0
        %3824 = vmatpush1.bf16.msra.mxu0 0
        %3825 = vmatprep.subr.bf16.mxu0 0
        %3826 = vmatpush1.bf16.msra.mxu0 0
        %3827 = vmatprep.subr.bf16.mxu0 0
        %3828 = vmatpush1.bf16.msra.mxu0 0
        %3829 = vmatprep.subr.bf16.mxu0 0
        %3830 = vmatpush1.bf16.msra.mxu0 0
        %3831 = vmatprep.subr.bf16.mxu0 0
        %3832 = vmatpush1.bf16.msra.mxu0 0
        %3833 = vmatprep.subr.bf16.mxu0 0
        %3834 = vmatpush1.bf16.msra.mxu0 0
        %3835 = vmatprep.subr.bf16.mxu0 0
        %3836 = vmatpush1.bf16.msra.mxu0 0
        %3837 = vmatprep.subr.bf16.mxu0 0
        %3838 = vmatpush1.bf16.msra.mxu0 0
        %3839 = vmatprep.subr.bf16.mxu0 0
        %3840 = vmatpush1.bf16.msra.mxu0 0
        %3841 = vmatprep.subr.bf16.mxu0 0
        %3842 = vmatpush1.bf16.msra.mxu0 0
        %3843 = vmatprep.subr.bf16.mxu0 0
        %3844 = vmatpush1.bf16.msra.mxu0 0
        %3845 = vmatprep.mubr.bf16.mxu0 0
        %3846 = vmatmul.mubr.bf16.gmra.mrb[0].mxu0 %v3811
        %v3847 = vpop.f32.mrb[0].mxu0
        %v3848 = vadd.f32 %v3798, %v3847
        %v3849 = vpop.f32.mrb[0].mxu0
        %v3850 = vadd.f32 %v3798, %v3849
        %v3851 = vpop.f32.mrb[0].mxu0
        %v3852 = vadd.f32 %v3803, %v3851
        %v3853 = vpop.f32.mrb[0].mxu0
        %v3854 = vadd.f32 %v3803, %v3853
        %3855 = vdwg.mxu0
        %v3856 = vmax.f32 %v3848, 0.0
        %v3857 = vmax.f32 %v3850, 0.0
        %v3858 = vmax.f32 %v3852, 0.0
        %v3859 = vmax.f32 %v3854, 0.0
        %3864 = vrot.lane.b32.xlu0 %v3856, 114
        %v3865 = vpop.permute.xlu0 %3864
        %3866 = vrot.lane.b32.xlu0 %v3857, 114
        %v3867 = vpop.permute.xlu0 %3866
        %3868 = vrot.lane.b32.xlu0 %v3858, 114
        %v3869 = vpop.permute.xlu0 %3868
        %3870 = vrot.lane.b32.xlu0 %v3859, 114
        %v3871 = vpop.permute.xlu0 %3870
        %v3872 = vsel %vm3374, %v3865, %v3867
        %v3873 = vsel %vm3374, %v3869, %v3871
        %v3878 = vmax.f32 %v3856, %v3872
        %v3879 = vmax.f32 %v3857, %v3867
        %v3880 = vmax.f32 %v3858, %v3873
        %v3881 = vmax.f32 %v3859, %v3871
        %3886 = vrot.lane.b32.xlu0 %v3878, 127
        %v3887 = vpop.permute.xlu0 %3886
        %3888 = vrot.lane.b32.xlu0 %v3879, 127
        %v3889 = vpop.permute.xlu0 %3888
        %3890 = vrot.lane.b32.xlu0 %v3880, 127
        %v3891 = vpop.permute.xlu0 %3890
        %3892 = vrot.lane.b32.xlu0 %v3881, 127
        %v3893 = vpop.permute.xlu0 %3892
        %v3894 = vsel %vm625, %v3887, %v3889
        %v3895 = vsel %vm625, %v3891, %v3893
        %v3900 = vmax.f32 %v3878, %v3894
        %v3901 = vmax.f32 %v3879, %v3889
        %v3902 = vmax.f32 %v3880, %v3895
        %v3903 = vmax.f32 %v3881, %v3893
        %v3904 = vpack.c.bf16 %v3902, %v3900
        %v3905 = vpack.c.bf16 %v3903, %v3901
        %v3906 = vld [vmem:[%s10] sm:$0xf]
        %v3907 = vld [vmem:[%s10 + $0x4] sm:$0xf]
        %v3908 = vld [vmem:[%s10 + $0x8] sm:$0xf]
        %v3909 = vld [vmem:[%s10 + $0xc] sm:$0xf]
        %v3910 = vld [vmem:[%s10 + $0x10] sm:$0xf]
        %v3911 = vld [vmem:[%s10 + $0x14] sm:$0xf]
        %v3912 = vld [vmem:[%s10 + $0x18] sm:$0xf]
        %v3913 = vld [vmem:[%s10 + $0x1c] sm:$0xf]
        %v3914 = vld [vmem:[%s10 + $0x20] sm:$0xf]
        %v3915 = vld [vmem:[%s10 + $0x24] sm:$0xf]
        %v3916 = vld [vmem:[%s10 + $0x28] sm:$0xf]
        %v3917 = vld [vmem:[%s10 + $0x2c] sm:$0xf]
        %v3918 = vld [vmem:[%s10 + $0x30] sm:$0xf]
        %v3919 = vld [vmem:[%s10 + $0x34] sm:$0xf]
        %v3920 = vld [vmem:[%s10 + $0x38] sm:$0xf]
        %v3921 = vld [vmem:[%s10 + $0x3c] sm:$0xf]
        %v3922 = vld [vmem:[%s10 + $0x40] sm:$0xf]
        %v3923 = vld [vmem:[%s10 + $0x44] sm:$0xf]
        %v3924 = vld [vmem:[%s10 + $0x48] sm:$0xf]
        %v3925 = vld [vmem:[%s10 + $0x4c] sm:$0xf]
        %v3926 = vld [vmem:[%s10 + $0x50] sm:$0xf]
        %v3927 = vld [vmem:[%s10 + $0x54] sm:$0xf]
        %v3928 = vld [vmem:[%s10 + $0x58] sm:$0x7]
        %v3952 = vunpack.c.l.b16 %v3906
        %v3953 = vunpack.c.l.b16 %v3907
        %v3954 = vunpack.c.l.b16 %v3908
        %v3955 = vunpack.c.l.b16 %v3909
        %v3956 = vunpack.c.l.b16 %v3910
        %v3957 = vunpack.c.l.b16 %v3911
        %v3958 = vunpack.c.l.b16 %v3912
        %v3959 = vunpack.c.l.b16 %v3913
        %v3960 = vunpack.c.l.b16 %v3914
        %v3961 = vunpack.c.l.b16 %v3915
        %v3962 = vunpack.c.l.b16 %v3916
        %v3963 = vunpack.c.l.b16 %v3917
        %v3964 = vunpack.c.l.b16 %v3918
        %v3965 = vunpack.c.l.b16 %v3919
        %v3966 = vunpack.c.l.b16 %v3920
        %v3967 = vunpack.c.l.b16 %v3921
        %v3968 = vunpack.c.l.b16 %v3922
        %v3969 = vunpack.c.l.b16 %v3923
        %v3970 = vunpack.c.l.b16 %v3924
        %v3971 = vunpack.c.l.b16 %v3925
        %v3972 = vunpack.c.l.b16 %v3926
        %v3973 = vunpack.c.l.b16 %v3927
        %v3974 = vunpack.c.l.b16 %v3928
        %v3975 = vpack.c.b16 %v3953, %v3952
        %v3976 = vpack.c.b16 %v3955, %v3954
        %v3977 = vpack.c.b16 %v3957, %v3956
        %v3978 = vpack.c.b16 %v3959, %v3958
        %v3979 = vpack.c.b16 %v3961, %v3960
        %v3980 = vpack.c.b16 %v3963, %v3962
        %v3981 = vpack.c.b16 %v3965, %v3964
        %v3982 = vpack.c.b16 %v3967, %v3966
        %v3983 = vpack.c.b16 %v3969, %v3968
        %v3984 = vpack.c.b16 %v3971, %v3970
        %v3985 = vpack.c.b16 %v3973, %v3972
        %v3986 = vpack.c.b16 %v3974, %v3974
        %vm3998 = vcmask 433152
        %v4000 = vsel %vm3998, %v3905, 0
        %vm4002 = vcmask 1042432
        %v4003 = vsel %vm2975, 4294967295, 65535
        %v4004 = vsel %vm4002, %v4003, 0
        %v4006 = vand.u32 %v3986, %v4004
        %4008 = vmatprep.subr.bf16.mxu0 0
        %4009 = vmatpush1.bf16.msra.mxu0 %v3975
        %4010 = vmatprep.subr.bf16.mxu0 0
        %4011 = vmatpush1.bf16.msra.mxu0 %v3976
        %4012 = vmatprep.subr.bf16.mxu0 0
        %4013 = vmatpush1.bf16.msra.mxu0 %v3977
        %4014 = vmatprep.subr.bf16.mxu0 0
        %4015 = vmatpush1.bf16.msra.mxu0 %v3978
        %4016 = vmatprep.subr.bf16.mxu0 0
        %4017 = vmatpush1.bf16.msra.mxu0 %v3979
        %4018 = vmatprep.subr.bf16.mxu0 0
        %4019 = vmatpush1.bf16.msra.mxu0 %v3980
        %4020 = vmatprep.subr.bf16.mxu0 0
        %4021 = vmatpush1.bf16.msra.mxu0 %v3981
        %4022 = vmatprep.subr.bf16.mxu0 0
        %4023 = vmatpush1.bf16.msra.mxu0 %v3982
        %4024 = vmatprep.subr.bf16.mxu0 0
        %4025 = vmatpush1.bf16.msra.mxu0 %v3983
        %4026 = vmatprep.subr.bf16.mxu0 0
        %4027 = vmatpush1.bf16.msra.mxu0 %v3984
        %4028 = vmatprep.subr.bf16.mxu0 0
        %4029 = vmatpush1.bf16.msra.mxu0 %v3985
        %4030 = vmatprep.subr.bf16.mxu0 0
        %4031 = vmatpush1.bf16.msra.mxu0 %v4006
        %4032 = vmatprep.subr.bf16.mxu0 0
        %4033 = vmatpush1.bf16.msra.mxu0 0
        %4034 = vmatprep.subr.bf16.mxu0 0
        %4035 = vmatpush1.bf16.msra.mxu0 0
        %4036 = vmatprep.subr.bf16.mxu0 0
        %4037 = vmatpush1.bf16.msra.mxu0 0
        %4038 = vmatprep.subr.bf16.mxu0 0
        %4039 = vmatpush1.bf16.msra.mxu0 0
        %4040 = vmatprep.mubr.bf16.mxu0 %v4000
        %4041 = vmatmul.mubr.bf16.gmra.mrb[0].mxu0 %v3904
        %v4042 = vpop.f32.mrb[0].mxu0
        %v4043 = vadd.f32 0.0, %v4042
        %v4044 = vpop.f32.mrb[0].mxu0
        %v4045 = vpop.f32.mrb[0].mxu0
        %v4046 = vadd.f32 0.0, %v4045
        %v4047 = vpop.f32.mrb[0].mxu0
        %4048 = vdwg.mxu0
        %v4049 = vld [vmem:[%s12] sm:$0x1]
        %v4050 = vpack.c.bf16 %v4043, %v4043
        %v4051 = vld [vmem:[%s11] sm:$0xf]
        %v4052 = vld [vmem:[%s11 + $0x4] sm:$0xf]
        %v4053 = vld [vmem:[%s11 + $0x8] sm:$0xf]
        %v4054 = vld [vmem:[%s11 + $0xc] sm:$0xf]
        %v4055 = vld [vmem:[%s11 + $0x10] sm:$0xf]
        %v4056 = vld [vmem:[%s11 + $0x14] sm:$0xf]
        %v4057 = vld [vmem:[%s11 + $0x18] sm:$0x1]
        %v4065 = vunpack.c.l.b16 %v4051
        %v4066 = vunpack.c.l.b16 %v4052
        %v4067 = vunpack.c.l.b16 %v4053
        %v4068 = vunpack.c.l.b16 %v4054
        %v4069 = vunpack.c.l.b16 %v4055
        %v4070 = vunpack.c.l.b16 %v4056
        %v4071 = vunpack.c.l.b16 %v4057
        %v4072 = vpack.c.b16 %v4066, %v4065
        %v4073 = vpack.c.b16 %v4068, %v4067
        %v4074 = vpack.c.b16 %v4070, %v4069
        %v4075 = vpack.c.b16 %v4071, %v4071
        %vm4079 = vcmask 400384
        %v4081 = vsel %vm4079, %v4050, 0
        %v4083 = vsel 0, 4294967295, 65535
        %v4084 = vsel %vm2974, %v4083, 0
        %v4086 = vand.u32 %v4075, %v4084
        %4088 = vmatprep.subr.bf16.mxu0 0
        %4089 = vmatpush1.bf16.msra.mxu0 %v4072
        %4090 = vmatprep.subr.bf16.mxu0 0
        %4091 = vmatpush1.bf16.msra.mxu0 %v4073
        %4092 = vmatprep.subr.bf16.mxu0 0
        %4093 = vmatpush1.bf16.msra.mxu0 %v4074
        %4094 = vmatprep.subr.bf16.mxu0 0
        %4095 = vmatpush1.bf16.msra.mxu0 %v4086
        %4096 = vmatprep.subr.bf16.mxu0 0
        %4097 = vmatpush1.bf16.msra.mxu0 0
        %4098 = vmatprep.subr.bf16.mxu0 0
        %4099 = vmatpush1.bf16.msra.mxu0 0
        %4100 = vmatprep.subr.bf16.mxu0 0
        %4101 = vmatpush1.bf16.msra.mxu0 0
        %4102 = vmatprep.subr.bf16.mxu0 0
        %4103 = vmatpush1.bf16.msra.mxu0 0
        %4104 = vmatprep.subr.bf16.mxu0 0
        %4105 = vmatpush1.bf16.msra.mxu0 0
        %4106 = vmatprep.subr.bf16.mxu0 0
        %4107 = vmatpush1.bf16.msra.mxu0 0
        %4108 = vmatprep.subr.bf16.mxu0 0
        %4109 = vmatpush1.bf16.msra.mxu0 0
        %4110 = vmatprep.subr.bf16.mxu0 0
        %4111 = vmatpush1.bf16.msra.mxu0 0
        %4112 = vmatprep.subr.bf16.mxu0 0
        %4113 = vmatpush1.bf16.msra.mxu0 0
        %4114 = vmatprep.subr.bf16.mxu0 0
        %4115 = vmatpush1.bf16.msra.mxu0 0
        %4116 = vmatprep.subr.bf16.mxu0 0
        %4117 = vmatpush1.bf16.msra.mxu0 0
        %4118 = vmatprep.subr.bf16.mxu0 0
        %4119 = vmatpush1.bf16.msra.mxu0 0
        %4120 = vmatprep.mubr.bf16.mxu0 0
        %4121 = vmatmul.mubr.bf16.gmra.mrb[0].mxu0 %v4081
        %v4122 = vpop.f32.mrb[0].mxu0
        %v4123 = vadd.f32 0.0, %v4122
        %v4124 = vpop.f32.mrb[0].mxu0
        %v4125 = vpop.f32.mrb[0].mxu0
        %v4126 = vpop.f32.mrb[0].mxu0
        %4127 = vdwg.mxu0
        %v4128 = vadd.f32 %v4049, %v4123
        %s4129 = scalar_lea.vmem %s11, 28
        %v4130 = vld [vmem:[%s4129] sm:$0xf]
        %v4131 = vld [vmem:[%s4129 + $0x4] sm:$0xf]
        %v4132 = vld [vmem:[%s4129 + $0x8] sm:$0xf]
        %v4133 = vld [vmem:[%s4129 + $0xc] sm:$0xf]
        %v4134 = vld [vmem:[%s4129 + $0x10] sm:$0xf]
        %v4135 = vld [vmem:[%s4129 + $0x14] sm:$0xf]
        %v4136 = vld [vmem:[%s4129 + $0x18] sm:$0x1]
        %v4137 = vshrl.u32 %v4050, 16
        %v4146 = vunpack.c.l.b16 %v4130
        %v4147 = vunpack.c.l.b16 %v4131
        %v4148 = vunpack.c.l.b16 %v4132
        %v4149 = vunpack.c.l.b16 %v4133
        %v4150 = vunpack.c.l.b16 %v4134
        %v4151 = vunpack.c.l.b16 %v4135
        %v4152 = vunpack.c.l.b16 %v4136
        %v4153 = vpack.c.b16 %v4147, %v4146
        %v4154 = vpack.c.b16 %v4149, %v4148
        %v4155 = vpack.c.b16 %v4151, %v4150
        %v4156 = vpack.c.b16 %v4152, %v4152
        %v4161 = vsel %vm4079, %v4137, 0
        %v4164 = vand.u32 %v4156, %v4084
        %4166 = vmatprep.subr.bf16.mxu0 0
        %4167 = vmatpush1.bf16.msra.mxu0 %v4153
        %4168 = vmatprep.subr.bf16.mxu0 0
        %4169 = vmatpush1.bf16.msra.mxu0 %v4154
        %4170 = vmatprep.subr.bf16.mxu0 0
        %4171 = vmatpush1.bf16.msra.mxu0 %v4155
        %4172 = vmatprep.subr.bf16.mxu0 0
        %4173 = vmatpush1.bf16.msra.mxu0 %v4164
        %4174 = vmatprep.subr.bf16.mxu0 0
        %4175 = vmatpush1.bf16.msra.mxu0 0
        %4176 = vmatprep.subr.bf16.mxu0 0
        %4177 = vmatpush1.bf16.msra.mxu0 0
        %4178 = vmatprep.subr.bf16.mxu0 0
        %4179 = vmatpush1.bf16.msra.mxu0 0
        %4180 = vmatprep.subr.bf16.mxu0 0
        %4181 = vmatpush1.bf16.msra.mxu0 0
        %4182 = vmatprep.subr.bf16.mxu0 0
        %4183 = vmatpush1.bf16.msra.mxu0 0
        %4184 = vmatprep.subr.bf16.mxu0 0
        %4185 = vmatpush1.bf16.msra.mxu0 0
        %4186 = vmatprep.subr.bf16.mxu0 0
        %4187 = vmatpush1.bf16.msra.mxu0 0
        %4188 = vmatprep.subr.bf16.mxu0 0
        %4189 = vmatpush1.bf16.msra.mxu0 0
        %4190 = vmatprep.subr.bf16.mxu0 0
        %4191 = vmatpush1.bf16.msra.mxu0 0
        %4192 = vmatprep.subr.bf16.mxu0 0
        %4193 = vmatpush1.bf16.msra.mxu0 0
        %4194 = vmatprep.subr.bf16.mxu0 0
        %4195 = vmatpush1.bf16.msra.mxu0 0
        %4196 = vmatprep.subr.bf16.mxu0 0
        %4197 = vmatpush1.bf16.msra.mxu0 0
        %4198 = vmatprep.mubr.bf16.mxu0 0
        %4199 = vmatmul.mubr.bf16.gmra.mrb[0].mxu0 %v4161
        %v4200 = vpop.f32.mrb[0].mxu0
        %v4201 = vadd.f32 0.0, %v4200
        %v4202 = vpop.f32.mrb[0].mxu0
        %v4203 = vpop.f32.mrb[0].mxu0
        %v4204 = vpop.f32.mrb[0].mxu0
        %4205 = vdwg.mxu0
        %v4206 = vadd.f32 %v4128, %v4201
        %s4207 = scalar_lea.vmem %s11, 56
        %v4208 = vld [vmem:[%s4207] sm:$0xf]
        %v4209 = vld [vmem:[%s4207 + $0x4] sm:$0xf]
        %v4210 = vld [vmem:[%s4207 + $0x8] sm:$0xf]
        %v4211 = vld [vmem:[%s4207 + $0xc] sm:$0xf]
        %v4212 = vld [vmem:[%s4207 + $0x10] sm:$0xf]
        %v4213 = vld [vmem:[%s4207 + $0x14] sm:$0xf]
        %v4214 = vld [vmem:[%s4207 + $0x18] sm:$0x1]
        %v4216 = vrot.slane %v4050, 1
        %v4224 = vunpack.c.l.b16 %v4208
        %v4225 = vunpack.c.l.b16 %v4209
        %v4226 = vunpack.c.l.b16 %v4210
        %v4227 = vunpack.c.l.b16 %v4211
        %v4228 = vunpack.c.l.b16 %v4212
        %v4229 = vunpack.c.l.b16 %v4213
        %v4230 = vunpack.c.l.b16 %v4214
        %v4231 = vpack.c.b16 %v4225, %v4224
        %v4232 = vpack.c.b16 %v4227, %v4226
        %v4233 = vpack.c.b16 %v4229, %v4228
        %v4234 = vpack.c.b16 %v4230, %v4230
        %v4239 = vsel %vm4079, %v4216, 0
        %v4242 = vand.u32 %v4234, %v4084
        %4244 = vmatprep.subr.bf16.mxu0 0
        %4245 = vmatpush1.bf16.msra.mxu0 %v4231
        %4246 = vmatprep.subr.bf16.mxu0 0
        %4247 = vmatpush1.bf16.msra.mxu0 %v4232
        %4248 = vmatprep.subr.bf16.mxu0 0
        %4249 = vmatpush1.bf16.msra.mxu0 %v4233
        %4250 = vmatprep.subr.bf16.mxu0 0
        %4251 = vmatpush1.bf16.msra.mxu0 %v4242
        %4252 = vmatprep.subr.bf16.mxu0 0
        %4253 = vmatpush1.bf16.msra.mxu0 0
        %4254 = vmatprep.subr.bf16.mxu0 0
        %4255 = vmatpush1.bf16.msra.mxu0 0
        %4256 = vmatprep.subr.bf16.mxu0 0
        %4257 = vmatpush1.bf16.msra.mxu0 0
        %4258 = vmatprep.subr.bf16.mxu0 0
        %4259 = vmatpush1.bf16.msra.mxu0 0
        %4260 = vmatprep.subr.bf16.mxu0 0
        %4261 = vmatpush1.bf16.msra.mxu0 0
        %4262 = vmatprep.subr.bf16.mxu0 0
        %4263 = vmatpush1.bf16.msra.mxu0 0
        %4264 = vmatprep.subr.bf16.mxu0 0
        %4265 = vmatpush1.bf16.msra.mxu0 0
        %4266 = vmatprep.subr.bf16.mxu0 0
        %4267 = vmatpush1.bf16.msra.mxu0 0
        %4268 = vmatprep.subr.bf16.mxu0 0
        %4269 = vmatpush1.bf16.msra.mxu0 0
        %4270 = vmatprep.subr.bf16.mxu0 0
        %4271 = vmatpush1.bf16.msra.mxu0 0
        %4272 = vmatprep.subr.bf16.mxu0 0
        %4273 = vmatpush1.bf16.msra.mxu0 0
        %4274 = vmatprep.subr.bf16.mxu0 0
        %4275 = vmatpush1.bf16.msra.mxu0 0
        %4276 = vmatprep.mubr.bf16.mxu0 0
        %4277 = vmatmul.mubr.bf16.gmra.mrb[0].mxu0 %v4239
        %v4278 = vpop.f32.mrb[0].mxu0
        %v4279 = vadd.f32 0.0, %v4278
        %v4280 = vpop.f32.mrb[0].mxu0
        %v4281 = vpop.f32.mrb[0].mxu0
        %v4282 = vpop.f32.mrb[0].mxu0
        %4283 = vdwg.mxu0
        %v4284 = vadd.f32 %v4206, %v4279
        %s4285 = scalar_lea.vmem %s11, 84
        %v4286 = vld [vmem:[%s4285] sm:$0xf]
        %v4287 = vld [vmem:[%s4285 + $0x4] sm:$0xf]
        %v4288 = vld [vmem:[%s4285 + $0x8] sm:$0xf]
        %v4289 = vld [vmem:[%s4285 + $0xc] sm:$0xf]
        %v4290 = vld [vmem:[%s4285 + $0x10] sm:$0xf]
        %v4291 = vld [vmem:[%s4285 + $0x14] sm:$0xf]
        %v4292 = vld [vmem:[%s4285 + $0x18] sm:$0x1]
        %v4293 = vrot.slane %v4137, 1
        %v4301 = vunpack.c.l.b16 %v4286
        %v4302 = vunpack.c.l.b16 %v4287
        %v4303 = vunpack.c.l.b16 %v4288
        %v4304 = vunpack.c.l.b16 %v4289
        %v4305 = vunpack.c.l.b16 %v4290
        %v4306 = vunpack.c.l.b16 %v4291
        %v4307 = vunpack.c.l.b16 %v4292
        %v4308 = vpack.c.b16 %v4302, %v4301
        %v4309 = vpack.c.b16 %v4304, %v4303
        %v4310 = vpack.c.b16 %v4306, %v4305
        %v4311 = vpack.c.b16 %v4307, %v4307
        %v4316 = vsel %vm4079, %v4293, 0
        %v4319 = vand.u32 %v4311, %v4084
        %4321 = vmatprep.subr.bf16.mxu0 0
        %4322 = vmatpush1.bf16.msra.mxu0 %v4308
        %4323 = vmatprep.subr.bf16.mxu0 0
        %4324 = vmatpush1.bf16.msra.mxu0 %v4309
        %4325 = vmatprep.subr.bf16.mxu0 0
        %4326 = vmatpush1.bf16.msra.mxu0 %v4310
        %4327 = vmatprep.subr.bf16.mxu0 0
        %4328 = vmatpush1.bf16.msra.mxu0 %v4319
        %4329 = vmatprep.subr.bf16.mxu0 0
        %4330 = vmatpush1.bf16.msra.mxu0 0
        %4331 = vmatprep.subr.bf16.mxu0 0
        %4332 = vmatpush1.bf16.msra.mxu0 0
        %4333 = vmatprep.subr.bf16.mxu0 0
        %4334 = vmatpush1.bf16.msra.mxu0 0
        %4335 = vmatprep.subr.bf16.mxu0 0
        %4336 = vmatpush1.bf16.msra.mxu0 0
        %4337 = vmatprep.subr.bf16.mxu0 0
        %4338 = vmatpush1.bf16.msra.mxu0 0
        %4339 = vmatprep.subr.bf16.mxu0 0
        %4340 = vmatpush1.bf16.msra.mxu0 0
        %4341 = vmatprep.subr.bf16.mxu0 0
        %4342 = vmatpush1.bf16.msra.mxu0 0
        %4343 = vmatprep.subr.bf16.mxu0 0
        %4344 = vmatpush1.bf16.msra.mxu0 0
        %4345 = vmatprep.subr.bf16.mxu0 0
        %4346 = vmatpush1.bf16.msra.mxu0 0
        %4347 = vmatprep.subr.bf16.mxu0 0
        %4348 = vmatpush1.bf16.msra.mxu0 0
        %4349 = vmatprep.subr.bf16.mxu0 0
        %4350 = vmatpush1.bf16.msra.mxu0 0
        %4351 = vmatprep.subr.bf16.mxu0 0
        %4352 = vmatpush1.bf16.msra.mxu0 0
        %4353 = vmatprep.mubr.bf16.mxu0 0
        %4354 = vmatmul.mubr.bf16.gmra.mrb[0].mxu0 %v4316
        %v4355 = vpop.f32.mrb[0].mxu0
        %v4356 = vadd.f32 0.0, %v4355
        %v4357 = vpop.f32.mrb[0].mxu0
        %v4358 = vpop.f32.mrb[0].mxu0
        %v4359 = vpop.f32.mrb[0].mxu0
        %4360 = vdwg.mxu0
        %v4361 = vadd.f32 %v4284, %v4356
        %s4362 = scalar_lea.vmem %s11, 112
        %v4363 = vld [vmem:[%s4362] sm:$0xf]
        %v4364 = vld [vmem:[%s4362 + $0x4] sm:$0xf]
        %v4365 = vld [vmem:[%s4362 + $0x8] sm:$0xf]
        %v4366 = vld [vmem:[%s4362 + $0xc] sm:$0xf]
        %v4367 = vld [vmem:[%s4362 + $0x10] sm:$0xf]
        %v4368 = vld [vmem:[%s4362 + $0x14] sm:$0xf]
        %v4369 = vld [vmem:[%s4362 + $0x18] sm:$0x1]
        %v4370 = vrot.slane %v4050, 2
        %v4378 = vunpack.c.l.b16 %v4363
        %v4379 = vunpack.c.l.b16 %v4364
        %v4380 = vunpack.c.l.b16 %v4365
        %v4381 = vunpack.c.l.b16 %v4366
        %v4382 = vunpack.c.l.b16 %v4367
        %v4383 = vunpack.c.l.b16 %v4368
        %v4384 = vunpack.c.l.b16 %v4369
        %v4385 = vpack.c.b16 %v4379, %v4378
        %v4386 = vpack.c.b16 %v4381, %v4380
        %v4387 = vpack.c.b16 %v4383, %v4382
        %v4388 = vpack.c.b16 %v4384, %v4384
        %v4393 = vsel %vm4079, %v4370, 0
        %v4396 = vand.u32 %v4388, %v4084
        %4398 = vmatprep.subr.bf16.mxu0 0
        %4399 = vmatpush1.bf16.msra.mxu0 %v4385
        %4400 = vmatprep.subr.bf16.mxu0 0
        %4401 = vmatpush1.bf16.msra.mxu0 %v4386
        %4402 = vmatprep.subr.bf16.mxu0 0
        %4403 = vmatpush1.bf16.msra.mxu0 %v4387
        %4404 = vmatprep.subr.bf16.mxu0 0
        %4405 = vmatpush1.bf16.msra.mxu0 %v4396
        %4406 = vmatprep.subr.bf16.mxu0 0
        %4407 = vmatpush1.bf16.msra.mxu0 0
        %4408 = vmatprep.subr.bf16.mxu0 0
        %4409 = vmatpush1.bf16.msra.mxu0 0
        %4410 = vmatprep.subr.bf16.mxu0 0
        %4411 = vmatpush1.bf16.msra.mxu0 0
        %4412 = vmatprep.subr.bf16.mxu0 0
        %4413 = vmatpush1.bf16.msra.mxu0 0
        %4414 = vmatprep.subr.bf16.mxu0 0
        %4415 = vmatpush1.bf16.msra.mxu0 0
        %4416 = vmatprep.subr.bf16.mxu0 0
        %4417 = vmatpush1.bf16.msra.mxu0 0
        %4418 = vmatprep.subr.bf16.mxu0 0
        %4419 = vmatpush1.bf16.msra.mxu0 0
        %4420 = vmatprep.subr.bf16.mxu0 0
        %4421 = vmatpush1.bf16.msra.mxu0 0
        %4422 = vmatprep.subr.bf16.mxu0 0
        %4423 = vmatpush1.bf16.msra.mxu0 0
        %4424 = vmatprep.subr.bf16.mxu0 0
        %4425 = vmatpush1.bf16.msra.mxu0 0
        %4426 = vmatprep.subr.bf16.mxu0 0
        %4427 = vmatpush1.bf16.msra.mxu0 0
        %4428 = vmatprep.subr.bf16.mxu0 0
        %4429 = vmatpush1.bf16.msra.mxu0 0
        %4430 = vmatprep.mubr.bf16.mxu0 0
        %4431 = vmatmul.mubr.bf16.gmra.mrb[0].mxu0 %v4393
        %v4432 = vpop.f32.mrb[0].mxu0
        %v4433 = vadd.f32 0.0, %v4432
        %v4434 = vpop.f32.mrb[0].mxu0
        %v4435 = vpop.f32.mrb[0].mxu0
        %v4436 = vpop.f32.mrb[0].mxu0
        %4437 = vdwg.mxu0
        %v4438 = vadd.f32 %v4361, %v4433
        %s4439 = scalar_lea.vmem %s11, 140
        %v4440 = vld [vmem:[%s4439] sm:$0xf]
        %v4441 = vld [vmem:[%s4439 + $0x4] sm:$0xf]
        %v4442 = vld [vmem:[%s4439 + $0x8] sm:$0xf]
        %v4443 = vld [vmem:[%s4439 + $0xc] sm:$0xf]
        %v4444 = vld [vmem:[%s4439 + $0x10] sm:$0xf]
        %v4445 = vld [vmem:[%s4439 + $0x14] sm:$0xf]
        %v4446 = vld [vmem:[%s4439 + $0x18] sm:$0x1]
        %v4447 = vrot.slane %v4137, 2
        %v4455 = vunpack.c.l.b16 %v4440
        %v4456 = vunpack.c.l.b16 %v4441
        %v4457 = vunpack.c.l.b16 %v4442
        %v4458 = vunpack.c.l.b16 %v4443
        %v4459 = vunpack.c.l.b16 %v4444
        %v4460 = vunpack.c.l.b16 %v4445
        %v4461 = vunpack.c.l.b16 %v4446
        %v4462 = vpack.c.b16 %v4456, %v4455
        %v4463 = vpack.c.b16 %v4458, %v4457
        %v4464 = vpack.c.b16 %v4460, %v4459
        %v4465 = vpack.c.b16 %v4461, %v4461
        %v4470 = vsel %vm4079, %v4447, 0
        %v4473 = vand.u32 %v4465, %v4084
        %4475 = vmatprep.subr.bf16.mxu0 0
        %4476 = vmatpush1.bf16.msra.mxu0 %v4462
        %4477 = vmatprep.subr.bf16.mxu0 0
        %4478 = vmatpush1.bf16.msra.mxu0 %v4463
        %4479 = vmatprep.subr.bf16.mxu0 0
        %4480 = vmatpush1.bf16.msra.mxu0 %v4464
        %4481 = vmatprep.subr.bf16.mxu0 0
        %4482 = vmatpush1.bf16.msra.mxu0 %v4473
        %4483 = vmatprep.subr.bf16.mxu0 0
        %4484 = vmatpush1.bf16.msra.mxu0 0
        %4485 = vmatprep.subr.bf16.mxu0 0
        %4486 = vmatpush1.bf16.msra.mxu0 0
        %4487 = vmatprep.subr.bf16.mxu0 0
        %4488 = vmatpush1.bf16.msra.mxu0 0
        %4489 = vmatprep.subr.bf16.mxu0 0
        %4490 = vmatpush1.bf16.msra.mxu0 0
        %4491 = vmatprep.subr.bf16.mxu0 0
        %4492 = vmatpush1.bf16.msra.mxu0 0
        %4493 = vmatprep.subr.bf16.mxu0 0
        %4494 = vmatpush1.bf16.msra.mxu0 0
        %4495 = vmatprep.subr.bf16.mxu0 0
        %4496 = vmatpush1.bf16.msra.mxu0 0
        %4497 = vmatprep.subr.bf16.mxu0 0
        %4498 = vmatpush1.bf16.msra.mxu0 0
        %4499 = vmatprep.subr.bf16.mxu0 0
        %4500 = vmatpush1.bf16.msra.mxu0 0
        %4501 = vmatprep.subr.bf16.mxu0 0
        %4502 = vmatpush1.bf16.msra.mxu0 0
        %4503 = vmatprep.subr.bf16.mxu0 0
        %4504 = vmatpush1.bf16.msra.mxu0 0
        %4505 = vmatprep.subr.bf16.mxu0 0
        %4506 = vmatpush1.bf16.msra.mxu0 0
        %4507 = vmatprep.mubr.bf16.mxu0 0
        %4508 = vmatmul.mubr.bf16.gmra.mrb[0].mxu0 %v4470
        %v4509 = vpop.f32.mrb[0].mxu0
        %v4510 = vadd.f32 0.0, %v4509
        %v4511 = vpop.f32.mrb[0].mxu0
        %v4512 = vpop.f32.mrb[0].mxu0
        %v4513 = vpop.f32.mrb[0].mxu0
        %4514 = vdwg.mxu0
        %v4515 = vadd.f32 %v4438, %v4510
        %s4516 = scalar_lea.vmem %s11, 168
        %v4517 = vld [vmem:[%s4516] sm:$0xf]
        %v4518 = vld [vmem:[%s4516 + $0x4] sm:$0xf]
        %v4519 = vld [vmem:[%s4516 + $0x8] sm:$0xf]
        %v4520 = vld [vmem:[%s4516 + $0xc] sm:$0xf]
        %v4521 = vld [vmem:[%s4516 + $0x10] sm:$0xf]
        %v4522 = vld [vmem:[%s4516 + $0x14] sm:$0xf]
        %v4523 = vld [vmem:[%s4516 + $0x18] sm:$0x1]
        %v4524 = vrot.slane %v4050, 3
        %v4532 = vunpack.c.l.b16 %v4517
        %v4533 = vunpack.c.l.b16 %v4518
        %v4534 = vunpack.c.l.b16 %v4519
        %v4535 = vunpack.c.l.b16 %v4520
        %v4536 = vunpack.c.l.b16 %v4521
        %v4537 = vunpack.c.l.b16 %v4522
        %v4538 = vunpack.c.l.b16 %v4523
        %v4539 = vpack.c.b16 %v4533, %v4532
        %v4540 = vpack.c.b16 %v4535, %v4534
        %v4541 = vpack.c.b16 %v4537, %v4536
        %v4542 = vpack.c.b16 %v4538, %v4538
        %v4547 = vsel %vm4079, %v4524, 0
        %v4550 = vand.u32 %v4542, %v4084
        %4552 = vmatprep.subr.bf16.mxu0 0
        %4553 = vmatpush1.bf16.msra.mxu0 %v4539
        %4554 = vmatprep.subr.bf16.mxu0 0
        %4555 = vmatpush1.bf16.msra.mxu0 %v4540
        %4556 = vmatprep.subr.bf16.mxu0 0
        %4557 = vmatpush1.bf16.msra.mxu0 %v4541
        %4558 = vmatprep.subr.bf16.mxu0 0
        %4559 = vmatpush1.bf16.msra.mxu0 %v4550
        %4560 = vmatprep.subr.bf16.mxu0 0
        %4561 = vmatpush1.bf16.msra.mxu0 0
        %4562 = vmatprep.subr.bf16.mxu0 0
        %4563 = vmatpush1.bf16.msra.mxu0 0
        %4564 = vmatprep.subr.bf16.mxu0 0
        %4565 = vmatpush1.bf16.msra.mxu0 0
        %4566 = vmatprep.subr.bf16.mxu0 0
        %4567 = vmatpush1.bf16.msra.mxu0 0
        %4568 = vmatprep.subr.bf16.mxu0 0
        %4569 = vmatpush1.bf16.msra.mxu0 0
        %4570 = vmatprep.subr.bf16.mxu0 0
        %4571 = vmatpush1.bf16.msra.mxu0 0
        %4572 = vmatprep.subr.bf16.mxu0 0
        %4573 = vmatpush1.bf16.msra.mxu0 0
        %4574 = vmatprep.subr.bf16.mxu0 0
        %4575 = vmatpush1.bf16.msra.mxu0 0
        %4576 = vmatprep.subr.bf16.mxu0 0
        %4577 = vmatpush1.bf16.msra.mxu0 0
        %4578 = vmatprep.subr.bf16.mxu0 0
        %4579 = vmatpush1.bf16.msra.mxu0 0
        %4580 = vmatprep.subr.bf16.mxu0 0
        %4581 = vmatpush1.bf16.msra.mxu0 0
        %4582 = vmatprep.subr.bf16.mxu0 0
        %4583 = vmatpush1.bf16.msra.mxu0 0
        %4584 = vmatprep.mubr.bf16.mxu0 0
        %4585 = vmatmul.mubr.bf16.gmra.mrb[0].mxu0 %v4547
        %v4586 = vpop.f32.mrb[0].mxu0
        %v4587 = vadd.f32 0.0, %v4586
        %v4588 = vpop.f32.mrb[0].mxu0
        %v4589 = vpop.f32.mrb[0].mxu0
        %v4590 = vpop.f32.mrb[0].mxu0
        %4591 = vdwg.mxu0
        %v4592 = vadd.f32 %v4515, %v4587
        %s4593 = scalar_lea.vmem %s11, 196
        %v4594 = vld [vmem:[%s4593] sm:$0xf]
        %v4595 = vld [vmem:[%s4593 + $0x4] sm:$0xf]
        %v4596 = vld [vmem:[%s4593 + $0x8] sm:$0xf]
        %v4597 = vld [vmem:[%s4593 + $0xc] sm:$0xf]
        %v4598 = vld [vmem:[%s4593 + $0x10] sm:$0xf]
        %v4599 = vld [vmem:[%s4593 + $0x14] sm:$0xf]
        %v4600 = vld [vmem:[%s4593 + $0x18] sm:$0x1]
        %v4601 = vrot.slane %v4137, 3
        %v4609 = vunpack.c.l.b16 %v4594
        %v4610 = vunpack.c.l.b16 %v4595
        %v4611 = vunpack.c.l.b16 %v4596
        %v4612 = vunpack.c.l.b16 %v4597
        %v4613 = vunpack.c.l.b16 %v4598
        %v4614 = vunpack.c.l.b16 %v4599
        %v4615 = vunpack.c.l.b16 %v4600
        %v4616 = vpack.c.b16 %v4610, %v4609
        %v4617 = vpack.c.b16 %v4612, %v4611
        %v4618 = vpack.c.b16 %v4614, %v4613
        %v4619 = vpack.c.b16 %v4615, %v4615
        %v4624 = vsel %vm4079, %v4601, 0
        %v4627 = vand.u32 %v4619, %v4084
        %4629 = vmatprep.subr.bf16.mxu0 0
        %4630 = vmatpush1.bf16.msra.mxu0 %v4616
        %4631 = vmatprep.subr.bf16.mxu0 0
        %4632 = vmatpush1.bf16.msra.mxu0 %v4617
        %4633 = vmatprep.subr.bf16.mxu0 0
        %4634 = vmatpush1.bf16.msra.mxu0 %v4618
        %4635 = vmatprep.subr.bf16.mxu0 0
        %4636 = vmatpush1.bf16.msra.mxu0 %v4627
        %4637 = vmatprep.subr.bf16.mxu0 0
        %4638 = vmatpush1.bf16.msra.mxu0 0
        %4639 = vmatprep.subr.bf16.mxu0 0
        %4640 = vmatpush1.bf16.msra.mxu0 0
        %4641 = vmatprep.subr.bf16.mxu0 0
        %4642 = vmatpush1.bf16.msra.mxu0 0
        %4643 = vmatprep.subr.bf16.mxu0 0
        %4644 = vmatpush1.bf16.msra.mxu0 0
        %4645 = vmatprep.subr.bf16.mxu0 0
        %4646 = vmatpush1.bf16.msra.mxu0 0
        %4647 = vmatprep.subr.bf16.mxu0 0
        %4648 = vmatpush1.bf16.msra.mxu0 0
        %4649 = vmatprep.subr.bf16.mxu0 0
        %4650 = vmatpush1.bf16.msra.mxu0 0
        %4651 = vmatprep.subr.bf16.mxu0 0
        %4652 = vmatpush1.bf16.msra.mxu0 0
        %4653 = vmatprep.subr.bf16.mxu0 0
        %4654 = vmatpush1.bf16.msra.mxu0 0
        %4655 = vmatprep.subr.bf16.mxu0 0
        %4656 = vmatpush1.bf16.msra.mxu0 0
        %4657 = vmatprep.subr.bf16.mxu0 0
        %4658 = vmatpush1.bf16.msra.mxu0 0
        %4659 = vmatprep.subr.bf16.mxu0 0
        %4660 = vmatpush1.bf16.msra.mxu0 0
        %4661 = vmatprep.mubr.bf16.mxu0 0
        %4662 = vmatmul.mubr.bf16.gmra.mrb[0].mxu0 %v4624
        %v4663 = vpop.f32.mrb[0].mxu0
        %v4664 = vadd.f32 0.0, %v4663
        %v4665 = vpop.f32.mrb[0].mxu0
        %v4666 = vpop.f32.mrb[0].mxu0
        %v4667 = vpop.f32.mrb[0].mxu0
        %4668 = vdwg.mxu0
        %v4669 = vadd.f32 %v4592, %v4664
        %v4670 = vpack.c.bf16 %v4046, %v4046
        %s4671 = scalar_lea.vmem %s11, 224
        %v4672 = vld [vmem:[%s4671] sm:$0xf]
        %v4673 = vld [vmem:[%s4671 + $0x4] sm:$0xf]
        %v4674 = vld [vmem:[%s4671 + $0x8] sm:$0xf]
        %v4675 = vld [vmem:[%s4671 + $0xc] sm:$0xf]
        %v4676 = vld [vmem:[%s4671 + $0x10] sm:$0xf]
        %v4677 = vld [vmem:[%s4671 + $0x14] sm:$0xf]
        %v4678 = vld [vmem:[%s4671 + $0x18] sm:$0x1]
        %v4686 = vunpack.c.l.b16 %v4672
        %v4687 = vunpack.c.l.b16 %v4673
        %v4688 = vunpack.c.l.b16 %v4674
        %v4689 = vunpack.c.l.b16 %v4675
        %v4690 = vunpack.c.l.b16 %v4676
        %v4691 = vunpack.c.l.b16 %v4677
        %v4692 = vunpack.c.l.b16 %v4678
        %v4693 = vpack.c.b16 %v4687, %v4686
        %v4694 = vpack.c.b16 %v4689, %v4688
        %v4695 = vpack.c.b16 %v4691, %v4690
        %v4696 = vpack.c.b16 %v4692, %v4692
        %v4701 = vsel %vm4079, %v4670, 0
        %v4704 = vand.u32 %v4696, %v4084
        %4706 = vmatprep.subr.bf16.mxu0 0
        %4707 = vmatpush1.bf16.msra.mxu0 %v4693
        %4708 = vmatprep.subr.bf16.mxu0 0
        %4709 = vmatpush1.bf16.msra.mxu0 %v4694
        %4710 = vmatprep.subr.bf16.mxu0 0
        %4711 = vmatpush1.bf16.msra.mxu0 %v4695
        %4712 = vmatprep.subr.bf16.mxu0 0
        %4713 = vmatpush1.bf16.msra.mxu0 %v4704
        %4714 = vmatprep.subr.bf16.mxu0 0
        %4715 = vmatpush1.bf16.msra.mxu0 0
        %4716 = vmatprep.subr.bf16.mxu0 0
        %4717 = vmatpush1.bf16.msra.mxu0 0
        %4718 = vmatprep.subr.bf16.mxu0 0
        %4719 = vmatpush1.bf16.msra.mxu0 0
        %4720 = vmatprep.subr.bf16.mxu0 0
        %4721 = vmatpush1.bf16.msra.mxu0 0
        %4722 = vmatprep.subr.bf16.mxu0 0
        %4723 = vmatpush1.bf16.msra.mxu0 0
        %4724 = vmatprep.subr.bf16.mxu0 0
        %4725 = vmatpush1.bf16.msra.mxu0 0
        %4726 = vmatprep.subr.bf16.mxu0 0
        %4727 = vmatpush1.bf16.msra.mxu0 0
        %4728 = vmatprep.subr.bf16.mxu0 0
        %4729 = vmatpush1.bf16.msra.mxu0 0
        %4730 = vmatprep.subr.bf16.mxu0 0
        %4731 = vmatpush1.bf16.msra.mxu0 0
        %4732 = vmatprep.subr.bf16.mxu0 0
        %4733 = vmatpush1.bf16.msra.mxu0 0
        %4734 = vmatprep.subr.bf16.mxu0 0
        %4735 = vmatpush1.bf16.msra.mxu0 0
        %4736 = vmatprep.subr.bf16.mxu0 0
        %4737 = vmatpush1.bf16.msra.mxu0 0
        %4738 = vmatprep.mubr.bf16.mxu0 0
        %4739 = vmatmul.mubr.bf16.gmra.mrb[0].mxu0 %v4701
        %v4740 = vpop.f32.mrb[0].mxu0
        %v4741 = vadd.f32 0.0, %v4740
        %v4742 = vpop.f32.mrb[0].mxu0
        %v4743 = vpop.f32.mrb[0].mxu0
        %v4744 = vpop.f32.mrb[0].mxu0
        %4745 = vdwg.mxu0
        %v4746 = vadd.f32 %v4669, %v4741
        %s4747 = scalar_lea.vmem %s11, 252
        %v4748 = vld [vmem:[%s4747] sm:$0xf]
        %v4749 = vld [vmem:[%s4747 + $0x4] sm:$0xf]
        %v4750 = vld [vmem:[%s4747 + $0x8] sm:$0xf]
        %v4751 = vld [vmem:[%s4747 + $0xc] sm:$0xf]
        %v4752 = vld [vmem:[%s4747 + $0x10] sm:$0xf]
        %v4753 = vld [vmem:[%s4747 + $0x14] sm:$0xf]
        %v4754 = vld [vmem:[%s4747 + $0x18] sm:$0x1]
        %v4755 = vshrl.u32 %v4670, 16
        %v4764 = vunpack.c.l.b16 %v4748
        %v4765 = vunpack.c.l.b16 %v4749
        %v4766 = vunpack.c.l.b16 %v4750
        %v4767 = vunpack.c.l.b16 %v4751
        %v4768 = vunpack.c.l.b16 %v4752
        %v4769 = vunpack.c.l.b16 %v4753
        %v4770 = vunpack.c.l.b16 %v4754
        %v4771 = vpack.c.b16 %v4765, %v4764
        %v4772 = vpack.c.b16 %v4767, %v4766
        %v4773 = vpack.c.b16 %v4769, %v4768
        %v4774 = vpack.c.b16 %v4770, %v4770
        %v4779 = vsel %vm4079, %v4755, 0
        %v4782 = vand.u32 %v4774, %v4084
        %4784 = vmatprep.subr.bf16.mxu0 0
        %4785 = vmatpush1.bf16.msra.mxu0 %v4771
        %4786 = vmatprep.subr.bf16.mxu0 0
        %4787 = vmatpush1.bf16.msra.mxu0 %v4772
        %4788 = vmatprep.subr.bf16.mxu0 0
        %4789 = vmatpush1.bf16.msra.mxu0 %v4773
        %4790 = vmatprep.subr.bf16.mxu0 0
        %4791 = vmatpush1.bf16.msra.mxu0 %v4782
        %4792 = vmatprep.subr.bf16.mxu0 0
        %4793 = vmatpush1.bf16.msra.mxu0 0
        %4794 = vmatprep.subr.bf16.mxu0 0
        %4795 = vmatpush1.bf16.msra.mxu0 0
        %4796 = vmatprep.subr.bf16.mxu0 0
        %4797 = vmatpush1.bf16.msra.mxu0 0
        %4798 = vmatprep.subr.bf16.mxu0 0
        %4799 = vmatpush1.bf16.msra.mxu0 0
        %4800 = vmatprep.subr.bf16.mxu0 0
        %4801 = vmatpush1.bf16.msra.mxu0 0
        %4802 = vmatprep.subr.bf16.mxu0 0
        %4803 = vmatpush1.bf16.msra.mxu0 0
        %4804 = vmatprep.subr.bf16.mxu0 0
        %4805 = vmatpush1.bf16.msra.mxu0 0
        %4806 = vmatprep.subr.bf16.mxu0 0
        %4807 = vmatpush1.bf16.msra.mxu0 0
        %4808 = vmatprep.subr.bf16.mxu0 0
        %4809 = vmatpush1.bf16.msra.mxu0 0
        %4810 = vmatprep.subr.bf16.mxu0 0
        %4811 = vmatpush1.bf16.msra.mxu0 0
        %4812 = vmatprep.subr.bf16.mxu0 0
        %4813 = vmatpush1.bf16.msra.mxu0 0
        %4814 = vmatprep.subr.bf16.mxu0 0
        %4815 = vmatpush1.bf16.msra.mxu0 0
        %4816 = vmatprep.mubr.bf16.mxu0 0
        %4817 = vmatmul.mubr.bf16.gmra.mrb[0].mxu0 %v4779
        %v4818 = vpop.f32.mrb[0].mxu0
        %v4819 = vadd.f32 0.0, %v4818
        %v4820 = vpop.f32.mrb[0].mxu0
        %v4821 = vpop.f32.mrb[0].mxu0
        %v4822 = vpop.f32.mrb[0].mxu0
        %4823 = vdwg.mxu0
        %v4824 = vadd.f32 %v4746, %v4819
        %s4825 = scalar_lea.vmem %s11, 280
        %v4826 = vld [vmem:[%s4825] sm:$0xf]
        %v4827 = vld [vmem:[%s4825 + $0x4] sm:$0xf]
        %v4828 = vld [vmem:[%s4825 + $0x8] sm:$0xf]
        %v4829 = vld [vmem:[%s4825 + $0xc] sm:$0xf]
        %v4830 = vld [vmem:[%s4825 + $0x10] sm:$0xf]
        %v4831 = vld [vmem:[%s4825 + $0x14] sm:$0xf]
        %v4832 = vld [vmem:[%s4825 + $0x18] sm:$0x1]
        %v4834 = vrot.slane %v4670, 1
        %v4842 = vunpack.c.l.b16 %v4826
        %v4843 = vunpack.c.l.b16 %v4827
        %v4844 = vunpack.c.l.b16 %v4828
        %v4845 = vunpack.c.l.b16 %v4829
        %v4846 = vunpack.c.l.b16 %v4830
        %v4847 = vunpack.c.l.b16 %v4831
        %v4848 = vunpack.c.l.b16 %v4832
        %v4849 = vpack.c.b16 %v4843, %v4842
        %v4850 = vpack.c.b16 %v4845, %v4844
        %v4851 = vpack.c.b16 %v4847, %v4846
        %v4852 = vpack.c.b16 %v4848, %v4848
        %v4857 = vsel %vm4079, %v4834, 0
        %v4860 = vand.u32 %v4852, %v4084
        %4862 = vmatprep.subr.bf16.mxu0 0
        %4863 = vmatpush1.bf16.msra.mxu0 %v4849
        %4864 = vmatprep.subr.bf16.mxu0 0
        %4865 = vmatpush1.bf16.msra.mxu0 %v4850
        %4866 = vmatprep.subr.bf16.mxu0 0
        %4867 = vmatpush1.bf16.msra.mxu0 %v4851
        %4868 = vmatprep.subr.bf16.mxu0 0
        %4869 = vmatpush1.bf16.msra.mxu0 %v4860
        %4870 = vmatprep.subr.bf16.mxu0 0
        %4871 = vmatpush1.bf16.msra.mxu0 0
        %4872 = vmatprep.subr.bf16.mxu0 0
        %4873 = vmatpush1.bf16.msra.mxu0 0
        %4874 = vmatprep.subr.bf16.mxu0 0
        %4875 = vmatpush1.bf16.msra.mxu0 0
        %4876 = vmatprep.subr.bf16.mxu0 0
        %4877 = vmatpush1.bf16.msra.mxu0 0
        %4878 = vmatprep.subr.bf16.mxu0 0
        %4879 = vmatpush1.bf16.msra.mxu0 0
        %4880 = vmatprep.subr.bf16.mxu0 0
        %4881 = vmatpush1.bf16.msra.mxu0 0
        %4882 = vmatprep.subr.bf16.mxu0 0
        %4883 = vmatpush1.bf16.msra.mxu0 0
        %4884 = vmatprep.subr.bf16.mxu0 0
        %4885 = vmatpush1.bf16.msra.mxu0 0
        %4886 = vmatprep.subr.bf16.mxu0 0
        %4887 = vmatpush1.bf16.msra.mxu0 0
        %4888 = vmatprep.subr.bf16.mxu0 0
        %4889 = vmatpush1.bf16.msra.mxu0 0
        %4890 = vmatprep.subr.bf16.mxu0 0
        %4891 = vmatpush1.bf16.msra.mxu0 0
        %4892 = vmatprep.subr.bf16.mxu0 0
        %4893 = vmatpush1.bf16.msra.mxu0 0
        %4894 = vmatprep.mubr.bf16.mxu0 0
        %4895 = vmatmul.mubr.bf16.gmra.mrb[0].mxu0 %v4857
        %v4896 = vpop.f32.mrb[0].mxu0
        %v4897 = vadd.f32 0.0, %v4896
        %v4898 = vpop.f32.mrb[0].mxu0
        %v4899 = vpop.f32.mrb[0].mxu0
        %v4900 = vpop.f32.mrb[0].mxu0
        %4901 = vdwg.mxu0
        %v4902 = vadd.f32 %v4824, %v4897
        %s4903 = scalar_lea.vmem %s11, 308
        %v4904 = vld [vmem:[%s4903] sm:$0xf]
        %v4905 = vld [vmem:[%s4903 + $0x4] sm:$0xf]
        %v4906 = vld [vmem:[%s4903 + $0x8] sm:$0xf]
        %v4907 = vld [vmem:[%s4903 + $0xc] sm:$0xf]
        %v4908 = vld [vmem:[%s4903 + $0x10] sm:$0xf]
        %v4909 = vld [vmem:[%s4903 + $0x14] sm:$0xf]
        %v4910 = vld [vmem:[%s4903 + $0x18] sm:$0x1]
        %v4911 = vrot.slane %v4755, 1
        %v4919 = vunpack.c.l.b16 %v4904
        %v4920 = vunpack.c.l.b16 %v4905
        %v4921 = vunpack.c.l.b16 %v4906
        %v4922 = vunpack.c.l.b16 %v4907
        %v4923 = vunpack.c.l.b16 %v4908
        %v4924 = vunpack.c.l.b16 %v4909
        %v4925 = vunpack.c.l.b16 %v4910
        %v4926 = vpack.c.b16 %v4920, %v4919
        %v4927 = vpack.c.b16 %v4922, %v4921
        %v4928 = vpack.c.b16 %v4924, %v4923
        %v4929 = vpack.c.b16 %v4925, %v4925
        %v4934 = vsel %vm4079, %v4911, 0
        %v4937 = vand.u32 %v4929, %v4084
        %4939 = vmatprep.subr.bf16.mxu0 0
        %4940 = vmatpush1.bf16.msra.mxu0 %v4926
        %4941 = vmatprep.subr.bf16.mxu0 0
        %4942 = vmatpush1.bf16.msra.mxu0 %v4927
        %4943 = vmatprep.subr.bf16.mxu0 0
        %4944 = vmatpush1.bf16.msra.mxu0 %v4928
        %4945 = vmatprep.subr.bf16.mxu0 0
        %4946 = vmatpush1.bf16.msra.mxu0 %v4937
        %4947 = vmatprep.subr.bf16.mxu0 0
        %4948 = vmatpush1.bf16.msra.mxu0 0
        %4949 = vmatprep.subr.bf16.mxu0 0
        %4950 = vmatpush1.bf16.msra.mxu0 0
        %4951 = vmatprep.subr.bf16.mxu0 0
        %4952 = vmatpush1.bf16.msra.mxu0 0
        %4953 = vmatprep.subr.bf16.mxu0 0
        %4954 = vmatpush1.bf16.msra.mxu0 0
        %4955 = vmatprep.subr.bf16.mxu0 0
        %4956 = vmatpush1.bf16.msra.mxu0 0
        %4957 = vmatprep.subr.bf16.mxu0 0
        %4958 = vmatpush1.bf16.msra.mxu0 0
        %4959 = vmatprep.subr.bf16.mxu0 0
        %4960 = vmatpush1.bf16.msra.mxu0 0
        %4961 = vmatprep.subr.bf16.mxu0 0
        %4962 = vmatpush1.bf16.msra.mxu0 0
        %4963 = vmatprep.subr.bf16.mxu0 0
        %4964 = vmatpush1.bf16.msra.mxu0 0
        %4965 = vmatprep.subr.bf16.mxu0 0
        %4966 = vmatpush1.bf16.msra.mxu0 0
        %4967 = vmatprep.subr.bf16.mxu0 0
        %4968 = vmatpush1.bf16.msra.mxu0 0
        %4969 = vmatprep.subr.bf16.mxu0 0
        %4970 = vmatpush1.bf16.msra.mxu0 0
        %4971 = vmatprep.mubr.bf16.mxu0 0
        %4972 = vmatmul.mubr.bf16.gmra.mrb[0].mxu0 %v4934
        %v4973 = vpop.f32.mrb[0].mxu0
        %v4974 = vadd.f32 0.0, %v4973
        %v4975 = vpop.f32.mrb[0].mxu0
        %v4976 = vpop.f32.mrb[0].mxu0
        %v4977 = vpop.f32.mrb[0].mxu0
        %4978 = vdwg.mxu0
        %v4979 = vadd.f32 %v4902, %v4974
        %s4980 = scalar_lea.vmem %s11, 336
        %v4981 = vld [vmem:[%s4980] sm:$0xf]
        %v4982 = vld [vmem:[%s4980 + $0x4] sm:$0xf]
        %v4983 = vld [vmem:[%s4980 + $0x8] sm:$0xf]
        %v4984 = vld [vmem:[%s4980 + $0xc] sm:$0xf]
        %v4985 = vld [vmem:[%s4980 + $0x10] sm:$0xf]
        %v4986 = vld [vmem:[%s4980 + $0x14] sm:$0xf]
        %v4987 = vld [vmem:[%s4980 + $0x18] sm:$0x1]
        %v4988 = vrot.slane %v4670, 2
        %v4996 = vunpack.c.l.b16 %v4981
        %v4997 = vunpack.c.l.b16 %v4982
        %v4998 = vunpack.c.l.b16 %v4983
        %v4999 = vunpack.c.l.b16 %v4984
        %v5000 = vunpack.c.l.b16 %v4985
        %v5001 = vunpack.c.l.b16 %v4986
        %v5002 = vunpack.c.l.b16 %v4987
        %v5003 = vpack.c.b16 %v4997, %v4996
        %v5004 = vpack.c.b16 %v4999, %v4998
        %v5005 = vpack.c.b16 %v5001, %v5000
        %v5006 = vpack.c.b16 %v5002, %v5002
        %v5011 = vsel %vm4079, %v4988, 0
        %v5014 = vand.u32 %v5006, %v4084
        %5016 = vmatprep.subr.bf16.mxu0 0
        %5017 = vmatpush1.bf16.msra.mxu0 %v5003
        %5018 = vmatprep.subr.bf16.mxu0 0
        %5019 = vmatpush1.bf16.msra.mxu0 %v5004
        %5020 = vmatprep.subr.bf16.mxu0 0
        %5021 = vmatpush1.bf16.msra.mxu0 %v5005
        %5022 = vmatprep.subr.bf16.mxu0 0
        %5023 = vmatpush1.bf16.msra.mxu0 %v5014
        %5024 = vmatprep.subr.bf16.mxu0 0
        %5025 = vmatpush1.bf16.msra.mxu0 0
        %5026 = vmatprep.subr.bf16.mxu0 0
        %5027 = vmatpush1.bf16.msra.mxu0 0
        %5028 = vmatprep.subr.bf16.mxu0 0
        %5029 = vmatpush1.bf16.msra.mxu0 0
        %5030 = vmatprep.subr.bf16.mxu0 0
        %5031 = vmatpush1.bf16.msra.mxu0 0
        %5032 = vmatprep.subr.bf16.mxu0 0
        %5033 = vmatpush1.bf16.msra.mxu0 0
        %5034 = vmatprep.subr.bf16.mxu0 0
        %5035 = vmatpush1.bf16.msra.mxu0 0
        %5036 = vmatprep.subr.bf16.mxu0 0
        %5037 = vmatpush1.bf16.msra.mxu0 0
        %5038 = vmatprep.subr.bf16.mxu0 0
        %5039 = vmatpush1.bf16.msra.mxu0 0
        %5040 = vmatprep.subr.bf16.mxu0 0
        %5041 = vmatpush1.bf16.msra.mxu0 0
        %5042 = vmatprep.subr.bf16.mxu0 0
        %5043 = vmatpush1.bf16.msra.mxu0 0
        %5044 = vmatprep.subr.bf16.mxu0 0
        %5045 = vmatpush1.bf16.msra.mxu0 0
        %5046 = vmatprep.subr.bf16.mxu0 0
        %5047 = vmatpush1.bf16.msra.mxu0 0
        %5048 = vmatprep.mubr.bf16.mxu0 0
        %5049 = vmatmul.mubr.bf16.gmra.mrb[0].mxu0 %v5011
        %v5050 = vpop.f32.mrb[0].mxu0
        %v5051 = vadd.f32 0.0, %v5050
        %v5052 = vpop.f32.mrb[0].mxu0
        %v5053 = vpop.f32.mrb[0].mxu0
        %v5054 = vpop.f32.mrb[0].mxu0
        %5055 = vdwg.mxu0
        %v5056 = vadd.f32 %v4979, %v5051
        %s5057 = scalar_lea.vmem %s11, 364
        %v5058 = vld [vmem:[%s5057] sm:$0xf]
        %v5059 = vld [vmem:[%s5057 + $0x4] sm:$0xf]
        %v5060 = vld [vmem:[%s5057 + $0x8] sm:$0xf]
        %v5061 = vld [vmem:[%s5057 + $0xc] sm:$0xf]
        %v5062 = vld [vmem:[%s5057 + $0x10] sm:$0xf]
        %v5063 = vld [vmem:[%s5057 + $0x14] sm:$0xf]
        %v5064 = vld [vmem:[%s5057 + $0x18] sm:$0x1]
        %v5065 = vrot.slane %v4755, 2
        %v5073 = vunpack.c.l.b16 %v5058
        %v5074 = vunpack.c.l.b16 %v5059
        %v5075 = vunpack.c.l.b16 %v5060
        %v5076 = vunpack.c.l.b16 %v5061
        %v5077 = vunpack.c.l.b16 %v5062
        %v5078 = vunpack.c.l.b16 %v5063
        %v5079 = vunpack.c.l.b16 %v5064
        %v5080 = vpack.c.b16 %v5074, %v5073
        %v5081 = vpack.c.b16 %v5076, %v5075
        %v5082 = vpack.c.b16 %v5078, %v5077
        %v5083 = vpack.c.b16 %v5079, %v5079
        %v5088 = vsel %vm4079, %v5065, 0
        %v5091 = vand.u32 %v5083, %v4084
        %5093 = vmatprep.subr.bf16.mxu0 0
        %5094 = vmatpush1.bf16.msra.mxu0 %v5080
        %5095 = vmatprep.subr.bf16.mxu0 0
        %5096 = vmatpush1.bf16.msra.mxu0 %v5081
        %5097 = vmatprep.subr.bf16.mxu0 0
        %5098 = vmatpush1.bf16.msra.mxu0 %v5082
        %5099 = vmatprep.subr.bf16.mxu0 0
        %5100 = vmatpush1.bf16.msra.mxu0 %v5091
        %5101 = vmatprep.subr.bf16.mxu0 0
        %5102 = vmatpush1.bf16.msra.mxu0 0
        %5103 = vmatprep.subr.bf16.mxu0 0
        %5104 = vmatpush1.bf16.msra.mxu0 0
        %5105 = vmatprep.subr.bf16.mxu0 0
        %5106 = vmatpush1.bf16.msra.mxu0 0
        %5107 = vmatprep.subr.bf16.mxu0 0
        %5108 = vmatpush1.bf16.msra.mxu0 0
        %5109 = vmatprep.subr.bf16.mxu0 0
        %5110 = vmatpush1.bf16.msra.mxu0 0
        %5111 = vmatprep.subr.bf16.mxu0 0
        %5112 = vmatpush1.bf16.msra.mxu0 0
        %5113 = vmatprep.subr.bf16.mxu0 0
        %5114 = vmatpush1.bf16.msra.mxu0 0
        %5115 = vmatprep.subr.bf16.mxu0 0
        %5116 = vmatpush1.bf16.msra.mxu0 0
        %5117 = vmatprep.subr.bf16.mxu0 0
        %5118 = vmatpush1.bf16.msra.mxu0 0
        %5119 = vmatprep.subr.bf16.mxu0 0
        %5120 = vmatpush1.bf16.msra.mxu0 0
        %5121 = vmatprep.subr.bf16.mxu0 0
        %5122 = vmatpush1.bf16.msra.mxu0 0
        %5123 = vmatprep.subr.bf16.mxu0 0
        %5124 = vmatpush1.bf16.msra.mxu0 0
        %5125 = vmatprep.mubr.bf16.mxu0 0
        %5126 = vmatmul.mubr.bf16.gmra.mrb[0].mxu0 %v5088
        %v5127 = vpop.f32.mrb[0].mxu0
        %v5128 = vadd.f32 0.0, %v5127
        %v5129 = vpop.f32.mrb[0].mxu0
        %v5130 = vpop.f32.mrb[0].mxu0
        %v5131 = vpop.f32.mrb[0].mxu0
        %5132 = vdwg.mxu0
        %v5133 = vadd.f32 %v5056, %v5128
        %s5134 = scalar_lea.vmem %s11, 392
        %v5135 = vld [vmem:[%s5134] sm:$0xf]
        %v5136 = vld [vmem:[%s5134 + $0x4] sm:$0xf]
        %v5137 = vld [vmem:[%s5134 + $0x8] sm:$0xf]
        %v5138 = vld [vmem:[%s5134 + $0xc] sm:$0xf]
        %v5139 = vld [vmem:[%s5134 + $0x10] sm:$0xf]
        %v5140 = vld [vmem:[%s5134 + $0x14] sm:$0xf]
        %v5141 = vld [vmem:[%s5134 + $0x18] sm:$0x1]
        %v5142 = vrot.slane %v4670, 3
        %v5150 = vunpack.c.l.b16 %v5135
        %v5151 = vunpack.c.l.b16 %v5136
        %v5152 = vunpack.c.l.b16 %v5137
        %v5153 = vunpack.c.l.b16 %v5138
        %v5154 = vunpack.c.l.b16 %v5139
        %v5155 = vunpack.c.l.b16 %v5140
        %v5156 = vunpack.c.l.b16 %v5141
        %v5157 = vpack.c.b16 %v5151, %v5150
        %v5158 = vpack.c.b16 %v5153, %v5152
        %v5159 = vpack.c.b16 %v5155, %v5154
        %v5160 = vpack.c.b16 %v5156, %v5156
        %v5165 = vsel %vm4079, %v5142, 0
        %v5168 = vand.u32 %v5160, %v4084
        %5170 = vmatprep.subr.bf16.mxu0 0
        %5171 = vmatpush1.bf16.msra.mxu0 %v5157
        %5172 = vmatprep.subr.bf16.mxu0 0
        %5173 = vmatpush1.bf16.msra.mxu0 %v5158
        %5174 = vmatprep.subr.bf16.mxu0 0
        %5175 = vmatpush1.bf16.msra.mxu0 %v5159
        %5176 = vmatprep.subr.bf16.mxu0 0
        %5177 = vmatpush1.bf16.msra.mxu0 %v5168
        %5178 = vmatprep.subr.bf16.mxu0 0
        %5179 = vmatpush1.bf16.msra.mxu0 0
        %5180 = vmatprep.subr.bf16.mxu0 0
        %5181 = vmatpush1.bf16.msra.mxu0 0
        %5182 = vmatprep.subr.bf16.mxu0 0
        %5183 = vmatpush1.bf16.msra.mxu0 0
        %5184 = vmatprep.subr.bf16.mxu0 0
        %5185 = vmatpush1.bf16.msra.mxu0 0
        %5186 = vmatprep.subr.bf16.mxu0 0
        %5187 = vmatpush1.bf16.msra.mxu0 0
        %5188 = vmatprep.subr.bf16.mxu0 0
        %5189 = vmatpush1.bf16.msra.mxu0 0
        %5190 = vmatprep.subr.bf16.mxu0 0
        %5191 = vmatpush1.bf16.msra.mxu0 0
        %5192 = vmatprep.subr.bf16.mxu0 0
        %5193 = vmatpush1.bf16.msra.mxu0 0
        %5194 = vmatprep.subr.bf16.mxu0 0
        %5195 = vmatpush1.bf16.msra.mxu0 0
        %5196 = vmatprep.subr.bf16.mxu0 0
        %5197 = vmatpush1.bf16.msra.mxu0 0
        %5198 = vmatprep.subr.bf16.mxu0 0
        %5199 = vmatpush1.bf16.msra.mxu0 0
        %5200 = vmatprep.subr.bf16.mxu0 0
        %5201 = vmatpush1.bf16.msra.mxu0 0
        %5202 = vmatprep.mubr.bf16.mxu0 0
        %5203 = vmatmul.mubr.bf16.gmra.mrb[0].mxu0 %v5165
        %v5204 = vpop.f32.mrb[0].mxu0
        %v5205 = vadd.f32 0.0, %v5204
        %v5206 = vpop.f32.mrb[0].mxu0
        %v5207 = vpop.f32.mrb[0].mxu0
        %v5208 = vpop.f32.mrb[0].mxu0
        %5209 = vdwg.mxu0
        %v5210 = vadd.f32 %v5133, %v5205
        %s5211 = scalar_lea.vmem %s11, 420
        %v5212 = vld [vmem:[%s5211] sm:$0xf]
        %v5213 = vld [vmem:[%s5211 + $0x4] sm:$0xf]
        %v5214 = vld [vmem:[%s5211 + $0x8] sm:$0xf]
        %v5215 = vld [vmem:[%s5211 + $0xc] sm:$0xf]
        %v5216 = vld [vmem:[%s5211 + $0x10] sm:$0xf]
        %v5217 = vld [vmem:[%s5211 + $0x14] sm:$0xf]
        %v5218 = vld [vmem:[%s5211 + $0x18] sm:$0x1]
        %v5219 = vrot.slane %v4755, 3
        %v5227 = vunpack.c.l.b16 %v5212
        %v5228 = vunpack.c.l.b16 %v5213
        %v5229 = vunpack.c.l.b16 %v5214
        %v5230 = vunpack.c.l.b16 %v5215
        %v5231 = vunpack.c.l.b16 %v5216
        %v5232 = vunpack.c.l.b16 %v5217
        %v5233 = vunpack.c.l.b16 %v5218
        %v5234 = vpack.c.b16 %v5228, %v5227
        %v5235 = vpack.c.b16 %v5230, %v5229
        %v5236 = vpack.c.b16 %v5232, %v5231
        %v5237 = vpack.c.b16 %v5233, %v5233
        %v5242 = vsel %vm4079, %v5219, 0
        %v5245 = vand.u32 %v5237, %v4084
        %5247 = vmatprep.subr.bf16.mxu0 0
        %5248 = vmatpush1.bf16.msra.mxu0 %v5234
        %5249 = vmatprep.subr.bf16.mxu0 0
        %5250 = vmatpush1.bf16.msra.mxu0 %v5235
        %5251 = vmatprep.subr.bf16.mxu0 0
        %5252 = vmatpush1.bf16.msra.mxu0 %v5236
        %5253 = vmatprep.subr.bf16.mxu0 0
        %5254 = vmatpush1.bf16.msra.mxu0 %v5245
        %5255 = vmatprep.subr.bf16.mxu0 0
        %5256 = vmatpush1.bf16.msra.mxu0 0
        %5257 = vmatprep.subr.bf16.mxu0 0
        %5258 = vmatpush1.bf16.msra.mxu0 0
        %5259 = vmatprep.subr.bf16.mxu0 0
        %5260 = vmatpush1.bf16.msra.mxu0 0
        %5261 = vmatprep.subr.bf16.mxu0 0
        %5262 = vmatpush1.bf16.msra.mxu0 0
        %5263 = vmatprep.subr.bf16.mxu0 0
        %5264 = vmatpush1.bf16.msra.mxu0 0
        %5265 = vmatprep.subr.bf16.mxu0 0
        %5266 = vmatpush1.bf16.msra.mxu0 0
        %5267 = vmatprep.subr.bf16.mxu0 0
        %5268 = vmatpush1.bf16.msra.mxu0 0
        %5269 = vmatprep.subr.bf16.mxu0 0
        %5270 = vmatpush1.bf16.msra.mxu0 0
        %5271 = vmatprep.subr.bf16.mxu0 0
        %5272 = vmatpush1.bf16.msra.mxu0 0
        %5273 = vmatprep.subr.bf16.mxu0 0
        %5274 = vmatpush1.bf16.msra.mxu0 0
        %5275 = vmatprep.subr.bf16.mxu0 0
        %5276 = vmatpush1.bf16.msra.mxu0 0
        %5277 = vmatprep.subr.bf16.mxu0 0
        %5278 = vmatpush1.bf16.msra.mxu0 0
        %5279 = vmatprep.mubr.bf16.mxu0 0
        %5280 = vmatmul.mubr.bf16.gmra.mrb[0].mxu0 %v5242
        %v5281 = vpop.f32.mrb[0].mxu0
        %v5282 = vadd.f32 0.0, %v5281
        %v5283 = vpop.f32.mrb[0].mxu0
        %v5284 = vpop.f32.mrb[0].mxu0
        %v5285 = vpop.f32.mrb[0].mxu0
        %5286 = vdwg.mxu0
        %v5287 = vadd.f32 %v5210, %v5282
        %vm5288 = vcmask 73728
        %5289 = vst.msk [vmem:[%s430] sm:$0x1] %vm5288, %v5287
        %s5290 = sand.u32 %s313, 1
        %s5291 = scalar_lea.sflag [#allocation7], %s5290
        %s5292 = sand.u32 %s313, 1
        %s5293 = scalar_lea.vmem [#allocation6], %s5292
        // Predicated region
        $region73: #{net_forward.1} parent=71 // pred_check
          %p5294 = pneg %p323
        $region74: #{net_forward.1} parent=71 // pred_check_branch
          %5296 = sbr.rel (%p5294) target = $region76
        $region75: #{net_forward.1} parent=71 // pred_region
          %s5298 = ssub.s32 16, 16
          %5299 = vsyncadd %s5291, %s5298
          %s5300 = smul.addr %s27, 16
          %s5301 = scalar_lea.hbm %s13, %s5300
          %s5303 = sshll.u32 %s5293, 4
          %s5304 = int_to_ptr.vmem [resolvable:$true] %s5303
          %5306 = dma.vmem_to_hbm [thread:$0]  %s5304, 16, %s5301, %s5291
        $region76: #{net_forward.1} parent=71 // pred_fallthru
          _
      $region72: #{net_forward.1} parent=5 // pred_fallthru
        _
      %p5307 = scmp.le.s32.totalorder 2, %s22
      // Predicated region
      $region77: #{net_forward.1} parent=5 // pred_check
        %p5308 = pneg %p5307
      $region78: #{net_forward.1} parent=5 // pred_check_branch
        %5310 = sbr.rel (%p5308) target = $region80
      $region79: #{net_forward.1} parent=5 // pred_region
        %s5311 = ssub.s32 %s22, 2
        // Predicated region
        $region81: #{net_forward.1} parent=79 // pred_check
          %p5312 = pneg %p329
        $region82: #{net_forward.1} parent=79 // pred_check_branch
          %5314 = sbr.rel (%p5312) target = $region84
        $region83: #{net_forward.1} parent=79 // pred_region
          %s5315 = sand.u32 %s314, 1
          %s5316 = scalar_lea.sflag [#allocation7], %s5315
          %s5317 = sand.u32 %s314, 1
          %s5318 = scalar_lea.vmem [#allocation6], %s5317
          %5319 = dma.done %s5316, 16
        $region84: #{net_forward.1} parent=79 // pred_fallthru
          _
      $region80: #{net_forward.1} parent=5 // pred_fallthru
        _
    $region6: #{net_forward.1} parent=1 // loop_footer
      %s26 = sadd.s32 1, %s22
    $region7: #{net_forward.1} parent=1 // loop_footer_branch
      %21 = sbr.rel target = $region3
    $region8: #{net_forward.1} parent=1 // loop_exit
      _
    %5320 = vsyncpa [#allocation7], 1
    %s5321 = scalar_lea.sflag [#allocation7], 1
    %5322 = vsyncpa %s5321, 1

</llo_original>
